<compile_context>
chip_gen: v7x
topology: tpu7x:2x2x1
jax: 0.10.0
libtpu: 0.0.40
codegen_flags: <defaults>
</compile_context>

<pallas_src>
import functools

import jax
import jax.numpy as jnp
from jax import lax
from jax.experimental import pallas as pl
from jax.experimental.pallas import tpu as pltpu

HIDDEN = 16
NEG_SLOPE = 0.2   # r = g = b = 0.2 in the reference module
LANES = 128
BORDER = 128      # zero border (lanes) on each side of the activation scratch


def _round_up(n, m):
    return (n + m - 1) // m * m


def _leaky(x, slope):
    return jnp.where(x >= 0, x, slope * x)


def _sigmoid(x):
    # numerically stable logistic; divide goes to the EUP (approx reciprocal).
    e = jnp.exp(-jnp.abs(x))
    r = pl.reciprocal(1.0 + e, approx=True)
    return jnp.where(x >= 0, r, e * r)


def tonemap_kernel(x_ref, w1_ref, b1_ref, w2_ref, b2_ref, w3_ref, b3_ref,
                   o_ref, pad_scr, *, H, W, TH, L1r, L2r, Lt, B):
    """One (color, row-block) per grid step.

    x_ref   : (1,1,1,LIN) f32 flattened input window (rows r0-3 .. r0+TH+2 of
              the column-padded image, pre-padded with zero rows, row stride Wp)
    w1_ref  : (1,9,16,1)  f32 per-tap conv1 columns (VPU path)
    w2_ref  : (1,9,16,16) bf16 per-tap conv2 matrices (MXU path)
    w3_ref  : (1,9,1,16)  bf16 per-tap conv3 rows (MXU path)
    b*_ref  : (1,Cout,1)  f32 biases
    o_ref   : (1,1,1,Lt)  f32 flattened output rows r0 .. r0+TH-1 (row stride Wp;
              pad/slack lanes garbage, sliced off in the wrapper)
    pad_scr : (16, 2*B + L1r) bf16 padded-activation scratch (reused h1 / h2)
    """
    Wp = W + 2
    blk = pl.program_id(1)
    r0 = blk * TH                       # first output row of this block
    inv_wp = 1.0 / Wp
    eps = 0.25 / Wp

    def valid_mask(length, row_start):
        # lane index -> (row, col) via f32 math (exact for block_lanes <~ 1e6);
        # valid iff col < W and 0 <= global row < H.
        m = lax.broadcasted_iota(jnp.int32, (1, length), 1).astype(jnp.float32)
        row = jnp.floor(m * inv_wp + eps)
        col = m - row * Wp
        g = row + row_start.astype(jnp.float32)
        return (col < W - 0.5) & (g > -0.5) & (g < H - 0.5)

    # ---- conv1: 1 -> 16 (VPU, f32, Cin == 1) ------------------------------
    acc = jnp.zeros((HIDDEN, L1r), jnp.float32)
    for t in range(9):
        ky, kx = divmod(t, 3)
        off = ky * Wp + kx
        acc = acc + w1_ref[0, t] * x_ref[0, 0, :, off:off + L1r]
    h = jnp.where(valid_mask(L1r, r0 - 2),
                  _leaky(acc + b1_ref[0], NEG_SLOPE), 0.0)

    # zero only the two 128-lane borders; the interior is rewritten per layer.
    pad_scr[:, :B] = jnp.zeros((HIDDEN, B), jnp.bfloat16)
    pad_scr[:, B + L1r:] = jnp.zeros((HIDDEN, B), jnp.bfloat16)
    pad_scr[:, B:B + L1r] = h.astype(jnp.bfloat16)       # lane-aligned store

    # ---- conv2: 16 -> 16 (9 accumulating per-tap MXU matmuls) --------------
    acc = jnp.zeros((HIDDEN, L2r), jnp.float32)
    for t in range(9):
        ky, kx = divmod(t, 3)
        off = B + ky * Wp + (kx - 1)
        acc = acc + jnp.dot(w2_ref[0, t], pad_scr[:, off:off + L2r],
                            preferred_element_type=jnp.float32)
    h = jnp.where(valid_mask(L2r, r0 - 1),
                  _leaky(acc + b2_ref[0], NEG_SLOPE), 0.0)
    pad_scr[:, B:B + L2r] = h.astype(jnp.bfloat16)

    # ---- conv3: 16 -> 1 (9 accumulating per-tap matmuls) + sigmoid ---------
    acc = jnp.zeros((1, Lt), jnp.float32)
    for t in range(9):
        ky, kx = divmod(t, 3)
        off = B + ky * Wp + (kx - 1)
        acc = acc + jnp.dot(w3_ref[0, t], pad_scr[:, off:off + Lt],
                            preferred_element_type=jnp.float32)
    o_ref[0, 0] = _sigmoid(acc + b3_ref[0])              # lane-dense (1, Lt)


def _pick_block_rows(H, Wp):
    # target ~8K output lanes per block; cap so the f32 row/col math is exact
    # and per-block temporaries stay well under VMEM.
    th = max(1, 8192 // Wp)
    th = min(th, H, max(1, (1 << 20) // Wp - 6))
    return th


def tone_mapper_pallas(hdr, kparams, block_rows=None):
    """hdr: (3, 1, H, W) float32 -> (3, 1, H, W) float32."""
    three, cin, H, W = hdr.shape
    assert three == 3 and cin == 1
    Wp = W + 2

    TH = _pick_block_rows(H, Wp) if block_rows is None else block_rows
    TH = max(1, min(TH, H, max(1, (1 << 20) // Wp - 6)))
    nblk = pl.cdiv(H, TH)
    Hb = nblk * TH

    B = BORDER
    L1r = _round_up((TH + 4) * Wp, LANES)      # conv1 compute/store length
    L2r = _round_up((TH + 2) * Wp, LANES)      # conv2 compute/store length
    Lt = _round_up(TH * Wp, LANES)             # conv3 / output length
    LIN = _round_up(L1r + 2 * Wp + 2, LANES)   # per-block input window length

    w1, b1, w2, b2, w3, b3 = kparams

    # column-pad by 1, row-pad by 3 (top) / Hb-H+3 (bottom), flatten row-major.
    x_pre = jnp.pad(hdr, ((0, 0), (0, 0), (3, Hb - H + 3), (1, 1)))
    x_flat = x_pre.reshape(3, (Hb + 6) * Wp)
    flat_len = (nblk - 1) * TH * Wp + LIN
    x_flat = jnp.pad(x_flat, ((0, 0), (0, flat_len - (Hb + 6) * Wp)))

    # materialize the overlapping (TH+6)-row halo windows with static slices
    # so all in-kernel tap reads are static lane offsets.
    windows = jnp.stack([x_flat[:, b * TH * Wp: b * TH * Wp + LIN]
                         for b in range(nblk)], axis=1)[:, :, None, :]

    kernel = functools.partial(tonemap_kernel, H=H, W=W, TH=TH,
                               L1r=L1r, L2r=L2r, Lt=Lt, B=B)

    # VMEM budget: double-buffered input/output blocks + weights + scratch +
    # an allowance for the compiler's f32 (16, L1r) temporaries.
    wbytes = (9 * HIDDEN * 4 + HIDDEN * 4 + 9 * HIDDEN * HIDDEN * 2 +
              HIDDEN * 4 + 9 * HIDDEN * 2 + 4)
    est = (2 * LIN * 4 + 2 * Lt * 4 + 2 * wbytes
           + HIDDEN * (2 * B + L1r) * 2
           + 4 * HIDDEN * L1r * 4)
    try:
        cap = int(pltpu.get_tpu_info().vmem_capacity_bytes)
    except Exception:
        cap = 64 << 20                         # conservative (v7x) fallback
    vmem_limit = int(min(max(2 * est + (2 << 20), 16 << 20), cap - (8 << 20)))
    vmem_limit = max(vmem_limit, 8 << 20)

    out = pl.pallas_call(
        kernel,
        out_shape=jax.ShapeDtypeStruct((3, nblk, 1, Lt), jnp.float32),
        grid=(3, nblk),
        in_specs=[
            pl.BlockSpec((1, 1, 1, LIN), lambda c, b: (c, b, 0, 0)),         # windows
            pl.BlockSpec((1, 9, HIDDEN, 1), lambda c, b: (c, 0, 0, 0)),      # w1
            pl.BlockSpec((1, HIDDEN, 1), lambda c, b: (c, 0, 0)),            # b1
            pl.BlockSpec((1, 9, HIDDEN, HIDDEN), lambda c, b: (c, 0, 0, 0)), # w2
            pl.BlockSpec((1, HIDDEN, 1), lambda c, b: (c, 0, 0)),            # b2
            pl.BlockSpec((1, 9, 1, HIDDEN), lambda c, b: (c, 0, 0, 0)),      # w3
            pl.BlockSpec((1, 1, 1), lambda c, b: (c, 0, 0)),                 # b3
        ],
        out_specs=pl.BlockSpec((1, 1, 1, Lt), lambda c, b: (c, b, 0, 0)),
        scratch_shapes=[pltpu.VMEM((HIDDEN, 2 * B + L1r), jnp.bfloat16)],
        compiler_params=pltpu.CompilerParams(
            dimension_semantics=("parallel", "parallel"),
            vmem_limit_bytes=vmem_limit),
    )(windows, w1, b1, w2, b2, w3, b3)

    # TODO(synk): for W near a multiple of 128, emit (H, W)-shaped lane-dense
    # output blocks directly and skip this XLA re-layout pass.
    grid_ = out[:, :, 0, :TH * Wp].reshape(3, Hb, Wp)
    return grid_[:, :H, :W].reshape(3, 1, H, W)


# ----------------------------- parameters ---------------------------------
def init_params(key):
    """Deterministic synthetic weights, PyTorch OIHW layout, one set per color."""
    ks = jax.random.split(key, 6)
    w1 = jax.random.normal(ks[0], (3, HIDDEN, 1, 3, 3), jnp.float32) * 0.3
    b1 = jax.random.normal(ks[1], (3, HIDDEN), jnp.float32) * 0.1
    w2 = jax.random.normal(ks[2], (3, HIDDEN, HIDDEN, 3, 3), jnp.float32) * 0.1
    b2 = jax.random.normal(ks[3], (3, HIDDEN), jnp.float32) * 0.1
    w3 = jax.random.normal(ks[4], (3, 1, HIDDEN, 3, 3), jnp.float32) * 0.1
    b3 = jax.random.normal(ks[5], (3, 1), jnp.float32) * 0.1
    return (w1, b1, w2, b2, w3, b3)


def to_kernel_params(params):
    """PyTorch-style per-color weights -> per-tap kernel layouts."""
    w1, b1, w2, b2, w3, b3 = params
    # (c, cout, cin, ky, kx) -> (c, t=ky*3+kx, cout, cin)
    w1k = w1.transpose(0, 3, 4, 1, 2).reshape(3, 9, HIDDEN, 1)
    w2k = w2.transpose(0, 3, 4, 1, 2).reshape(3, 9, HIDDEN, HIDDEN).astype(jnp.bfloat16)
    w3k = w3.transpose(0, 3, 4, 1, 2).reshape(3, 9, 1, HIDDEN).astype(jnp.bfloat16)
    return (w1k, b1[:, :, None], w2k, b2[:, :, None], w3k, b3[:, :, None])


# ----------------------------- pure-JAX reference --------------------------
def tone_mapper_ref(hdr, params):
    w1, b1, w2, b2, w3, b3 = params
    dn = ('NCHW', 'OIHW', 'NCHW')
    outs = []
    for c in range(3):
        h = hdr[c:c + 1]
        h = lax.conv_general_dilated(h, w1[c], (1, 1), 'SAME',
                                     dimension_numbers=dn,
                                     precision=lax.Precision.HIGHEST)
        h = _leaky(h + b1[c].reshape(1, -1, 1, 1), NEG_SLOPE)
        h = lax.conv_general_dilated(h, w2[c], (1, 1), 'SAME',
                                     dimension_numbers=dn,
                                     precision=lax.Precision.HIGHEST)
        h = _leaky(h + b2[c].reshape(1, -1, 1, 1), NEG_SLOPE)
        h = lax.conv_general_dilated(h, w3[c], (1, 1), 'SAME',
                                     dimension_numbers=dn,
                                     precision=lax.Precision.HIGHEST)
        h = h + b3[c].reshape(1, -1, 1, 1)
        outs.append(1.0 / (1.0 + jnp.exp(-h)))
    return jnp.concatenate(outs, axis=0)


if __name__ == "__main__":
    key = jax.random.PRNGKey(0)
    k_in, k_in2, k_par = jax.random.split(key, 3)

    params = init_params(k_par)
    kparams = to_kernel_params(params)

    # Primary small test: 16x16 (single row-block).
    H = W = 16
    hdr = jax.random.uniform(k_in, (3, 1, H, W), jnp.float32, 0.0, 4.0)
    out = jax.block_until_ready(tone_mapper_pallas(hdr, kparams))
    assert out.shape == (3, 1, H, W)
    ref = tone_mapper_ref(hdr, params)
    err = float(jnp.max(jnp.abs(out - ref)))
    # conv2/conv3 run as bf16 MXU matmuls; agrees with the f32 HIGHEST
    # reference to ~1e-2.
    if err > 2e-2:
        raise AssertionError(f"16x16 mismatch vs reference: max abs err {err}")

    # Multi-row-block test (exercises the halo / blocking path, H % TH != 0).
    H2, W2 = 20, 16
    hdr2 = jax.random.uniform(k_in2, (3, 1, H2, W2), jnp.float32, 0.0, 4.0)
    out2 = jax.block_until_ready(tone_mapper_pallas(hdr2, kparams, block_rows=8))
    assert out2.shape == (3, 1, H2, W2)
    ref2 = tone_mapper_ref(hdr2, params)
    err2 = float(jnp.max(jnp.abs(out2 - ref2)))
    if err2 > 2e-2:
        raise AssertionError(f"20x16 mismatch vs reference: max abs err {err2}")

    print("KERNEL_OK")
</pallas_src>

<mosaic_0001>
module attributes {stable_mosaic.version = 11 : i64} {
  func.func @tonemap_kernel(%arg0: i32, %arg1: i32, %arg2: memref<1x1x1x512xf32, #tpu.memory_space<vmem>>, %arg3: memref<1x9x16x1xf32, #tpu.memory_space<vmem>>, %arg4: memref<1x16x1xf32, #tpu.memory_space<vmem>>, %arg5: memref<1x9x16x16xbf16, #tpu.memory_space<vmem>>, %arg6: memref<1x16x1xf32, #tpu.memory_space<vmem>>, %arg7: memref<1x9x1x16xbf16, #tpu.memory_space<vmem>>, %arg8: memref<1x1x1xf32, #tpu.memory_space<vmem>>, %arg9: memref<1x1x1x384xf32, #tpu.memory_space<vmem>>, %arg10: memref<16x640xbf16, #tpu.memory_space<vmem>>) attributes {dimension_semantics = [#tpu.dimension_semantics<parallel>, #tpu.dimension_semantics<parallel>], iteration_bounds = array<i64: 3, 1>, scalar_prefetch = 0 : i64, scratch_operands = 1 : i64, tpu.core_type = #tpu.core_type<tc>, window_params = [{transform_indices = @transform_0, window_bounds = array<i64: 1, 1, 1, 512>}, {transform_indices = @transform_1, window_bounds = array<i64: 1, 9, 16, 1>}, {transform_indices = @transform_2, window_bounds = array<i64: 1, 16, 1>}, {transform_indices = @transform_3, window_bounds = array<i64: 1, 9, 16, 16>}, {transform_indices = @transform_4, window_bounds = array<i64: 1, 16, 1>}, {transform_indices = @transform_5, window_bounds = array<i64: 1, 9, 1, 16>}, {transform_indices = @transform_6, window_bounds = array<i64: 1, 1, 1>}, {transform_indices = @transform_7, window_bounds = array<i64: 1, 1, 1, 384>}]} {
    %c16_i32 = arith.constant 16 : i32
    %0 = arith.muli %arg1, %c16_i32 : i32
    %cst = arith.constant 0.000000e+00 : f32
    %1 = vector.broadcast %cst : f32 to vector<16x384xf32>
    %c0 = arith.constant 0 : index
    %c0_0 = arith.constant 0 : index
    %c0_1 = arith.constant 0 : index
    %c0_2 = arith.constant 0 : index
    %2 = vector.load %arg3[%c0, %c0_0, %c0_1, %c0_2] : memref<1x9x16x1xf32, #tpu.memory_space<vmem>>, vector<1x1x16x1xf32>
    %3 = vector.shape_cast %2 : vector<1x1x16x1xf32> to vector<16x1xf32>
    %c0_3 = arith.constant 0 : index
    %c0_4 = arith.constant 0 : index
    %c0_5 = arith.constant 0 : index
    %c0_6 = arith.constant 0 : index
    %4 = vector.load %arg2[%c0_3, %c0_4, %c0_5, %c0_6] : memref<1x1x1x512xf32, #tpu.memory_space<vmem>>, vector<1x1x1x384xf32>
    %5 = vector.shape_cast %4 : vector<1x1x1x384xf32> to vector<1x384xf32>
    %6 = vector.broadcast %3 : vector<16x1xf32> to vector<16x384xf32>
    %7 = vector.broadcast %5 : vector<1x384xf32> to vector<16x384xf32>
    %8 = arith.mulf %6, %7 : vector<16x384xf32>
    %9 = arith.addf %1, %8 : vector<16x384xf32>
    %c0_7 = arith.constant 0 : index
    %c1 = arith.constant 1 : index
    %c0_8 = arith.constant 0 : index
    %c0_9 = arith.constant 0 : index
    %10 = vector.load %arg3[%c0_7, %c1, %c0_8, %c0_9] : memref<1x9x16x1xf32, #tpu.memory_space<vmem>>, vector<1x1x16x1xf32>
    %11 = vector.shape_cast %10 : vector<1x1x16x1xf32> to vector<16x1xf32>
    %c0_10 = arith.constant 0 : index
    %c0_11 = arith.constant 0 : index
    %c0_12 = arith.constant 0 : index
    %c1_13 = arith.constant 1 : index
    %12 = vector.load %arg2[%c0_10, %c0_11, %c0_12, %c1_13] : memref<1x1x1x512xf32, #tpu.memory_space<vmem>>, vector<1x1x1x384xf32>
    %13 = vector.shape_cast %12 : vector<1x1x1x384xf32> to vector<1x384xf32>
    %14 = vector.broadcast %11 : vector<16x1xf32> to vector<16x384xf32>
    %15 = vector.broadcast %13 : vector<1x384xf32> to vector<16x384xf32>
    %16 = arith.mulf %14, %15 : vector<16x384xf32>
    %17 = arith.addf %9, %16 : vector<16x384xf32>
    %c0_14 = arith.constant 0 : index
    %c2 = arith.constant 2 : index
    %c0_15 = arith.constant 0 : index
    %c0_16 = arith.constant 0 : index
    %18 = vector.load %arg3[%c0_14, %c2, %c0_15, %c0_16] : memref<1x9x16x1xf32, #tpu.memory_space<vmem>>, vector<1x1x16x1xf32>
    %19 = vector.shape_cast %18 : vector<1x1x16x1xf32> to vector<16x1xf32>
    %c0_17 = arith.constant 0 : index
    %c0_18 = arith.constant 0 : index
    %c0_19 = arith.constant 0 : index
    %c2_20 = arith.constant 2 : index
    %20 = vector.load %arg2[%c0_17, %c0_18, %c0_19, %c2_20] : memref<1x1x1x512xf32, #tpu.memory_space<vmem>>, vector<1x1x1x384xf32>
    %21 = vector.shape_cast %20 : vector<1x1x1x384xf32> to vector<1x384xf32>
    %22 = vector.broadcast %19 : vector<16x1xf32> to vector<16x384xf32>
    %23 = vector.broadcast %21 : vector<1x384xf32> to vector<16x384xf32>
    %24 = arith.mulf %22, %23 : vector<16x384xf32>
    %25 = arith.addf %17, %24 : vector<16x384xf32>
    %c0_21 = arith.constant 0 : index
    %c3 = arith.constant 3 : index
    %c0_22 = arith.constant 0 : index
    %c0_23 = arith.constant 0 : index
    %26 = vector.load %arg3[%c0_21, %c3, %c0_22, %c0_23] : memref<1x9x16x1xf32, #tpu.memory_space<vmem>>, vector<1x1x16x1xf32>
    %27 = vector.shape_cast %26 : vector<1x1x16x1xf32> to vector<16x1xf32>
    %c0_24 = arith.constant 0 : index
    %c0_25 = arith.constant 0 : index
    %c0_26 = arith.constant 0 : index
    %c18 = arith.constant 18 : index
    %28 = vector.load %arg2[%c0_24, %c0_25, %c0_26, %c18] : memref<1x1x1x512xf32, #tpu.memory_space<vmem>>, vector<1x1x1x384xf32>
    %29 = vector.shape_cast %28 : vector<1x1x1x384xf32> to vector<1x384xf32>
    %30 = vector.broadcast %27 : vector<16x1xf32> to vector<16x384xf32>
    %31 = vector.broadcast %29 : vector<1x384xf32> to vector<16x384xf32>
    %32 = arith.mulf %30, %31 : vector<16x384xf32>
    %33 = arith.addf %25, %32 : vector<16x384xf32>
    %c0_27 = arith.constant 0 : index
    %c4 = arith.constant 4 : index
    %c0_28 = arith.constant 0 : index
    %c0_29 = arith.constant 0 : index
    %34 = vector.load %arg3[%c0_27, %c4, %c0_28, %c0_29] : memref<1x9x16x1xf32, #tpu.memory_space<vmem>>, vector<1x1x16x1xf32>
    %35 = vector.shape_cast %34 : vector<1x1x16x1xf32> to vector<16x1xf32>
    %c0_30 = arith.constant 0 : index
    %c0_31 = arith.constant 0 : index
    %c0_32 = arith.constant 0 : index
    %c19 = arith.constant 19 : index
    %36 = vector.load %arg2[%c0_30, %c0_31, %c0_32, %c19] : memref<1x1x1x512xf32, #tpu.memory_space<vmem>>, vector<1x1x1x384xf32>
    %37 = vector.shape_cast %36 : vector<1x1x1x384xf32> to vector<1x384xf32>
    %38 = vector.broadcast %35 : vector<16x1xf32> to vector<16x384xf32>
    %39 = vector.broadcast %37 : vector<1x384xf32> to vector<16x384xf32>
    %40 = arith.mulf %38, %39 : vector<16x384xf32>
    %41 = arith.addf %33, %40 : vector<16x384xf32>
    %c0_33 = arith.constant 0 : index
    %c5 = arith.constant 5 : index
    %c0_34 = arith.constant 0 : index
    %c0_35 = arith.constant 0 : index
    %42 = vector.load %arg3[%c0_33, %c5, %c0_34, %c0_35] : memref<1x9x16x1xf32, #tpu.memory_space<vmem>>, vector<1x1x16x1xf32>
    %43 = vector.shape_cast %42 : vector<1x1x16x1xf32> to vector<16x1xf32>
    %c0_36 = arith.constant 0 : index
    %c0_37 = arith.constant 0 : index
    %c0_38 = arith.constant 0 : index
    %c20 = arith.constant 20 : index
    %44 = vector.load %arg2[%c0_36, %c0_37, %c0_38, %c20] : memref<1x1x1x512xf32, #tpu.memory_space<vmem>>, vector<1x1x1x384xf32>
    %45 = vector.shape_cast %44 : vector<1x1x1x384xf32> to vector<1x384xf32>
    %46 = vector.broadcast %43 : vector<16x1xf32> to vector<16x384xf32>
    %47 = vector.broadcast %45 : vector<1x384xf32> to vector<16x384xf32>
    %48 = arith.mulf %46, %47 : vector<16x384xf32>
    %49 = arith.addf %41, %48 : vector<16x384xf32>
    %c0_39 = arith.constant 0 : index
    %c6 = arith.constant 6 : index
    %c0_40 = arith.constant 0 : index
    %c0_41 = arith.constant 0 : index
    %50 = vector.load %arg3[%c0_39, %c6, %c0_40, %c0_41] : memref<1x9x16x1xf32, #tpu.memory_space<vmem>>, vector<1x1x16x1xf32>
    %51 = vector.shape_cast %50 : vector<1x1x16x1xf32> to vector<16x1xf32>
    %c0_42 = arith.constant 0 : index
    %c0_43 = arith.constant 0 : index
    %c0_44 = arith.constant 0 : index
    %c36 = arith.constant 36 : index
    %52 = vector.load %arg2[%c0_42, %c0_43, %c0_44, %c36] : memref<1x1x1x512xf32, #tpu.memory_space<vmem>>, vector<1x1x1x384xf32>
    %53 = vector.shape_cast %52 : vector<1x1x1x384xf32> to vector<1x384xf32>
    %54 = vector.broadcast %51 : vector<16x1xf32> to vector<16x384xf32>
    %55 = vector.broadcast %53 : vector<1x384xf32> to vector<16x384xf32>
    %56 = arith.mulf %54, %55 : vector<16x384xf32>
    %57 = arith.addf %49, %56 : vector<16x384xf32>
    %c0_45 = arith.constant 0 : index
    %c7 = arith.constant 7 : index
    %c0_46 = arith.constant 0 : index
    %c0_47 = arith.constant 0 : index
    %58 = vector.load %arg3[%c0_45, %c7, %c0_46, %c0_47] : memref<1x9x16x1xf32, #tpu.memory_space<vmem>>, vector<1x1x16x1xf32>
    %59 = vector.shape_cast %58 : vector<1x1x16x1xf32> to vector<16x1xf32>
    %c0_48 = arith.constant 0 : index
    %c0_49 = arith.constant 0 : index
    %c0_50 = arith.constant 0 : index
    %c37 = arith.constant 37 : index
    %60 = vector.load %arg2[%c0_48, %c0_49, %c0_50, %c37] : memref<1x1x1x512xf32, #tpu.memory_space<vmem>>, vector<1x1x1x384xf32>
    %61 = vector.shape_cast %60 : vector<1x1x1x384xf32> to vector<1x384xf32>
    %62 = vector.broadcast %59 : vector<16x1xf32> to vector<16x384xf32>
    %63 = vector.broadcast %61 : vector<1x384xf32> to vector<16x384xf32>
    %64 = arith.mulf %62, %63 : vector<16x384xf32>
    %65 = arith.addf %57, %64 : vector<16x384xf32>
    %c0_51 = arith.constant 0 : index
    %c8 = arith.constant 8 : index
    %c0_52 = arith.constant 0 : index
    %c0_53 = arith.constant 0 : index
    %66 = vector.load %arg3[%c0_51, %c8, %c0_52, %c0_53] : memref<1x9x16x1xf32, #tpu.memory_space<vmem>>, vector<1x1x16x1xf32>
    %67 = vector.shape_cast %66 : vector<1x1x16x1xf32> to vector<16x1xf32>
    %c0_54 = arith.constant 0 : index
    %c0_55 = arith.constant 0 : index
    %c0_56 = arith.constant 0 : index
    %c38 = arith.constant 38 : index
    %68 = vector.load %arg2[%c0_54, %c0_55, %c0_56, %c38] : memref<1x1x1x512xf32, #tpu.memory_space<vmem>>, vector<1x1x1x384xf32>
    %69 = vector.shape_cast %68 : vector<1x1x1x384xf32> to vector<1x384xf32>
    %70 = vector.broadcast %67 : vector<16x1xf32> to vector<16x384xf32>
    %71 = vector.broadcast %69 : vector<1x384xf32> to vector<16x384xf32>
    %72 = arith.mulf %70, %71 : vector<16x384xf32>
    %73 = arith.addf %65, %72 : vector<16x384xf32>
    %c2_i32 = arith.constant 2 : i32
    %74 = arith.subi %0, %c2_i32 : i32
    %75 = tpu.iota {dimensions = array<i32: 1>} : vector<1x384xi32>
    %76 = arith.sitofp %75 : vector<1x384xi32> to vector<1x384xf32>
    %cst_57 = arith.constant 0.055555556 : f32
    %77 = vector.broadcast %cst_57 : f32 to vector<1x384xf32>
    %78 = arith.mulf %76, %77 : vector<1x384xf32>
    %cst_58 = arith.constant 0.013888889 : f32
    %79 = vector.broadcast %cst_58 : f32 to vector<1x384xf32>
    %80 = arith.addf %78, %79 : vector<1x384xf32>
    %81 = math.floor %80 : vector<1x384xf32>
    %cst_59 = arith.constant 1.800000e+01 : f32
    %82 = vector.broadcast %cst_59 : f32 to vector<1x384xf32>
    %83 = arith.mulf %81, %82 : vector<1x384xf32>
    %84 = arith.subf %76, %83 : vector<1x384xf32>
    %85 = arith.sitofp %74 : i32 to f32
    %86 = vector.broadcast %85 : f32 to vector<1x384xf32>
    %87 = arith.addf %81, %86 : vector<1x384xf32>
    %cst_60 = arith.constant 1.550000e+01 : f32
    %88 = vector.broadcast %cst_60 : f32 to vector<1x384xf32>
    %89 = arith.cmpf olt, %84, %88 : vector<1x384xf32>
    %cst_61 = arith.constant -5.000000e-01 : f32
    %90 = vector.broadcast %cst_61 : f32 to vector<1x384xf32>
    %91 = arith.cmpf ogt, %87, %90 : vector<1x384xf32>
    %92 = arith.andi %89, %91 : vector<1x384xi1>
    %cst_62 = arith.constant 1.550000e+01 : f32
    %93 = vector.broadcast %cst_62 : f32 to vector<1x384xf32>
    %94 = arith.cmpf olt, %87, %93 : vector<1x384xf32>
    %95 = arith.andi %92, %94 : vector<1x384xi1>
    %c0_63 = arith.constant 0 : index
    %c0_64 = arith.constant 0 : index
    %c0_65 = arith.constant 0 : index
    %96 = vector.load %arg4[%c0_63, %c0_64, %c0_65] : memref<1x16x1xf32, #tpu.memory_space<vmem>>, vector<1x16x1xf32>
    %97 = vector.shape_cast %96 : vector<1x16x1xf32> to vector<16x1xf32>
    %98 = vector.broadcast %97 : vector<16x1xf32> to vector<16x384xf32>
    %99 = arith.addf %73, %98 : vector<16x384xf32>
    %cst_66 = arith.constant 0.000000e+00 : f32
    %100 = vector.broadcast %cst_66 : f32 to vector<16x384xf32>
    %101 = arith.cmpf oge, %99, %100 : vector<16x384xf32>
    %cst_67 = arith.constant 2.000000e-01 : f32
    %102 = vector.broadcast %cst_67 : f32 to vector<16x384xf32>
    %103 = arith.mulf %102, %99 : vector<16x384xf32>
    %104 = arith.select %101, %99, %103 : vector<16x384xi1>, vector<16x384xf32>
    %cst_68 = arith.constant 0.000000e+00 : f32
    %105 = vector.shape_cast %95 : vector<1x384xi1> to vector<1x384xi1>
    %106 = vector.broadcast %105 : vector<1x384xi1> to vector<16x384xi1>
    %107 = vector.broadcast %cst_68 : f32 to vector<16x384xf32>
    %108 = arith.select %106, %104, %107 : vector<16x384xi1>, vector<16x384xf32>
    %cst_69 = arith.constant 0.000000e+00 : bf16
    %109 = vector.broadcast %cst_69 : bf16 to vector<16x128xbf16>
    %c0_70 = arith.constant 0 : index
    %c0_71 = arith.constant 0 : index
    %110 = vector.load %arg10[%c0_70, %c0_71] : memref<16x640xbf16, #tpu.memory_space<vmem>>, vector<16x128xbf16>
    tpu.vector_store %arg10[%c0_70, %c0_71], %109 {strides = array<i32>} : memref<16x640xbf16, #tpu.memory_space<vmem>>, vector<16x128xbf16>,
    %cst_72 = arith.constant 0.000000e+00 : bf16
    %111 = vector.broadcast %cst_72 : bf16 to vector<16x128xbf16>
    %c0_73 = arith.constant 0 : index
    %c512 = arith.constant 512 : index
    %112 = vector.load %arg10[%c0_73, %c512] : memref<16x640xbf16, #tpu.memory_space<vmem>>, vector<16x128xbf16>
    tpu.vector_store %arg10[%c0_73, %c512], %111 {strides = array<i32>} : memref<16x640xbf16, #tpu.memory_space<vmem>>, vector<16x128xbf16>,
    %113 = arith.truncf %108 : vector<16x384xf32> to vector<16x384xbf16>
    %c0_74 = arith.constant 0 : index
    %c128 = arith.constant 128 : index
    %114 = vector.load %arg10[%c0_74, %c128] : memref<16x640xbf16, #tpu.memory_space<vmem>>, vector<16x384xbf16>
    tpu.vector_store %arg10[%c0_74, %c128], %113 {strides = array<i32>} : memref<16x640xbf16, #tpu.memory_space<vmem>>, vector<16x384xbf16>,
    %cst_75 = arith.constant 0.000000e+00 : f32
    %115 = vector.broadcast %cst_75 : f32 to vector<16x384xf32>
    %c0_76 = arith.constant 0 : index
    %c0_77 = arith.constant 0 : index
    %c0_78 = arith.constant 0 : index
    %c0_79 = arith.constant 0 : index
    %116 = vector.load %arg5[%c0_76, %c0_77, %c0_78, %c0_79] : memref<1x9x16x16xbf16, #tpu.memory_space<vmem>>, vector<1x1x16x16xbf16>
    %117 = vector.shape_cast %116 : vector<1x1x16x16xbf16> to vector<16x16xbf16>
    %c0_80 = arith.constant 0 : index
    %c127 = arith.constant 127 : index
    %118 = vector.load %arg10[%c0_80, %c127] : memref<16x640xbf16, #tpu.memory_space<vmem>>, vector<16x384xbf16>
    %cst_81 = arith.constant dense<0.000000e+00> : vector<16x384xf32>
    %119 = tpu.matmul %117, %118, %cst_81 {dimension_numbers = #tpu.dot_dimension_numbers<[1], [0], [0], [1], [0, 0, 1, 1], [], []>} : vector<16x16xbf16>, vector<16x384xbf16>, vector<16x384xf32> -> vector<16x384xf32>
    %120 = arith.addf %115, %119 : vector<16x384xf32>
    %c0_82 = arith.constant 0 : index
    %c1_83 = arith.constant 1 : index
    %c0_84 = arith.constant 0 : index
    %c0_85 = arith.constant 0 : index
    %121 = vector.load %arg5[%c0_82, %c1_83, %c0_84, %c0_85] : memref<1x9x16x16xbf16, #tpu.memory_space<vmem>>, vector<1x1x16x16xbf16>
    %122 = vector.shape_cast %121 : vector<1x1x16x16xbf16> to vector<16x16xbf16>
    %c0_86 = arith.constant 0 : index
    %c128_87 = arith.constant 128 : index
    %123 = vector.load %arg10[%c0_86, %c128_87] : memref<16x640xbf16, #tpu.memory_space<vmem>>, vector<16x384xbf16>
    %cst_88 = arith.constant dense<0.000000e+00> : vector<16x384xf32>
    %124 = tpu.matmul %122, %123, %cst_88 {dimension_numbers = #tpu.dot_dimension_numbers<[1], [0], [0], [1], [0, 0, 1, 1], [], []>} : vector<16x16xbf16>, vector<16x384xbf16>, vector<16x384xf32> -> vector<16x384xf32>
    %125 = arith.addf %120, %124 : vector<16x384xf32>
    %c0_89 = arith.constant 0 : index
    %c2_90 = arith.constant 2 : index
    %c0_91 = arith.constant 0 : index
    %c0_92 = arith.constant 0 : index
    %126 = vector.load %arg5[%c0_89, %c2_90, %c0_91, %c0_92] : memref<1x9x16x16xbf16, #tpu.memory_space<vmem>>, vector<1x1x16x16xbf16>
    %127 = vector.shape_cast %126 : vector<1x1x16x16xbf16> to vector<16x16xbf16>
    %c0_93 = arith.constant 0 : index
    %c129 = arith.constant 129 : index
    %128 = vector.load %arg10[%c0_93, %c129] : memref<16x640xbf16, #tpu.memory_space<vmem>>, vector<16x384xbf16>
    %cst_94 = arith.constant dense<0.000000e+00> : vector<16x384xf32>
    %129 = tpu.matmul %127, %128, %cst_94 {dimension_numbers = #tpu.dot_dimension_numbers<[1], [0], [0], [1], [0, 0, 1, 1], [], []>} : vector<16x16xbf16>, vector<16x384xbf16>, vector<16x384xf32> -> vector<16x384xf32>
    %130 = arith.addf %125, %129 : vector<16x384xf32>
    %c0_95 = arith.constant 0 : index
    %c3_96 = arith.constant 3 : index
    %c0_97 = arith.constant 0 : index
    %c0_98 = arith.constant 0 : index
    %131 = vector.load %arg5[%c0_95, %c3_96, %c0_97, %c0_98] : memref<1x9x16x16xbf16, #tpu.memory_space<vmem>>, vector<1x1x16x16xbf16>
    %132 = vector.shape_cast %131 : vector<1x1x16x16xbf16> to vector<16x16xbf16>
    %c0_99 = arith.constant 0 : index
    %c145 = arith.constant 145 : index
    %133 = vector.load %arg10[%c0_99, %c145] : memref<16x640xbf16, #tpu.memory_space<vmem>>, vector<16x384xbf16>
    %cst_100 = arith.constant dense<0.000000e+00> : vector<16x384xf32>
    %134 = tpu.matmul %132, %133, %cst_100 {dimension_numbers = #tpu.dot_dimension_numbers<[1], [0], [0], [1], [0, 0, 1, 1], [], []>} : vector<16x16xbf16>, vector<16x384xbf16>, vector<16x384xf32> -> vector<16x384xf32>
    %135 = arith.addf %130, %134 : vector<16x384xf32>
    %c0_101 = arith.constant 0 : index
    %c4_102 = arith.constant 4 : index
    %c0_103 = arith.constant 0 : index
    %c0_104 = arith.constant 0 : index
    %136 = vector.load %arg5[%c0_101, %c4_102, %c0_103, %c0_104] : memref<1x9x16x16xbf16, #tpu.memory_space<vmem>>, vector<1x1x16x16xbf16>
    %137 = vector.shape_cast %136 : vector<1x1x16x16xbf16> to vector<16x16xbf16>
    %c0_105 = arith.constant 0 : index
    %c146 = arith.constant 146 : index
    %138 = vector.load %arg10[%c0_105, %c146] : memref<16x640xbf16, #tpu.memory_space<vmem>>, vector<16x384xbf16>
    %cst_106 = arith.constant dense<0.000000e+00> : vector<16x384xf32>
    %139 = tpu.matmul %137, %138, %cst_106 {dimension_numbers = #tpu.dot_dimension_numbers<[1], [0], [0], [1], [0, 0, 1, 1], [], []>} : vector<16x16xbf16>, vector<16x384xbf16>, vector<16x384xf32> -> vector<16x384xf32>
    %140 = arith.addf %135, %139 : vector<16x384xf32>
    %c0_107 = arith.constant 0 : index
    %c5_108 = arith.constant 5 : index
    %c0_109 = arith.constant 0 : index
    %c0_110 = arith.constant 0 : index
    %141 = vector.load %arg5[%c0_107, %c5_108, %c0_109, %c0_110] : memref<1x9x16x16xbf16, #tpu.memory_space<vmem>>, vector<1x1x16x16xbf16>
    %142 = vector.shape_cast %141 : vector<1x1x16x16xbf16> to vector<16x16xbf16>
    %c0_111 = arith.constant 0 : index
    %c147 = arith.constant 147 : index
    %143 = vector.load %arg10[%c0_111, %c147] : memref<16x640xbf16, #tpu.memory_space<vmem>>, vector<16x384xbf16>
    %cst_112 = arith.constant dense<0.000000e+00> : vector<16x384xf32>
    %144 = tpu.matmul %142, %143, %cst_112 {dimension_numbers = #tpu.dot_dimension_numbers<[1], [0], [0], [1], [0, 0, 1, 1], [], []>} : vector<16x16xbf16>, vector<16x384xbf16>, vector<16x384xf32> -> vector<16x384xf32>
    %145 = arith.addf %140, %144 : vector<16x384xf32>
    %c0_113 = arith.constant 0 : index
    %c6_114 = arith.constant 6 : index
    %c0_115 = arith.constant 0 : index
    %c0_116 = arith.constant 0 : index
    %146 = vector.load %arg5[%c0_113, %c6_114, %c0_115, %c0_116] : memref<1x9x16x16xbf16, #tpu.memory_space<vmem>>, vector<1x1x16x16xbf16>
    %147 = vector.shape_cast %146 : vector<1x1x16x16xbf16> to vector<16x16xbf16>
    %c0_117 = arith.constant 0 : index
    %c163 = arith.constant 163 : index
    %148 = vector.load %arg10[%c0_117, %c163] : memref<16x640xbf16, #tpu.memory_space<vmem>>, vector<16x384xbf16>
    %cst_118 = arith.constant dense<0.000000e+00> : vector<16x384xf32>
    %149 = tpu.matmul %147, %148, %cst_118 {dimension_numbers = #tpu.dot_dimension_numbers<[1], [0], [0], [1], [0, 0, 1, 1], [], []>} : vector<16x16xbf16>, vector<16x384xbf16>, vector<16x384xf32> -> vector<16x384xf32>
    %150 = arith.addf %145, %149 : vector<16x384xf32>
    %c0_119 = arith.constant 0 : index
    %c7_120 = arith.constant 7 : index
    %c0_121 = arith.constant 0 : index
    %c0_122 = arith.constant 0 : index
    %151 = vector.load %arg5[%c0_119, %c7_120, %c0_121, %c0_122] : memref<1x9x16x16xbf16, #tpu.memory_space<vmem>>, vector<1x1x16x16xbf16>
    %152 = vector.shape_cast %151 : vector<1x1x16x16xbf16> to vector<16x16xbf16>
    %c0_123 = arith.constant 0 : index
    %c164 = arith.constant 164 : index
    %153 = vector.load %arg10[%c0_123, %c164] : memref<16x640xbf16, #tpu.memory_space<vmem>>, vector<16x384xbf16>
    %cst_124 = arith.constant dense<0.000000e+00> : vector<16x384xf32>
    %154 = tpu.matmul %152, %153, %cst_124 {dimension_numbers = #tpu.dot_dimension_numbers<[1], [0], [0], [1], [0, 0, 1, 1], [], []>} : vector<16x16xbf16>, vector<16x384xbf16>, vector<16x384xf32> -> vector<16x384xf32>
    %155 = arith.addf %150, %154 : vector<16x384xf32>
    %c0_125 = arith.constant 0 : index
    %c8_126 = arith.constant 8 : index
    %c0_127 = arith.constant 0 : index
    %c0_128 = arith.constant 0 : index
    %156 = vector.load %arg5[%c0_125, %c8_126, %c0_127, %c0_128] : memref<1x9x16x16xbf16, #tpu.memory_space<vmem>>, vector<1x1x16x16xbf16>
    %157 = vector.shape_cast %156 : vector<1x1x16x16xbf16> to vector<16x16xbf16>
    %c0_129 = arith.constant 0 : index
    %c165 = arith.constant 165 : index
    %158 = vector.load %arg10[%c0_129, %c165] : memref<16x640xbf16, #tpu.memory_space<vmem>>, vector<16x384xbf16>
    %cst_130 = arith.constant dense<0.000000e+00> : vector<16x384xf32>
    %159 = tpu.matmul %157, %158, %cst_130 {dimension_numbers = #tpu.dot_dimension_numbers<[1], [0], [0], [1], [0, 0, 1, 1], [], []>} : vector<16x16xbf16>, vector<16x384xbf16>, vector<16x384xf32> -> vector<16x384xf32>
    %160 = arith.addf %155, %159 : vector<16x384xf32>
    %c1_i32 = arith.constant 1 : i32
    %161 = arith.subi %0, %c1_i32 : i32
    %162 = tpu.iota {dimensions = array<i32: 1>} : vector<1x384xi32>
    %163 = arith.sitofp %162 : vector<1x384xi32> to vector<1x384xf32>
    %cst_131 = arith.constant 0.055555556 : f32
    %164 = vector.broadcast %cst_131 : f32 to vector<1x384xf32>
    %165 = arith.mulf %163, %164 : vector<1x384xf32>
    %cst_132 = arith.constant 0.013888889 : f32
    %166 = vector.broadcast %cst_132 : f32 to vector<1x384xf32>
    %167 = arith.addf %165, %166 : vector<1x384xf32>
    %168 = math.floor %167 : vector<1x384xf32>
    %cst_133 = arith.constant 1.800000e+01 : f32
    %169 = vector.broadcast %cst_133 : f32 to vector<1x384xf32>
    %170 = arith.mulf %168, %169 : vector<1x384xf32>
    %171 = arith.subf %163, %170 : vector<1x384xf32>
    %172 = arith.sitofp %161 : i32 to f32
    %173 = vector.broadcast %172 : f32 to vector<1x384xf32>
    %174 = arith.addf %168, %173 : vector<1x384xf32>
    %cst_134 = arith.constant 1.550000e+01 : f32
    %175 = vector.broadcast %cst_134 : f32 to vector<1x384xf32>
    %176 = arith.cmpf olt, %171, %175 : vector<1x384xf32>
    %cst_135 = arith.constant -5.000000e-01 : f32
    %177 = vector.broadcast %cst_135 : f32 to vector<1x384xf32>
    %178 = arith.cmpf ogt, %174, %177 : vector<1x384xf32>
    %179 = arith.andi %176, %178 : vector<1x384xi1>
    %cst_136 = arith.constant 1.550000e+01 : f32
    %180 = vector.broadcast %cst_136 : f32 to vector<1x384xf32>
    %181 = arith.cmpf olt, %174, %180 : vector<1x384xf32>
    %182 = arith.andi %179, %181 : vector<1x384xi1>
    %c0_137 = arith.constant 0 : index
    %c0_138 = arith.constant 0 : index
    %c0_139 = arith.constant 0 : index
    %183 = vector.load %arg6[%c0_137, %c0_138, %c0_139] : memref<1x16x1xf32, #tpu.memory_space<vmem>>, vector<1x16x1xf32>
    %184 = vector.shape_cast %183 : vector<1x16x1xf32> to vector<16x1xf32>
    %185 = vector.broadcast %184 : vector<16x1xf32> to vector<16x384xf32>
    %186 = arith.addf %160, %185 : vector<16x384xf32>
    %cst_140 = arith.constant 0.000000e+00 : f32
    %187 = vector.broadcast %cst_140 : f32 to vector<16x384xf32>
    %188 = arith.cmpf oge, %186, %187 : vector<16x384xf32>
    %cst_141 = arith.constant 2.000000e-01 : f32
    %189 = vector.broadcast %cst_141 : f32 to vector<16x384xf32>
    %190 = arith.mulf %189, %186 : vector<16x384xf32>
    %191 = arith.select %188, %186, %190 : vector<16x384xi1>, vector<16x384xf32>
    %cst_142 = arith.constant 0.000000e+00 : f32
    %192 = vector.shape_cast %182 : vector<1x384xi1> to vector<1x384xi1>
    %193 = vector.broadcast %192 : vector<1x384xi1> to vector<16x384xi1>
    %194 = vector.broadcast %cst_142 : f32 to vector<16x384xf32>
    %195 = arith.select %193, %191, %194 : vector<16x384xi1>, vector<16x384xf32>
    %196 = arith.truncf %195 : vector<16x384xf32> to vector<16x384xbf16>
    %c0_143 = arith.constant 0 : index
    %c128_144 = arith.constant 128 : index
    %197 = vector.load %arg10[%c0_143, %c128_144] : memref<16x640xbf16, #tpu.memory_space<vmem>>, vector<16x384xbf16>
    tpu.vector_store %arg10[%c0_143, %c128_144], %196 {strides = array<i32>} : memref<16x640xbf16, #tpu.memory_space<vmem>>, vector<16x384xbf16>,
    %cst_145 = arith.constant 0.000000e+00 : f32
    %198 = vector.broadcast %cst_145 : f32 to vector<1x384xf32>
    %c0_146 = arith.constant 0 : index
    %c0_147 = arith.constant 0 : index
    %c0_148 = arith.constant 0 : index
    %c0_149 = arith.constant 0 : index
    %199 = vector.load %arg7[%c0_146, %c0_147, %c0_148, %c0_149] : memref<1x9x1x16xbf16, #tpu.memory_space<vmem>>, vector<1x1x1x16xbf16>
    %200 = vector.shape_cast %199 : vector<1x1x1x16xbf16> to vector<1x16xbf16>
    %c0_150 = arith.constant 0 : index
    %c127_151 = arith.constant 127 : index
    %201 = vector.load %arg10[%c0_150, %c127_151] : memref<16x640xbf16, #tpu.memory_space<vmem>>, vector<16x384xbf16>
    %cst_152 = arith.constant dense<0.000000e+00> : vector<1x384xf32>
    %202 = tpu.matmul %200, %201, %cst_152 {dimension_numbers = #tpu.dot_dimension_numbers<[1], [0], [0], [1], [0, 0, 1, 1], [], []>} : vector<1x16xbf16>, vector<16x384xbf16>, vector<1x384xf32> -> vector<1x384xf32>
    %203 = arith.addf %198, %202 : vector<1x384xf32>
    %c0_153 = arith.constant 0 : index
    %c1_154 = arith.constant 1 : index
    %c0_155 = arith.constant 0 : index
    %c0_156 = arith.constant 0 : index
    %204 = vector.load %arg7[%c0_153, %c1_154, %c0_155, %c0_156] : memref<1x9x1x16xbf16, #tpu.memory_space<vmem>>, vector<1x1x1x16xbf16>
    %205 = vector.shape_cast %204 : vector<1x1x1x16xbf16> to vector<1x16xbf16>
    %c0_157 = arith.constant 0 : index
    %c128_158 = arith.constant 128 : index
    %206 = vector.load %arg10[%c0_157, %c128_158] : memref<16x640xbf16, #tpu.memory_space<vmem>>, vector<16x384xbf16>
    %cst_159 = arith.constant dense<0.000000e+00> : vector<1x384xf32>
    %207 = tpu.matmul %205, %206, %cst_159 {dimension_numbers = #tpu.dot_dimension_numbers<[1], [0], [0], [1], [0, 0, 1, 1], [], []>} : vector<1x16xbf16>, vector<16x384xbf16>, vector<1x384xf32> -> vector<1x384xf32>
    %208 = arith.addf %203, %207 : vector<1x384xf32>
    %c0_160 = arith.constant 0 : index
    %c2_161 = arith.constant 2 : index
    %c0_162 = arith.constant 0 : index
    %c0_163 = arith.constant 0 : index
    %209 = vector.load %arg7[%c0_160, %c2_161, %c0_162, %c0_163] : memref<1x9x1x16xbf16, #tpu.memory_space<vmem>>, vector<1x1x1x16xbf16>
    %210 = vector.shape_cast %209 : vector<1x1x1x16xbf16> to vector<1x16xbf16>
    %c0_164 = arith.constant 0 : index
    %c129_165 = arith.constant 129 : index
    %211 = vector.load %arg10[%c0_164, %c129_165] : memref<16x640xbf16, #tpu.memory_space<vmem>>, vector<16x384xbf16>
    %cst_166 = arith.constant dense<0.000000e+00> : vector<1x384xf32>
    %212 = tpu.matmul %210, %211, %cst_166 {dimension_numbers = #tpu.dot_dimension_numbers<[1], [0], [0], [1], [0, 0, 1, 1], [], []>} : vector<1x16xbf16>, vector<16x384xbf16>, vector<1x384xf32> -> vector<1x384xf32>
    %213 = arith.addf %208, %212 : vector<1x384xf32>
    %c0_167 = arith.constant 0 : index
    %c3_168 = arith.constant 3 : index
    %c0_169 = arith.constant 0 : index
    %c0_170 = arith.constant 0 : index
    %214 = vector.load %arg7[%c0_167, %c3_168, %c0_169, %c0_170] : memref<1x9x1x16xbf16, #tpu.memory_space<vmem>>, vector<1x1x1x16xbf16>
    %215 = vector.shape_cast %214 : vector<1x1x1x16xbf16> to vector<1x16xbf16>
    %c0_171 = arith.constant 0 : index
    %c145_172 = arith.constant 145 : index
    %216 = vector.load %arg10[%c0_171, %c145_172] : memref<16x640xbf16, #tpu.memory_space<vmem>>, vector<16x384xbf16>
    %cst_173 = arith.constant dense<0.000000e+00> : vector<1x384xf32>
    %217 = tpu.matmul %215, %216, %cst_173 {dimension_numbers = #tpu.dot_dimension_numbers<[1], [0], [0], [1], [0, 0, 1, 1], [], []>} : vector<1x16xbf16>, vector<16x384xbf16>, vector<1x384xf32> -> vector<1x384xf32>
    %218 = arith.addf %213, %217 : vector<1x384xf32>
    %c0_174 = arith.constant 0 : index
    %c4_175 = arith.constant 4 : index
    %c0_176 = arith.constant 0 : index
    %c0_177 = arith.constant 0 : index
    %219 = vector.load %arg7[%c0_174, %c4_175, %c0_176, %c0_177] : memref<1x9x1x16xbf16, #tpu.memory_space<vmem>>, vector<1x1x1x16xbf16>
    %220 = vector.shape_cast %219 : vector<1x1x1x16xbf16> to vector<1x16xbf16>
    %c0_178 = arith.constant 0 : index
    %c146_179 = arith.constant 146 : index
    %221 = vector.load %arg10[%c0_178, %c146_179] : memref<16x640xbf16, #tpu.memory_space<vmem>>, vector<16x384xbf16>
    %cst_180 = arith.constant dense<0.000000e+00> : vector<1x384xf32>
    %222 = tpu.matmul %220, %221, %cst_180 {dimension_numbers = #tpu.dot_dimension_numbers<[1], [0], [0], [1], [0, 0, 1, 1], [], []>} : vector<1x16xbf16>, vector<16x384xbf16>, vector<1x384xf32> -> vector<1x384xf32>
    %223 = arith.addf %218, %222 : vector<1x384xf32>
    %c0_181 = arith.constant 0 : index
    %c5_182 = arith.constant 5 : index
    %c0_183 = arith.constant 0 : index
    %c0_184 = arith.constant 0 : index
    %224 = vector.load %arg7[%c0_181, %c5_182, %c0_183, %c0_184] : memref<1x9x1x16xbf16, #tpu.memory_space<vmem>>, vector<1x1x1x16xbf16>
    %225 = vector.shape_cast %224 : vector<1x1x1x16xbf16> to vector<1x16xbf16>
    %c0_185 = arith.constant 0 : index
    %c147_186 = arith.constant 147 : index
    %226 = vector.load %arg10[%c0_185, %c147_186] : memref<16x640xbf16, #tpu.memory_space<vmem>>, vector<16x384xbf16>
    %cst_187 = arith.constant dense<0.000000e+00> : vector<1x384xf32>
    %227 = tpu.matmul %225, %226, %cst_187 {dimension_numbers = #tpu.dot_dimension_numbers<[1], [0], [0], [1], [0, 0, 1, 1], [], []>} : vector<1x16xbf16>, vector<16x384xbf16>, vector<1x384xf32> -> vector<1x384xf32>
    %228 = arith.addf %223, %227 : vector<1x384xf32>
    %c0_188 = arith.constant 0 : index
    %c6_189 = arith.constant 6 : index
    %c0_190 = arith.constant 0 : index
    %c0_191 = arith.constant 0 : index
    %229 = vector.load %arg7[%c0_188, %c6_189, %c0_190, %c0_191] : memref<1x9x1x16xbf16, #tpu.memory_space<vmem>>, vector<1x1x1x16xbf16>
    %230 = vector.shape_cast %229 : vector<1x1x1x16xbf16> to vector<1x16xbf16>
    %c0_192 = arith.constant 0 : index
    %c163_193 = arith.constant 163 : index
    %231 = vector.load %arg10[%c0_192, %c163_193] : memref<16x640xbf16, #tpu.memory_space<vmem>>, vector<16x384xbf16>
    %cst_194 = arith.constant dense<0.000000e+00> : vector<1x384xf32>
    %232 = tpu.matmul %230, %231, %cst_194 {dimension_numbers = #tpu.dot_dimension_numbers<[1], [0], [0], [1], [0, 0, 1, 1], [], []>} : vector<1x16xbf16>, vector<16x384xbf16>, vector<1x384xf32> -> vector<1x384xf32>
    %233 = arith.addf %228, %232 : vector<1x384xf32>
    %c0_195 = arith.constant 0 : index
    %c7_196 = arith.constant 7 : index
    %c0_197 = arith.constant 0 : index
    %c0_198 = arith.constant 0 : index
    %234 = vector.load %arg7[%c0_195, %c7_196, %c0_197, %c0_198] : memref<1x9x1x16xbf16, #tpu.memory_space<vmem>>, vector<1x1x1x16xbf16>
    %235 = vector.shape_cast %234 : vector<1x1x1x16xbf16> to vector<1x16xbf16>
    %c0_199 = arith.constant 0 : index
    %c164_200 = arith.constant 164 : index
    %236 = vector.load %arg10[%c0_199, %c164_200] : memref<16x640xbf16, #tpu.memory_space<vmem>>, vector<16x384xbf16>
    %cst_201 = arith.constant dense<0.000000e+00> : vector<1x384xf32>
    %237 = tpu.matmul %235, %236, %cst_201 {dimension_numbers = #tpu.dot_dimension_numbers<[1], [0], [0], [1], [0, 0, 1, 1], [], []>} : vector<1x16xbf16>, vector<16x384xbf16>, vector<1x384xf32> -> vector<1x384xf32>
    %238 = arith.addf %233, %237 : vector<1x384xf32>
    %c0_202 = arith.constant 0 : index
    %c8_203 = arith.constant 8 : index
    %c0_204 = arith.constant 0 : index
    %c0_205 = arith.constant 0 : index
    %239 = vector.load %arg7[%c0_202, %c8_203, %c0_204, %c0_205] : memref<1x9x1x16xbf16, #tpu.memory_space<vmem>>, vector<1x1x1x16xbf16>
    %240 = vector.shape_cast %239 : vector<1x1x1x16xbf16> to vector<1x16xbf16>
    %c0_206 = arith.constant 0 : index
    %c165_207 = arith.constant 165 : index
    %241 = vector.load %arg10[%c0_206, %c165_207] : memref<16x640xbf16, #tpu.memory_space<vmem>>, vector<16x384xbf16>
    %cst_208 = arith.constant dense<0.000000e+00> : vector<1x384xf32>
    %242 = tpu.matmul %240, %241, %cst_208 {dimension_numbers = #tpu.dot_dimension_numbers<[1], [0], [0], [1], [0, 0, 1, 1], [], []>} : vector<1x16xbf16>, vector<16x384xbf16>, vector<1x384xf32> -> vector<1x384xf32>
    %243 = arith.addf %238, %242 : vector<1x384xf32>
    %c0_209 = arith.constant 0 : index
    %c0_210 = arith.constant 0 : index
    %c0_211 = arith.constant 0 : index
    %244 = vector.load %arg8[%c0_209, %c0_210, %c0_211] : memref<1x1x1xf32, #tpu.memory_space<vmem>>, vector<1x1x1xf32>
    %245 = vector.shape_cast %244 : vector<1x1x1xf32> to vector<1x1xf32>
    %246 = vector.broadcast %245 : vector<1x1xf32> to vector<1x384xf32>
    %247 = arith.addf %243, %246 : vector<1x384xf32>
    %248 = math.absf %247 : vector<1x384xf32>
    %cst_212 = arith.constant 0.000000e+00 : f32
    %249 = vector.broadcast %cst_212 : f32 to vector<1x384xf32>
    %250 = arith.subf %249, %248 : vector<1x384xf32>
    %251 = math.exp %250 : vector<1x384xf32>
    %cst_213 = arith.constant 1.000000e+00 : f32
    %252 = vector.broadcast %cst_213 : f32 to vector<1x384xf32>
    %253 = arith.addf %252, %251 : vector<1x384xf32>
    %254 = tpu.reciprocal %253 {approx = true} : vector<1x384xf32> -> vector<1x384xf32>
    %cst_214 = arith.constant 0.000000e+00 : f32
    %255 = vector.broadcast %cst_214 : f32 to vector<1x384xf32>
    %256 = arith.cmpf oge, %247, %255 : vector<1x384xf32>
    %257 = arith.mulf %251, %254 : vector<1x384xf32>
    %258 = arith.select %256, %254, %257 : vector<1x384xi1>, vector<1x384xf32>
    %c0_215 = arith.constant 0 : index
    %c0_216 = arith.constant 0 : index
    %c0_217 = arith.constant 0 : index
    %c0_218 = arith.constant 0 : index
    %259 = vector.load %arg9[%c0_215, %c0_216, %c0_217, %c0_218] : memref<1x1x1x384xf32, #tpu.memory_space<vmem>>, vector<1x1x1x384xf32>
    %260 = vector.shape_cast %259 : vector<1x1x1x384xf32> to vector<1x384xf32>
    %261 = vector.shape_cast %258 : vector<1x384xf32> to vector<1x1x1x384xf32>
    tpu.vector_store %arg9[%c0_215, %c0_216, %c0_217, %c0_218], %261 {strides = array<i32>} : memref<1x1x1x384xf32, #tpu.memory_space<vmem>>, vector<1x1x1x384xf32>,
    return
  }
  func.func @transform_0(%arg0: i32, %arg1: i32) -> (i32, i32, i32, i32) {
    %c0_i32 = arith.constant 0 : i32
    %c0_i32_0 = arith.constant 0 : i32
    %c0_i32_1 = arith.constant 0 : i32
    return %arg0, %arg1, %c0_i32, %c0_i32_0 : i32, i32, i32, i32
  }
  func.func @transform_1(%arg0: i32, %arg1: i32) -> (i32, i32, i32, i32) {
    %c0_i32 = arith.constant 0 : i32
    %c0_i32_0 = arith.constant 0 : i32
    %c0_i32_1 = arith.constant 0 : i32
    %c0_i32_2 = arith.constant 0 : i32
    return %arg0, %c0_i32, %c0_i32_0, %c0_i32_1 : i32, i32, i32, i32
  }
  func.func @transform_2(%arg0: i32, %arg1: i32) -> (i32, i32, i32) {
    %c0_i32 = arith.constant 0 : i32
    %c0_i32_0 = arith.constant 0 : i32
    %c0_i32_1 = arith.constant 0 : i32
    return %arg0, %c0_i32, %c0_i32_0 : i32, i32, i32
  }
  func.func @transform_3(%arg0: i32, %arg1: i32) -> (i32, i32, i32, i32) {
    %c0_i32 = arith.constant 0 : i32
    %c0_i32_0 = arith.constant 0 : i32
    %c0_i32_1 = arith.constant 0 : i32
    %c0_i32_2 = arith.constant 0 : i32
    return %arg0, %c0_i32, %c0_i32_0, %c0_i32_1 : i32, i32, i32, i32
  }
  func.func @transform_4(%arg0: i32, %arg1: i32) -> (i32, i32, i32) {
    %c0_i32 = arith.constant 0 : i32
    %c0_i32_0 = arith.constant 0 : i32
    %c0_i32_1 = arith.constant 0 : i32
    return %arg0, %c0_i32, %c0_i32_0 : i32, i32, i32
  }
  func.func @transform_5(%arg0: i32, %arg1: i32) -> (i32, i32, i32, i32) {
    %c0_i32 = arith.constant 0 : i32
    %c0_i32_0 = arith.constant 0 : i32
    %c0_i32_1 = arith.constant 0 : i32
    %c0_i32_2 = arith.constant 0 : i32
    return %arg0, %c0_i32, %c0_i32_0, %c0_i32_1 : i32, i32, i32, i32
  }
  func.func @transform_6(%arg0: i32, %arg1: i32) -> (i32, i32, i32) {
    %c0_i32 = arith.constant 0 : i32
    %c0_i32_0 = arith.constant 0 : i32
    %c0_i32_1 = arith.constant 0 : i32
    return %arg0, %c0_i32, %c0_i32_0 : i32, i32, i32
  }
  func.func @transform_7(%arg0: i32, %arg1: i32) -> (i32, i32, i32, i32) {
    %c0_i32 = arith.constant 0 : i32
    %c0_i32_0 = arith.constant 0 : i32
    %c0_i32_1 = arith.constant 0 : i32
    return %arg0, %arg1, %c0_i32, %c0_i32_0 : i32, i32, i32, i32
  }
}

</mosaic_0001>

<llo_original>
// kernel: tpu_custom_call.1
$region0: #{tpu_custom_call.1}
  #allocation0 [shape = 'u32[]', space=smem, size = 0x4, offset = 0x4, fixed_abs, tag = 'smem constant byte address 0x4 - core index']
  #allocation1 [shape = 'u32[144,128]{1,0:T(1,128)}', space=vmem, size = 0x12000, scoped, tag = 'internal scratch']
  #allocation2 [shape = 'bf16[16,640]{1,0:T(16,128)(2,1)}', space=vmem, size = 0x5000, scoped, tag = 'scratch operand']
  %s0 = inlined_call_operand.vmem [shape: f32[3,1,1,512], index: 0, kind: input, shape index: {}]
  %s1 = inlined_call_operand.vmem [shape: f32[3,9,16,1], index: 1, kind: input, shape index: {}]
  %s2 = inlined_call_operand.vmem [shape: f32[3,16,1], index: 2, kind: input, shape index: {}]
  %s3 = inlined_call_operand.vmem [shape: bf16[3,9,16,16], index: 3, kind: input, shape index: {}]
  %s4 = inlined_call_operand.vmem [shape: f32[3,16,1], index: 4, kind: input, shape index: {}]
  %s5 = inlined_call_operand.vmem [shape: bf16[3,9,1,16], index: 5, kind: input, shape index: {}]
  %s6 = inlined_call_operand.vmem [shape: f32[3,1,1], index: 6, kind: input, shape index: {}]
  %s7 = inlined_call_operand.hbm [shape: f32[3,1,1,384], index: 7, kind: output, shape index: {}]
  %s8 = sld [smem:[#allocation0]]
  $region61: #{tpu_custom_call.1} parent=0
    _
  %s10 = ssub.s32 1, %s8
  %s11 = scalar_select 0, %s10, %s8
  $region1: #{tpu_custom_call.1} parent=0
    #allocation3 [shape = 'u8[3072]{0}', space=vmem, size = 0xc00, scoped, tag = 'output window, operand 0']
    #allocation4 [shape = 's32[2]{0}', space=sflag, size = 0x8, scoped, tag = 'scoped memory for tpu_custom_call.1']
    %12 = vsyncpa [#allocation4], 0
    %s13 = scalar_lea.sflag [#allocation4], 1
    %14 = vsyncpa %s13, 0
    loop: start=0, step=1, limit=5
    $region2: #{tpu_custom_call.1} parent=1 // loop_pre_header
      _
    $region3: #{tpu_custom_call.1} parent=1 // loop_header
      %s16 = sphi 0, %s20
      %p17 = scmp.ge.s32.totalorder %s16, 5
      %s23 = sphi 0, %s35
      %s24 = sphi 0, %s31
      %s25 = sphi 0, %s23
      %s26 = sphi 0, %s24
      %s27 = sphi 0, %s25
      %s28 = sphi 0, %s26
      %s40 = sphi 0, %s42
      %s43 = sphi 0, %s40
      %s44 = sphi 0, %s43
      %s60 = sphi 0, %s44
      %s66 = sphi 0, %s68
      %s69 = sphi 0, %s66
      %s70 = sphi 0, %s69
      %s86 = sphi 0, %s70
      %s92 = sphi 0, %s94
      %s95 = sphi 0, %s92
      %s96 = sphi 0, %s95
      %s112 = sphi 0, %s96
      %s118 = sphi 0, %s120
      %s121 = sphi 0, %s118
      %s122 = sphi 0, %s121
      %s138 = sphi 0, %s122
      %s144 = sphi 0, %s146
      %s147 = sphi 0, %s144
      %s148 = sphi 0, %s147
      %s164 = sphi 0, %s148
      %s170 = sphi 0, %s172
      %s173 = sphi 0, %s170
      %s174 = sphi 0, %s173
      %s190 = sphi 0, %s174
      %s196 = sphi 0, %s198
      %s199 = sphi 0, %s196
      %s200 = sphi 0, %s199
      %s216 = sphi 0, %s200
      %s224 = sphi 0, %s226
      %s227 = sphi 0, %s224
      %s228 = sphi 0, %s227
      %s244 = sphi 0, %s228
    $region4: #{tpu_custom_call.1} parent=1 // loop_header_branch
      %19 = sbr.rel (%p17) target = $region8
    $region5: #{tpu_custom_call.1} parent=1 // loop_body
      %s21 = ssub.s32 %s16, 1
      %s22 = ssub.s32 %s16, 2
      %s29 = sadd.s32 1, %s24
      %p30 = scmp.ge.s32.totalorder %s29, 1
      %s31 = scalar_select %p30, 0, %s29
      %s32 = sadd.s32 1, %s23
      %s33 = scalar_select %p30, %s32, %s23
      %p34 = scmp.ge.s32.totalorder %s33, 3
      %s35 = scalar_select %p34, 0, %s33
      %s36 = ssub.s32 %s23, %s35
      %s37 = ssub.s32 %s24, %s31
      %s38 = sor.u32 %s36, %s37
      %p39 = scmp.eq.s32.totalorder %s38, 0
      %s41 = sadd.s32 %s40, 1
      %s42 = scalar_select %p39, %s40, %s41
      %p45 = pneg %p39
      %p46 = scmp.eq.s32.totalorder %s16, 2
      %p47 = por %p45, %p46
      %p48 = scmp.ne.s32.totalorder %s40, %s43
      %p49 = scmp.eq.s32.totalorder %s16, 0
      %p50 = por %p48, %p49
      %p51 = scmp.ne.s32.totalorder %s40, %s43
      %p52 = scmp.eq.s32.totalorder %s21, 2
      %p53 = por %p51, %p52
      %p54 = scmp.ne.s32.totalorder %s43, %s44
      %p55 = scmp.eq.s32.totalorder %s21, 0
      %p56 = por %p54, %p55
      %p57 = scmp.ne.s32.totalorder %s43, %s44
      %p58 = scmp.eq.s32.totalorder %s22, 2
      %p59 = por %p57, %p58
      %p61 = scmp.ne.s32.totalorder %s44, %s60
      %p62 = scmp.eq.s32.totalorder %s22, 0
      %p63 = por %p61, %p62
      %s64 = ssub.s32 %s23, %s35
      %p65 = scmp.eq.s32.totalorder %s64, 0
      %s67 = sadd.s32 %s66, 1
      %s68 = scalar_select %p65, %s66, %s67
      %p71 = pneg %p65
      %p72 = scmp.eq.s32.totalorder %s16, 2
      %p73 = por %p71, %p72
      %p74 = scmp.ne.s32.totalorder %s66, %s69
      %p75 = scmp.eq.s32.totalorder %s16, 0
      %p76 = por %p74, %p75
      %p77 = scmp.ne.s32.totalorder %s66, %s69
      %p78 = scmp.eq.s32.totalorder %s21, 2
      %p79 = por %p77, %p78
      %p80 = scmp.ne.s32.totalorder %s69, %s70
      %p81 = scmp.eq.s32.totalorder %s21, 0
      %p82 = por %p80, %p81
      %p83 = scmp.ne.s32.totalorder %s69, %s70
      %p84 = scmp.eq.s32.totalorder %s22, 2
      %p85 = por %p83, %p84
      %p87 = scmp.ne.s32.totalorder %s70, %s86
      %p88 = scmp.eq.s32.totalorder %s22, 0
      %p89 = por %p87, %p88
      %s90 = ssub.s32 %s23, %s35
      %p91 = scmp.eq.s32.totalorder %s90, 0
      %s93 = sadd.s32 %s92, 1
      %s94 = scalar_select %p91, %s92, %s93
      %p97 = pneg %p91
      %p98 = scmp.eq.s32.totalorder %s16, 2
      %p99 = por %p97, %p98
      %p100 = scmp.ne.s32.totalorder %s92, %s95
      %p101 = scmp.eq.s32.totalorder %s16, 0
      %p102 = por %p100, %p101
      %p103 = scmp.ne.s32.totalorder %s92, %s95
      %p104 = scmp.eq.s32.totalorder %s21, 2
      %p105 = por %p103, %p104
      %p106 = scmp.ne.s32.totalorder %s95, %s96
      %p107 = scmp.eq.s32.totalorder %s21, 0
      %p108 = por %p106, %p107
      %p109 = scmp.ne.s32.totalorder %s95, %s96
      %p110 = scmp.eq.s32.totalorder %s22, 2
      %p111 = por %p109, %p110
      %p113 = scmp.ne.s32.totalorder %s96, %s112
      %p114 = scmp.eq.s32.totalorder %s22, 0
      %p115 = por %p113, %p114
      %s116 = ssub.s32 %s23, %s35
      %p117 = scmp.eq.s32.totalorder %s116, 0
      %s119 = sadd.s32 %s118, 1
      %s120 = scalar_select %p117, %s118, %s119
      %p123 = pneg %p117
      %p124 = scmp.eq.s32.totalorder %s16, 2
      %p125 = por %p123, %p124
      %p126 = scmp.ne.s32.totalorder %s118, %s121
      %p127 = scmp.eq.s32.totalorder %s16, 0
      %p128 = por %p126, %p127
      %p129 = scmp.ne.s32.totalorder %s118, %s121
      %p130 = scmp.eq.s32.totalorder %s21, 2
      %p131 = por %p129, %p130
      %p132 = scmp.ne.s32.totalorder %s121, %s122
      %p133 = scmp.eq.s32.totalorder %s21, 0
      %p134 = por %p132, %p133
      %p135 = scmp.ne.s32.totalorder %s121, %s122
      %p136 = scmp.eq.s32.totalorder %s22, 2
      %p137 = por %p135, %p136
      %p139 = scmp.ne.s32.totalorder %s122, %s138
      %p140 = scmp.eq.s32.totalorder %s22, 0
      %p141 = por %p139, %p140
      %s142 = ssub.s32 %s23, %s35
      %p143 = scmp.eq.s32.totalorder %s142, 0
      %s145 = sadd.s32 %s144, 1
      %s146 = scalar_select %p143, %s144, %s145
      %p149 = pneg %p143
      %p150 = scmp.eq.s32.totalorder %s16, 2
      %p151 = por %p149, %p150
      %p152 = scmp.ne.s32.totalorder %s144, %s147
      %p153 = scmp.eq.s32.totalorder %s16, 0
      %p154 = por %p152, %p153
      %p155 = scmp.ne.s32.totalorder %s144, %s147
      %p156 = scmp.eq.s32.totalorder %s21, 2
      %p157 = por %p155, %p156
      %p158 = scmp.ne.s32.totalorder %s147, %s148
      %p159 = scmp.eq.s32.totalorder %s21, 0
      %p160 = por %p158, %p159
      %p161 = scmp.ne.s32.totalorder %s147, %s148
      %p162 = scmp.eq.s32.totalorder %s22, 2
      %p163 = por %p161, %p162
      %p165 = scmp.ne.s32.totalorder %s148, %s164
      %p166 = scmp.eq.s32.totalorder %s22, 0
      %p167 = por %p165, %p166
      %s168 = ssub.s32 %s23, %s35
      %p169 = scmp.eq.s32.totalorder %s168, 0
      %s171 = sadd.s32 %s170, 1
      %s172 = scalar_select %p169, %s170, %s171
      %p175 = pneg %p169
      %p176 = scmp.eq.s32.totalorder %s16, 2
      %p177 = por %p175, %p176
      %p178 = scmp.ne.s32.totalorder %s170, %s173
      %p179 = scmp.eq.s32.totalorder %s16, 0
      %p180 = por %p178, %p179
      %p181 = scmp.ne.s32.totalorder %s170, %s173
      %p182 = scmp.eq.s32.totalorder %s21, 2
      %p183 = por %p181, %p182
      %p184 = scmp.ne.s32.totalorder %s173, %s174
      %p185 = scmp.eq.s32.totalorder %s21, 0
      %p186 = por %p184, %p185
      %p187 = scmp.ne.s32.totalorder %s173, %s174
      %p188 = scmp.eq.s32.totalorder %s22, 2
      %p189 = por %p187, %p188
      %p191 = scmp.ne.s32.totalorder %s174, %s190
      %p192 = scmp.eq.s32.totalorder %s22, 0
      %p193 = por %p191, %p192
      %s194 = ssub.s32 %s23, %s35
      %p195 = scmp.eq.s32.totalorder %s194, 0
      %s197 = sadd.s32 %s196, 1
      %s198 = scalar_select %p195, %s196, %s197
      %p201 = pneg %p195
      %p202 = scmp.eq.s32.totalorder %s16, 2
      %p203 = por %p201, %p202
      %p204 = scmp.ne.s32.totalorder %s196, %s199
      %p205 = scmp.eq.s32.totalorder %s16, 0
      %p206 = por %p204, %p205
      %p207 = scmp.ne.s32.totalorder %s196, %s199
      %p208 = scmp.eq.s32.totalorder %s21, 2
      %p209 = por %p207, %p208
      %p210 = scmp.ne.s32.totalorder %s199, %s200
      %p211 = scmp.eq.s32.totalorder %s21, 0
      %p212 = por %p210, %p211
      %p213 = scmp.ne.s32.totalorder %s199, %s200
      %p214 = scmp.eq.s32.totalorder %s22, 2
      %p215 = por %p213, %p214
      %p217 = scmp.ne.s32.totalorder %s200, %s216
      %p218 = scmp.eq.s32.totalorder %s22, 0
      %p219 = por %p217, %p218
      %s220 = ssub.s32 %s23, %s35
      %s221 = ssub.s32 %s24, %s31
      %s222 = sor.u32 %s220, %s221
      %p223 = scmp.eq.s32.totalorder %s222, 0
      %s225 = sadd.s32 %s224, 1
      %s226 = scalar_select %p223, %s224, %s225
      %p229 = pneg %p223
      %p230 = scmp.eq.s32.totalorder %s16, 2
      %p231 = por %p229, %p230
      %p232 = scmp.ne.s32.totalorder %s224, %s227
      %p233 = scmp.eq.s32.totalorder %s16, 0
      %p234 = por %p232, %p233
      %p235 = scmp.ne.s32.totalorder %s224, %s227
      %p236 = scmp.eq.s32.totalorder %s21, 2
      %p237 = por %p235, %p236
      %p238 = scmp.ne.s32.totalorder %s227, %s228
      %p239 = scmp.eq.s32.totalorder %s21, 0
      %p240 = por %p238, %p239
      %p241 = scmp.ne.s32.totalorder %s227, %s228
      %p242 = scmp.eq.s32.totalorder %s22, 2
      %p243 = por %p241, %p242
      %p245 = scmp.ne.s32.totalorder %s228, %s244
      %p246 = scmp.eq.s32.totalorder %s22, 0
      %p247 = por %p245, %p246
      %p248 = scmp.le.s32.totalorder 1, %s16
      %p249 = scmp.lt.s32.totalorder %s16, 4
      %p250 = pnand %p248, %p249
      %p251 = pneg %p250
      // Predicated region
      $region9: #{tpu_custom_call.1} parent=5 // pred_check
        _
      $region10: #{tpu_custom_call.1} parent=5 // pred_check_branch
        %253 = sbr.rel (%p250) target = $region12
      $region11: #{tpu_custom_call.1} parent=5 // pred_region
        %s254 = ssub.s32 %s16, 1
      $region12: #{tpu_custom_call.1} parent=5 // pred_fallthru
        _
      %p255 = scmp.lt.s32.totalorder %s16, 3
      // Predicated region
      $region13: #{tpu_custom_call.1} parent=5 // pred_check
        %p256 = pneg %p255
      $region14: #{tpu_custom_call.1} parent=5 // pred_check_branch
        %258 = sbr.rel (%p256) target = $region16
      $region15: #{tpu_custom_call.1} parent=5 // pred_region
        // Predicated region
        $region17: #{tpu_custom_call.1} parent=15 // pred_check
          %p259 = pneg %p50
        $region18: #{tpu_custom_call.1} parent=15 // pred_check_branch
          %261 = sbr.rel (%p259) target = $region20
        $region19: #{tpu_custom_call.1} parent=15 // pred_region
          %p262 = scmp.lt.s32.totalorder %s23, 2
          %s263 = scalar_select %p262, %s23, 2
          %p264 = scmp.lt.s32.totalorder %s24, 0
          %s265 = scalar_select %p264, %s24, 0
          %s266 = smul.addr %s265, 4
          %s267 = smul.addr %s263, 4
          %s268 = sadd.s32 %s266, %s267
          %s269 = scalar_lea.vmem %s0, %s268
        $region20: #{tpu_custom_call.1} parent=15 // pred_fallthru
          _
        // Predicated region
        $region21: #{tpu_custom_call.1} parent=15 // pred_check
          %p270 = pneg %p76
        $region22: #{tpu_custom_call.1} parent=15 // pred_check_branch
          %272 = sbr.rel (%p270) target = $region24
        $region23: #{tpu_custom_call.1} parent=15 // pred_region
          %p273 = scmp.lt.s32.totalorder %s23, 2
          %s274 = scalar_select %p273, %s23, 2
          %s275 = smul.addr %s274, 18
          %s276 = smul.addr %s275, 8
          %s277 = scalar_lea.vmem %s1, %s276
        $region24: #{tpu_custom_call.1} parent=15 // pred_fallthru
          _
        // Predicated region
        $region25: #{tpu_custom_call.1} parent=15 // pred_check
          %p278 = pneg %p102
        $region26: #{tpu_custom_call.1} parent=15 // pred_check_branch
          %280 = sbr.rel (%p278) target = $region28
        $region27: #{tpu_custom_call.1} parent=15 // pred_region
          %p281 = scmp.lt.s32.totalorder %s23, 2
          %s282 = scalar_select %p281, %s23, 2
          %s283 = smul.addr %s282, 2
          %s284 = smul.addr %s283, 8
          %s285 = scalar_lea.vmem %s2, %s284
        $region28: #{tpu_custom_call.1} parent=15 // pred_fallthru
          _
        // Predicated region
        $region29: #{tpu_custom_call.1} parent=15 // pred_check
          %p286 = pneg %p128
        $region30: #{tpu_custom_call.1} parent=15 // pred_check_branch
          %288 = sbr.rel (%p286) target = $region32
        $region31: #{tpu_custom_call.1} parent=15 // pred_region
          %p289 = scmp.lt.s32.totalorder %s23, 2
          %s290 = scalar_select %p289, %s23, 2
          %s291 = smul.addr %s290, 18
          %s292 = smul.addr %s291, 4
          %s293 = scalar_lea.vmem %s3, %s292
        $region32: #{tpu_custom_call.1} parent=15 // pred_fallthru
          _
        // Predicated region
        $region33: #{tpu_custom_call.1} parent=15 // pred_check
          %p294 = pneg %p154
        $region34: #{tpu_custom_call.1} parent=15 // pred_check_branch
          %296 = sbr.rel (%p294) target = $region36
        $region35: #{tpu_custom_call.1} parent=15 // pred_region
          %p297 = scmp.lt.s32.totalorder %s23, 2
          %s298 = scalar_select %p297, %s23, 2
          %s299 = smul.addr %s298, 2
          %s300 = smul.addr %s299, 8
          %s301 = scalar_lea.vmem %s4, %s300
        $region36: #{tpu_custom_call.1} parent=15 // pred_fallthru
          _
        // Predicated region
        $region37: #{tpu_custom_call.1} parent=15 // pred_check
          %p302 = pneg %p180
        $region38: #{tpu_custom_call.1} parent=15 // pred_check_branch
          %304 = sbr.rel (%p302) target = $region40
        $region39: #{tpu_custom_call.1} parent=15 // pred_region
          %p305 = scmp.lt.s32.totalorder %s23, 2
          %s306 = scalar_select %p305, %s23, 2
          %s307 = smul.addr %s306, 9
          %s308 = scalar_lea.vmem %s5, %s307
        $region40: #{tpu_custom_call.1} parent=15 // pred_fallthru
          _
        // Predicated region
        $region41: #{tpu_custom_call.1} parent=15 // pred_check
          %p309 = pneg %p206
        $region42: #{tpu_custom_call.1} parent=15 // pred_check_branch
          %311 = sbr.rel (%p309) target = $region44
        $region43: #{tpu_custom_call.1} parent=15 // pred_region
          %p312 = scmp.lt.s32.totalorder %s23, 2
          %s313 = scalar_select %p312, %s23, 2
          %s314 = scalar_lea.vmem %s6, %s313
        $region44: #{tpu_custom_call.1} parent=15 // pred_fallthru
          _
      $region16: #{tpu_custom_call.1} parent=5 // pred_fallthru
        _
      %p315 = scmp.le.s32.totalorder 1, %s16
      %p316 = scmp.lt.s32.totalorder %s16, 4
      %p317 = pnand %p315, %p316
      %p318 = pneg %p317
      // Predicated region
      $region45: #{tpu_custom_call.1} parent=5 // pred_check
        _
      $region46: #{tpu_custom_call.1} parent=5 // pred_check_branch
        %320 = sbr.rel (%p317) target = $region48
      $region47: #{tpu_custom_call.1} parent=5 // pred_region
        %s321 = ssub.s32 %s16, 1
        %p322 = scmp.lt.s32.totalorder %s25, 2
        %s323 = scalar_select %p322, %s25, 2
        %p324 = scmp.lt.s32.totalorder %s26, 0
        %s325 = scalar_select %p324, %s26, 0
        %s326 = smul.addr %s325, 4
        %s327 = smul.addr %s323, 4
        %s328 = sadd.s32 %s326, %s327
        %s329 = scalar_lea.vmem %s0, %s328
        %p330 = pneg %p56
        %p331 = pneg %p53
        %p332 = scmp.lt.s32.totalorder %s25, 2
        %s333 = scalar_select %p332, %s25, 2
        %s334 = smul.addr %s333, 18
        %s335 = smul.addr %s334, 8
        %s336 = scalar_lea.vmem %s1, %s335
        %p337 = pneg %p82
        %p338 = pneg %p79
        %p339 = scmp.lt.s32.totalorder %s25, 2
        %s340 = scalar_select %p339, %s25, 2
        %s341 = smul.addr %s340, 2
        %s342 = smul.addr %s341, 8
        %s343 = scalar_lea.vmem %s2, %s342
        %p344 = pneg %p108
        %p345 = pneg %p105
        %p346 = scmp.lt.s32.totalorder %s25, 2
        %s347 = scalar_select %p346, %s25, 2
        %s348 = smul.addr %s347, 18
        %s349 = smul.addr %s348, 4
        %s350 = scalar_lea.vmem %s3, %s349
        %p351 = pneg %p134
        %p352 = pneg %p131
        %p353 = scmp.lt.s32.totalorder %s25, 2
        %s354 = scalar_select %p353, %s25, 2
        %s355 = smul.addr %s354, 2
        %s356 = smul.addr %s355, 8
        %s357 = scalar_lea.vmem %s4, %s356
        %p358 = pneg %p160
        %p359 = pneg %p157
        %p360 = scmp.lt.s32.totalorder %s25, 2
        %s361 = scalar_select %p360, %s25, 2
        %s362 = smul.addr %s361, 9
        %s363 = scalar_lea.vmem %s5, %s362
        %p364 = pneg %p186
        %p365 = pneg %p183
        %p366 = scmp.lt.s32.totalorder %s25, 2
        %s367 = scalar_select %p366, %s25, 2
        %s368 = scalar_lea.vmem %s6, %s367
        %p369 = pneg %p212
        %p370 = pneg %p209
        %p371 = pneg %p240
        %p372 = pneg %p237
        %s373 = sand.u32 %s227, 1
        %s374 = scalar_lea.sflag [#allocation4], %s373
        %s375 = sand.u32 %s227, 1
        %s376 = smul.addr %s375, 3
        %s377 = scalar_lea.vmem [#allocation3], %s376
        %p378 = scmp.lt.s32.totalorder %s25, 2
        %s379 = scalar_select %p378, %s25, 2
        %p380 = scmp.lt.s32.totalorder %s26, 0
        %s381 = scalar_select %p380, %s26, 0
        %s382 = smul.addr %s381, 4
        %s383 = smul.addr %s379, 4
        %s384 = sadd.s32 %s382, %s383
        %s385 = scalar_lea.vmem %s0, %s384
        %p386 = scmp.lt.s32.totalorder %s25, 2
        %s387 = scalar_select %p386, %s25, 2
        %s388 = smul.addr %s387, 18
        %s389 = smul.addr %s388, 8
        %s390 = scalar_lea.vmem %s1, %s389
        %p391 = scmp.lt.s32.totalorder %s25, 2
        %s392 = scalar_select %p391, %s25, 2
        %s393 = smul.addr %s392, 2
        %s394 = smul.addr %s393, 8
        %s395 = scalar_lea.vmem %s2, %s394
        %p396 = scmp.lt.s32.totalorder %s25, 2
        %s397 = scalar_select %p396, %s25, 2
        %s398 = smul.addr %s397, 18
        %s399 = smul.addr %s398, 4
        %s400 = scalar_lea.vmem %s3, %s399
        %p401 = scmp.lt.s32.totalorder %s25, 2
        %s402 = scalar_select %p401, %s25, 2
        %s403 = smul.addr %s402, 2
        %s404 = smul.addr %s403, 8
        %s405 = scalar_lea.vmem %s4, %s404
        %p406 = scmp.lt.s32.totalorder %s25, 2
        %s407 = scalar_select %p406, %s25, 2
        %s408 = smul.addr %s407, 9
        %s409 = scalar_lea.vmem %s5, %s408
        %p410 = scmp.lt.s32.totalorder %s25, 2
        %s411 = scalar_select %p410, %s25, 2
        %s412 = scalar_lea.vmem %s6, %s411
        %s414 = smul.u32 %s26, 16
        %v415 = vld [vmem:[%s390] sm:$0xff]
        %v416 = vld [vmem:[%s390 + $0x8] sm:$0xff]
        %v417 = vld [vmem:[%s385] sm:$0x7]
        %419 = vset.pattern.permute.xlu0 0
        %420 = vperm.xlu0 %419, %v415
        %v421 = vpop.permute.xlu0 %420
        %424 = vset.pattern.permute.xlu0 0
        %425 = vperm.xlu0 %424, %v416
        %v426 = vpop.permute.xlu0 %425
        %v429 = vlaneseq
        %v430 = vshrl.u32 %v429, 7
        %v431 = vsub.s32 0, %v430
        %v432 = vrot.slane %v417, %v431
        %v433 = vlaneseq
        %v434 = vshrl.u32 %v433, 7
        %v435 = vsub.s32 1, %v434
        %v436 = vrot.slane %v417, %v435
        %v437 = vlaneseq
        %v438 = vshrl.u32 %v437, 7
        %v439 = vsub.s32 2, %v438
        %v440 = vrot.slane %v417, %v439
        %v444 = vmul.f32 %v421, %v432
        %v445 = vmul.f32 %v421, %v436
        %v446 = vmul.f32 %v421, %v440
        %v447 = vmul.f32 %v426, %v432
        %v448 = vmul.f32 %v426, %v436
        %v449 = vmul.f32 %v426, %v440
        %v450 = vadd.f32 %v444, 0.0
        %v451 = vadd.f32 %v445, 0.0
        %v452 = vadd.f32 %v446, 0.0
        %v453 = vadd.f32 %v447, 0.0
        %v454 = vadd.f32 %v448, 0.0
        %v455 = vadd.f32 %v449, 0.0
        %s456 = scalar_lea.vmem %s390, 16
        %v457 = vld [vmem:[%s456] sm:$0xff]
        %v458 = vld [vmem:[%s456 + $0x8] sm:$0xff]
        %v459 = vld [vmem:[%s385] sm:$0xf]
        %461 = vset.pattern.permute.xlu0 0
        %462 = vperm.xlu0 %461, %v457
        %v463 = vpop.permute.xlu0 %462
        %466 = vset.pattern.permute.xlu0 0
        %467 = vperm.xlu0 %466, %v458
        %v468 = vpop.permute.xlu0 %467
        %v471 = vlaneseq
        %v472 = vshrl.u32 %v471, 7
        %v473 = vsub.s32 0, %v472
        %v474 = vrot.slane %v459, %v473
        %v475 = vlaneseq
        %v476 = vshrl.u32 %v475, 7
        %v477 = vsub.s32 1, %v476
        %v478 = vrot.slane %v459, %v477
        %v479 = vlaneseq
        %v480 = vshrl.u32 %v479, 7
        %v481 = vsub.s32 2, %v480
        %v482 = vrot.slane %v459, %v481
        %v483 = vlaneseq
        %v484 = vshrl.u32 %v483, 7
        %v485 = vsub.s32 3, %v484
        %v486 = vrot.slane %v459, %v485
        %v491 = vmul.f32 %v463, %v474
        %v492 = vmul.f32 %v463, %v478
        %v493 = vmul.f32 %v463, %v482
        %v494 = vmul.f32 %v463, %v486
        %v495 = vmul.f32 %v468, %v474
        %v496 = vmul.f32 %v468, %v478
        %v497 = vmul.f32 %v468, %v482
        %v498 = vmul.f32 %v468, %v486
        %507 = vrot.lane.b32.xlu0 %v491, 127
        %v508 = vpop.permute.xlu0 %507
        %509 = vrot.lane.b32.xlu0 %v492, 127
        %v510 = vpop.permute.xlu0 %509
        %511 = vrot.lane.b32.xlu0 %v493, 127
        %v512 = vpop.permute.xlu0 %511
        %513 = vrot.lane.b32.xlu0 %v494, 127
        %v514 = vpop.permute.xlu0 %513
        %515 = vrot.lane.b32.xlu0 %v495, 127
        %v516 = vpop.permute.xlu0 %515
        %517 = vrot.lane.b32.xlu0 %v496, 127
        %v518 = vpop.permute.xlu0 %517
        %519 = vrot.lane.b32.xlu0 %v497, 127
        %v520 = vpop.permute.xlu0 %519
        %521 = vrot.lane.b32.xlu0 %v498, 127
        %v522 = vpop.permute.xlu0 %521
        %vm523 = vcmask 1039360
        %v524 = vsel %vm523, %v508, %v510
        %v525 = vsel %vm523, %v510, %v512
        %v526 = vsel %vm523, %v512, %v514
        %v527 = vsel %vm523, %v516, %v518
        %v528 = vsel %vm523, %v518, %v520
        %v529 = vsel %vm523, %v520, %v522
        %v536 = vadd.f32 %v450, %v524
        %v537 = vadd.f32 %v451, %v525
        %v538 = vadd.f32 %v452, %v526
        %v539 = vadd.f32 %v453, %v527
        %v540 = vadd.f32 %v454, %v528
        %v541 = vadd.f32 %v455, %v529
        %s542 = scalar_lea.vmem %s390, 32
        %v543 = vld [vmem:[%s542] sm:$0xff]
        %v544 = vld [vmem:[%s542 + $0x8] sm:$0xff]
        %546 = vset.pattern.permute.xlu0 0
        %547 = vperm.xlu0 %546, %v543
        %v548 = vpop.permute.xlu0 %547
        %551 = vset.pattern.permute.xlu0 0
        %552 = vperm.xlu0 %551, %v544
        %v553 = vpop.permute.xlu0 %552
        %v555 = vmul.f32 %v548, %v474
        %v556 = vmul.f32 %v548, %v478
        %v557 = vmul.f32 %v548, %v482
        %v558 = vmul.f32 %v548, %v486
        %v559 = vmul.f32 %v553, %v474
        %v560 = vmul.f32 %v553, %v478
        %v561 = vmul.f32 %v553, %v482
        %v562 = vmul.f32 %v553, %v486
        %571 = vrot.lane.b32.xlu0 %v555, 126
        %v572 = vpop.permute.xlu0 %571
        %573 = vrot.lane.b32.xlu0 %v556, 126
        %v574 = vpop.permute.xlu0 %573
        %575 = vrot.lane.b32.xlu0 %v557, 126
        %v576 = vpop.permute.xlu0 %575
        %577 = vrot.lane.b32.xlu0 %v558, 126
        %v578 = vpop.permute.xlu0 %577
        %579 = vrot.lane.b32.xlu0 %v559, 126
        %v580 = vpop.permute.xlu0 %579
        %581 = vrot.lane.b32.xlu0 %v560, 126
        %v582 = vpop.permute.xlu0 %581
        %583 = vrot.lane.b32.xlu0 %v561, 126
        %v584 = vpop.permute.xlu0 %583
        %585 = vrot.lane.b32.xlu0 %v562, 126
        %v586 = vpop.permute.xlu0 %585
        %vm587 = vcmask 1031168
        %v588 = vsel %vm587, %v572, %v574
        %v589 = vsel %vm587, %v574, %v576
        %v590 = vsel %vm587, %v576, %v578
        %v591 = vsel %vm587, %v580, %v582
        %v592 = vsel %vm587, %v582, %v584
        %v593 = vsel %vm587, %v584, %v586
        %v600 = vadd.f32 %v536, %v588
        %v601 = vadd.f32 %v537, %v589
        %v602 = vadd.f32 %v538, %v590
        %v603 = vadd.f32 %v539, %v591
        %v604 = vadd.f32 %v540, %v592
        %v605 = vadd.f32 %v541, %v593
        %s606 = scalar_lea.vmem %s390, 48
        %v607 = vld [vmem:[%s606] sm:$0xff]
        %v608 = vld [vmem:[%s606 + $0x8] sm:$0xff]
        %610 = vset.pattern.permute.xlu0 0
        %611 = vperm.xlu0 %610, %v607
        %v612 = vpop.permute.xlu0 %611
        %615 = vset.pattern.permute.xlu0 0
        %616 = vperm.xlu0 %615, %v608
        %v617 = vpop.permute.xlu0 %616
        %v619 = vmul.f32 %v612, %v474
        %v620 = vmul.f32 %v612, %v478
        %v621 = vmul.f32 %v612, %v482
        %v622 = vmul.f32 %v612, %v486
        %v623 = vmul.f32 %v617, %v474
        %v624 = vmul.f32 %v617, %v478
        %v625 = vmul.f32 %v617, %v482
        %v626 = vmul.f32 %v617, %v486
        %635 = vrot.lane.b32.xlu0 %v619, 110
        %v636 = vpop.permute.xlu0 %635
        %637 = vrot.lane.b32.xlu0 %v620, 110
        %v638 = vpop.permute.xlu0 %637
        %639 = vrot.lane.b32.xlu0 %v621, 110
        %v640 = vpop.permute.xlu0 %639
        %641 = vrot.lane.b32.xlu0 %v622, 110
        %v642 = vpop.permute.xlu0 %641
        %643 = vrot.lane.b32.xlu0 %v623, 110
        %v644 = vpop.permute.xlu0 %643
        %645 = vrot.lane.b32.xlu0 %v624, 110
        %v646 = vpop.permute.xlu0 %645
        %647 = vrot.lane.b32.xlu0 %v625, 110
        %v648 = vpop.permute.xlu0 %647
        %649 = vrot.lane.b32.xlu0 %v626, 110
        %v650 = vpop.permute.xlu0 %649
        %vm651 = vcmask 900096
        %v652 = vsel %vm651, %v636, %v638
        %v653 = vsel %vm651, %v638, %v640
        %v654 = vsel %vm651, %v640, %v642
        %v655 = vsel %vm651, %v644, %v646
        %v656 = vsel %vm651, %v646, %v648
        %v657 = vsel %vm651, %v648, %v650
        %v664 = vadd.f32 %v600, %v652
        %v665 = vadd.f32 %v601, %v653
        %v666 = vadd.f32 %v602, %v654
        %v667 = vadd.f32 %v603, %v655
        %v668 = vadd.f32 %v604, %v656
        %v669 = vadd.f32 %v605, %v657
        %s670 = scalar_lea.vmem %s390, 64
        %v671 = vld [vmem:[%s670] sm:$0xff]
        %v672 = vld [vmem:[%s670 + $0x8] sm:$0xff]
        %674 = vset.pattern.permute.xlu0 0
        %675 = vperm.xlu0 %674, %v671
        %v676 = vpop.permute.xlu0 %675
        %679 = vset.pattern.permute.xlu0 0
        %680 = vperm.xlu0 %679, %v672
        %v681 = vpop.permute.xlu0 %680
        %v683 = vmul.f32 %v676, %v474
        %v684 = vmul.f32 %v676, %v478
        %v685 = vmul.f32 %v676, %v482
        %v686 = vmul.f32 %v676, %v486
        %v687 = vmul.f32 %v681, %v474
        %v688 = vmul.f32 %v681, %v478
        %v689 = vmul.f32 %v681, %v482
        %v690 = vmul.f32 %v681, %v486
        %699 = vrot.lane.b32.xlu0 %v683, 109
        %v700 = vpop.permute.xlu0 %699
        %701 = vrot.lane.b32.xlu0 %v684, 109
        %v702 = vpop.permute.xlu0 %701
        %703 = vrot.lane.b32.xlu0 %v685, 109
        %v704 = vpop.permute.xlu0 %703
        %705 = vrot.lane.b32.xlu0 %v686, 109
        %v706 = vpop.permute.xlu0 %705
        %707 = vrot.lane.b32.xlu0 %v687, 109
        %v708 = vpop.permute.xlu0 %707
        %709 = vrot.lane.b32.xlu0 %v688, 109
        %v710 = vpop.permute.xlu0 %709
        %711 = vrot.lane.b32.xlu0 %v689, 109
        %v712 = vpop.permute.xlu0 %711
        %713 = vrot.lane.b32.xlu0 %v690, 109
        %v714 = vpop.permute.xlu0 %713
        %vm715 = vcmask 891904
        %v716 = vsel %vm715, %v700, %v702
        %v717 = vsel %vm715, %v702, %v704
        %v718 = vsel %vm715, %v704, %v706
        %v719 = vsel %vm715, %v708, %v710
        %v720 = vsel %vm715, %v710, %v712
        %v721 = vsel %vm715, %v712, %v714
        %v728 = vadd.f32 %v664, %v716
        %v729 = vadd.f32 %v665, %v717
        %v730 = vadd.f32 %v666, %v718
        %v731 = vadd.f32 %v667, %v719
        %v732 = vadd.f32 %v668, %v720
        %v733 = vadd.f32 %v669, %v721
        %s734 = scalar_lea.vmem %s390, 80
        %v735 = vld [vmem:[%s734] sm:$0xff]
        %v736 = vld [vmem:[%s734 + $0x8] sm:$0xff]
        %738 = vset.pattern.permute.xlu0 0
        %739 = vperm.xlu0 %738, %v735
        %v740 = vpop.permute.xlu0 %739
        %743 = vset.pattern.permute.xlu0 0
        %744 = vperm.xlu0 %743, %v736
        %v745 = vpop.permute.xlu0 %744
        %v747 = vmul.f32 %v740, %v474
        %v748 = vmul.f32 %v740, %v478
        %v749 = vmul.f32 %v740, %v482
        %v750 = vmul.f32 %v740, %v486
        %v751 = vmul.f32 %v745, %v474
        %v752 = vmul.f32 %v745, %v478
        %v753 = vmul.f32 %v745, %v482
        %v754 = vmul.f32 %v745, %v486
        %763 = vrot.lane.b32.xlu0 %v747, 108
        %v764 = vpop.permute.xlu0 %763
        %765 = vrot.lane.b32.xlu0 %v748, 108
        %v766 = vpop.permute.xlu0 %765
        %767 = vrot.lane.b32.xlu0 %v749, 108
        %v768 = vpop.permute.xlu0 %767
        %769 = vrot.lane.b32.xlu0 %v750, 108
        %v770 = vpop.permute.xlu0 %769
        %771 = vrot.lane.b32.xlu0 %v751, 108
        %v772 = vpop.permute.xlu0 %771
        %773 = vrot.lane.b32.xlu0 %v752, 108
        %v774 = vpop.permute.xlu0 %773
        %775 = vrot.lane.b32.xlu0 %v753, 108
        %v776 = vpop.permute.xlu0 %775
        %777 = vrot.lane.b32.xlu0 %v754, 108
        %v778 = vpop.permute.xlu0 %777
        %vm779 = vcmask 883712
        %v780 = vsel %vm779, %v764, %v766
        %v781 = vsel %vm779, %v766, %v768
        %v782 = vsel %vm779, %v768, %v770
        %v783 = vsel %vm779, %v772, %v774
        %v784 = vsel %vm779, %v774, %v776
        %v785 = vsel %vm779, %v776, %v778
        %v792 = vadd.f32 %v728, %v780
        %v793 = vadd.f32 %v729, %v781
        %v794 = vadd.f32 %v730, %v782
        %v795 = vadd.f32 %v731, %v783
        %v796 = vadd.f32 %v732, %v784
        %v797 = vadd.f32 %v733, %v785
        %s798 = scalar_lea.vmem %s390, 96
        %v799 = vld [vmem:[%s798] sm:$0xff]
        %v800 = vld [vmem:[%s798 + $0x8] sm:$0xff]
        %802 = vset.pattern.permute.xlu0 0
        %803 = vperm.xlu0 %802, %v799
        %v804 = vpop.permute.xlu0 %803
        %807 = vset.pattern.permute.xlu0 0
        %808 = vperm.xlu0 %807, %v800
        %v809 = vpop.permute.xlu0 %808
        %v811 = vmul.f32 %v804, %v474
        %v812 = vmul.f32 %v804, %v478
        %v813 = vmul.f32 %v804, %v482
        %v814 = vmul.f32 %v804, %v486
        %v815 = vmul.f32 %v809, %v474
        %v816 = vmul.f32 %v809, %v478
        %v817 = vmul.f32 %v809, %v482
        %v818 = vmul.f32 %v809, %v486
        %827 = vrot.lane.b32.xlu0 %v811, 92
        %v828 = vpop.permute.xlu0 %827
        %829 = vrot.lane.b32.xlu0 %v812, 92
        %v830 = vpop.permute.xlu0 %829
        %831 = vrot.lane.b32.xlu0 %v813, 92
        %v832 = vpop.permute.xlu0 %831
        %833 = vrot.lane.b32.xlu0 %v814, 92
        %v834 = vpop.permute.xlu0 %833
        %835 = vrot.lane.b32.xlu0 %v815, 92
        %v836 = vpop.permute.xlu0 %835
        %837 = vrot.lane.b32.xlu0 %v816, 92
        %v838 = vpop.permute.xlu0 %837
        %839 = vrot.lane.b32.xlu0 %v817, 92
        %v840 = vpop.permute.xlu0 %839
        %841 = vrot.lane.b32.xlu0 %v818, 92
        %v842 = vpop.permute.xlu0 %841
        %vm843 = vcmask 752640
        %v844 = vsel %vm843, %v828, %v830
        %v845 = vsel %vm843, %v830, %v832
        %v846 = vsel %vm843, %v832, %v834
        %v847 = vsel %vm843, %v836, %v838
        %v848 = vsel %vm843, %v838, %v840
        %v849 = vsel %vm843, %v840, %v842
        %v856 = vadd.f32 %v792, %v844
        %v857 = vadd.f32 %v793, %v845
        %v858 = vadd.f32 %v794, %v846
        %v859 = vadd.f32 %v795, %v847
        %v860 = vadd.f32 %v796, %v848
        %v861 = vadd.f32 %v797, %v849
        %s862 = scalar_lea.vmem %s390, 112
        %v863 = vld [vmem:[%s862] sm:$0xff]
        %v864 = vld [vmem:[%s862 + $0x8] sm:$0xff]
        %866 = vset.pattern.permute.xlu0 0
        %867 = vperm.xlu0 %866, %v863
        %v868 = vpop.permute.xlu0 %867
        %871 = vset.pattern.permute.xlu0 0
        %872 = vperm.xlu0 %871, %v864
        %v873 = vpop.permute.xlu0 %872
        %v875 = vmul.f32 %v868, %v474
        %v876 = vmul.f32 %v868, %v478
        %v877 = vmul.f32 %v868, %v482
        %v878 = vmul.f32 %v868, %v486
        %v879 = vmul.f32 %v873, %v474
        %v880 = vmul.f32 %v873, %v478
        %v881 = vmul.f32 %v873, %v482
        %v882 = vmul.f32 %v873, %v486
        %891 = vrot.lane.b32.xlu0 %v875, 91
        %v892 = vpop.permute.xlu0 %891
        %893 = vrot.lane.b32.xlu0 %v876, 91
        %v894 = vpop.permute.xlu0 %893
        %895 = vrot.lane.b32.xlu0 %v877, 91
        %v896 = vpop.permute.xlu0 %895
        %897 = vrot.lane.b32.xlu0 %v878, 91
        %v898 = vpop.permute.xlu0 %897
        %899 = vrot.lane.b32.xlu0 %v879, 91
        %v900 = vpop.permute.xlu0 %899
        %901 = vrot.lane.b32.xlu0 %v880, 91
        %v902 = vpop.permute.xlu0 %901
        %903 = vrot.lane.b32.xlu0 %v881, 91
        %v904 = vpop.permute.xlu0 %903
        %905 = vrot.lane.b32.xlu0 %v882, 91
        %v906 = vpop.permute.xlu0 %905
        %vm907 = vcmask 744448
        %v908 = vsel %vm907, %v892, %v894
        %v909 = vsel %vm907, %v894, %v896
        %v910 = vsel %vm907, %v896, %v898
        %v911 = vsel %vm907, %v900, %v902
        %v912 = vsel %vm907, %v902, %v904
        %v913 = vsel %vm907, %v904, %v906
        %v920 = vadd.f32 %v856, %v908
        %v921 = vadd.f32 %v857, %v909
        %v922 = vadd.f32 %v858, %v910
        %v923 = vadd.f32 %v859, %v911
        %v924 = vadd.f32 %v860, %v912
        %v925 = vadd.f32 %v861, %v913
        %s926 = scalar_lea.vmem %s390, 128
        %v927 = vld [vmem:[%s926] sm:$0xff]
        %v928 = vld [vmem:[%s926 + $0x8] sm:$0xff]
        %930 = vset.pattern.permute.xlu0 0
        %931 = vperm.xlu0 %930, %v927
        %v932 = vpop.permute.xlu0 %931
        %935 = vset.pattern.permute.xlu0 0
        %936 = vperm.xlu0 %935, %v928
        %v937 = vpop.permute.xlu0 %936
        %v939 = vmul.f32 %v932, %v474
        %v940 = vmul.f32 %v932, %v478
        %v941 = vmul.f32 %v932, %v482
        %v942 = vmul.f32 %v932, %v486
        %v943 = vmul.f32 %v937, %v474
        %v944 = vmul.f32 %v937, %v478
        %v945 = vmul.f32 %v937, %v482
        %v946 = vmul.f32 %v937, %v486
        %955 = vrot.lane.b32.xlu0 %v939, 90
        %v956 = vpop.permute.xlu0 %955
        %957 = vrot.lane.b32.xlu0 %v940, 90
        %v958 = vpop.permute.xlu0 %957
        %959 = vrot.lane.b32.xlu0 %v941, 90
        %v960 = vpop.permute.xlu0 %959
        %961 = vrot.lane.b32.xlu0 %v942, 90
        %v962 = vpop.permute.xlu0 %961
        %963 = vrot.lane.b32.xlu0 %v943, 90
        %v964 = vpop.permute.xlu0 %963
        %965 = vrot.lane.b32.xlu0 %v944, 90
        %v966 = vpop.permute.xlu0 %965
        %967 = vrot.lane.b32.xlu0 %v945, 90
        %v968 = vpop.permute.xlu0 %967
        %969 = vrot.lane.b32.xlu0 %v946, 90
        %v970 = vpop.permute.xlu0 %969
        %vm971 = vcmask 736256
        %v972 = vsel %vm971, %v956, %v958
        %v973 = vsel %vm971, %v958, %v960
        %v974 = vsel %vm971, %v960, %v962
        %v975 = vsel %vm971, %v964, %v966
        %v976 = vsel %vm971, %v966, %v968
        %v977 = vsel %vm971, %v968, %v970
        %v984 = vadd.f32 %v920, %v972
        %v985 = vadd.f32 %v921, %v973
        %v986 = vadd.f32 %v922, %v974
        %v987 = vadd.f32 %v923, %v975
        %v988 = vadd.f32 %v924, %v976
        %v989 = vadd.f32 %v925, %v977
        %s990 = ssub.s32 %s414, 2
        %v991 = vlaneseq
        %v992 = vand.u32 %v991, 127
        %v993 = vadd.s32 %v992, 128
        %v994 = vadd.s32 %v992, 256
        %v995 = vcvt.s32.f32 %v992
        %v996 = vcvt.s32.f32 %v993
        %v997 = vcvt.s32.f32 %v994
        %v998 = vmul.f32 %v995, 0.055555556
        %v999 = vmul.f32 %v996, 0.055555556
        %v1000 = vmul.f32 %v997, 0.055555556
        %v1001 = vadd.f32 %v998, 0.013888889
        %v1002 = vadd.f32 %v999, 0.013888889
        %v1003 = vadd.f32 %v1000, 0.013888889
        %v1004 = vfloor.f32 %v1001
        %v1005 = vfloor.f32 %v1002
        %v1006 = vfloor.f32 %v1003
        %v1007 = vmul.f32 %v1004, 18.0
        %v1008 = vmul.f32 %v1005, 18.0
        %v1009 = vmul.f32 %v1006, 18.0
        %v1010 = vsub.f32 %v995, %v1007
        %v1011 = vsub.f32 %v996, %v1008
        %v1012 = vsub.f32 %v997, %v1009
        %s1013 = scvt.s32.f32 %s990
        %v1014 = vstv %s1013
        %v1015 = vadd.f32 %v1004, %v1014
        %v1016 = vadd.f32 %v1005, %v1014
        %v1017 = vadd.f32 %v1006, %v1014
        %vm1018 = vcmp.lt.f32.partialorder %v1010, 15.5
        %vm1019 = vcmp.lt.f32.partialorder %v1011, 15.5
        %vm1020 = vcmp.lt.f32.partialorder %v1012, 15.5
        %vm1021 = vcmp.gt.f32.partialorder %v1015, -0.5
        %vm1022 = vcmp.gt.f32.partialorder %v1016, -0.5
        %vm1023 = vcmp.gt.f32.partialorder %v1017, -0.5
        %vm1024 = vmand %vm1018, %vm1021
        %vm1025 = vmand %vm1019, %vm1022
        %vm1026 = vmand %vm1020, %vm1023
        %vm1027 = vcmp.lt.f32.partialorder %v1015, 15.5
        %vm1028 = vcmp.lt.f32.partialorder %v1016, 15.5
        %vm1029 = vcmp.lt.f32.partialorder %v1017, 15.5
        %vm1030 = vmand %vm1024, %vm1027
        %vm1031 = vmand %vm1025, %vm1028
        %vm1032 = vmand %vm1026, %vm1029
        %v1033 = vld [vmem:[%s395] sm:$0xff]
        %v1034 = vld [vmem:[%s395 + $0x8] sm:$0xff]
        %1036 = vset.pattern.permute.xlu0 0
        %1037 = vperm.xlu0 %1036, %v1033
        %v1038 = vpop.permute.xlu0 %1037
        %1041 = vset.pattern.permute.xlu0 0
        %1042 = vperm.xlu0 %1041, %v1034
        %v1043 = vpop.permute.xlu0 %1042
        %v1045 = vadd.f32 %v984, %v1038
        %v1046 = vadd.f32 %v985, %v1038
        %v1047 = vadd.f32 %v986, %v1038
        %v1048 = vadd.f32 %v987, %v1043
        %v1049 = vadd.f32 %v988, %v1043
        %v1050 = vadd.f32 %v989, %v1043
        %vm1051 = vcmp.ge.f32.partialorder %v1045, 0.0
        %vm1052 = vcmp.ge.f32.partialorder %v1046, 0.0
        %vm1053 = vcmp.ge.f32.partialorder %v1047, 0.0
        %vm1054 = vcmp.ge.f32.partialorder %v1048, 0.0
        %vm1055 = vcmp.ge.f32.partialorder %v1049, 0.0
        %vm1056 = vcmp.ge.f32.partialorder %v1050, 0.0
        %v1057 = vmul.f32 %v1045, 0.2
        %v1058 = vmul.f32 %v1046, 0.2
        %v1059 = vmul.f32 %v1047, 0.2
        %v1060 = vmul.f32 %v1048, 0.2
        %v1061 = vmul.f32 %v1049, 0.2
        %v1062 = vmul.f32 %v1050, 0.2
        %v1063 = vsel %vm1051, %v1045, %v1057
        %v1064 = vsel %vm1052, %v1046, %v1058
        %v1065 = vsel %vm1053, %v1047, %v1059
        %v1066 = vsel %vm1054, %v1048, %v1060
        %v1067 = vsel %vm1055, %v1049, %v1061
        %v1068 = vsel %vm1056, %v1050, %v1062
        %v1069 = vsel %vm1030, 1, 0
        %v1070 = vsel %vm1031, 1, 0
        %v1071 = vsel %vm1032, 1, 0
        %vm1072 = vcmp.eq.s32.totalorder %v1069, 1
        %vm1073 = vcmp.eq.s32.totalorder %v1070, 1
        %vm1074 = vcmp.eq.s32.totalorder %v1071, 1
        %v1075 = vsel %vm1072, %v1063, 0.0
        %v1076 = vsel %vm1073, %v1064, 0.0
        %v1077 = vsel %vm1074, %v1065, 0.0
        %v1078 = vsel %vm1072, %v1066, 0.0
        %v1079 = vsel %vm1073, %v1067, 0.0
        %v1080 = vsel %vm1074, %v1068, 0.0
        %1081 = vst [vmem:[#allocation2] sm:$0xff] 0
        %1082 = vst [vmem:[#allocation2 + $0x20] sm:$0xff] 0
        %v1083 = vpack.c.bf16 %v1078, %v1075
        %v1084 = vpack.c.bf16 %v1079, %v1076
        %v1085 = vpack.c.bf16 %v1080, %v1077
        %1086 = vst [vmem:[#allocation2 + $0x8] sm:$0xff] %v1083
        %1087 = vst [vmem:[#allocation2 + $0x10] sm:$0xff] %v1084
        %1088 = vst [vmem:[#allocation2 + $0x18] sm:$0xff] %v1085
        %v1089 = vld [vmem:[%s400] sm:$0xf]
        %v1090 = vld [vmem:[%s400 + $0x4] sm:$0xf]
        %v1091 = vld [vmem:[#allocation2] sm:$0xff]
        %v1092 = vld [vmem:[#allocation2 + $0x8] sm:$0xff]
        %v1093 = vld [vmem:[#allocation2 + $0x10] sm:$0xff]
        %v1094 = vld [vmem:[#allocation2 + $0x18] sm:$0xff]
        %s1095 = scalar_lea.vmem %s400, 8
        %v1096 = vld [vmem:[%s1095] sm:$0xf]
        %v1097 = vld [vmem:[%s1095 + $0x4] sm:$0xf]
        %v1100 = vunpack.c.l.b16 %v1096
        %v1101 = vunpack.c.l.b16 %v1097
        %v1102 = vpack.c.b16 %v1101, %v1100
        %vm1103 = vcmask 130048
        %v1105 = vsel %vm1103, %v1102, 0
        %1107 = vmatprep.subr.bf16.mxu0 %v1093
        %1108 = vmatpush1.bf16.msra.mxu0 %v1092
        %1109 = vmatprep.subr.bf16.mxu0 0
        %1110 = vmatpush1.bf16.msra.mxu0 0
        %1111 = vmatprep.subr.bf16.mxu0 0
        %1112 = vmatpush1.bf16.msra.mxu0 0
        %1113 = vmatprep.subr.bf16.mxu0 0
        %1114 = vmatpush1.bf16.msra.mxu0 0
        %1115 = vmatprep.subr.bf16.mxu0 0
        %1116 = vmatpush1.bf16.msra.mxu0 0
        %1117 = vmatprep.subr.bf16.mxu0 0
        %1118 = vmatpush1.bf16.msra.mxu0 0
        %1119 = vmatprep.subr.bf16.mxu0 0
        %1120 = vmatpush1.bf16.msra.mxu0 0
        %1121 = vmatprep.subr.bf16.mxu0 0
        %1122 = vmatpush1.bf16.msra.mxu0 0
        %1123 = vmatprep.subr.bf16.mxu0 0
        %1124 = vmatpush1.bf16.msra.mxu0 0
        %1125 = vmatprep.subr.bf16.mxu0 0
        %1126 = vmatpush1.bf16.msra.mxu0 0
        %1127 = vmatprep.subr.bf16.mxu0 0
        %1128 = vmatpush1.bf16.msra.mxu0 0
        %1129 = vmatprep.subr.bf16.mxu0 0
        %1130 = vmatpush1.bf16.msra.mxu0 0
        %1131 = vmatprep.subr.bf16.mxu0 0
        %1132 = vmatpush1.bf16.msra.mxu0 0
        %1133 = vmatprep.subr.bf16.mxu0 0
        %1134 = vmatpush1.bf16.msra.mxu0 0
        %1135 = vmatprep.subr.bf16.mxu0 0
        %1136 = vmatpush1.bf16.msra.mxu0 0
        %1137 = vmatprep.subr.bf16.mxu0 0
        %1138 = vmatpush1.bf16.msra.mxu0 0
        %1139 = vmatprep.mubr.bf16.mxu0 0
        %1140 = vmatmul.mubr.bf16.gmra.mrb[0].mxu0 %v1105
        %v1141 = vpop.f32.mrb[0].mxu0
        %v1142 = vadd.f32 0.0, %v1141
        %v1143 = vpop.f32.mrb[0].mxu0
        %v1144 = vadd.f32 0.0, %v1143
        %v1145 = vpop.f32.mrb[0].mxu0
        %v1146 = vadd.f32 0.0, %v1145
        %v1147 = vpop.f32.mrb[0].mxu0
        %v1148 = vadd.f32 0.0, %v1147
        %1149 = vdwg.mxu0
        %1150 = vmatprep.subr.bf16.mxu0 0
        %1151 = vmatpush1.bf16.msra.mxu0 %v1094
        %1152 = vmatprep.subr.bf16.mxu0 0
        %1153 = vmatpush1.bf16.msra.mxu0 0
        %1154 = vmatprep.subr.bf16.mxu0 0
        %1155 = vmatpush1.bf16.msra.mxu0 0
        %1156 = vmatprep.subr.bf16.mxu0 0
        %1157 = vmatpush1.bf16.msra.mxu0 0
        %1158 = vmatprep.subr.bf16.mxu0 0
        %1159 = vmatpush1.bf16.msra.mxu0 0
        %1160 = vmatprep.subr.bf16.mxu0 0
        %1161 = vmatpush1.bf16.msra.mxu0 0
        %1162 = vmatprep.subr.bf16.mxu0 0
        %1163 = vmatpush1.bf16.msra.mxu0 0
        %1164 = vmatprep.subr.bf16.mxu0 0
        %1165 = vmatpush1.bf16.msra.mxu0 0
        %1166 = vmatprep.subr.bf16.mxu0 0
        %1167 = vmatpush1.bf16.msra.mxu0 0
        %1168 = vmatprep.subr.bf16.mxu0 0
        %1169 = vmatpush1.bf16.msra.mxu0 0
        %1170 = vmatprep.subr.bf16.mxu0 0
        %1171 = vmatpush1.bf16.msra.mxu0 0
        %1172 = vmatprep.subr.bf16.mxu0 0
        %1173 = vmatpush1.bf16.msra.mxu0 0
        %1174 = vmatprep.subr.bf16.mxu0 0
        %1175 = vmatpush1.bf16.msra.mxu0 0
        %1176 = vmatprep.subr.bf16.mxu0 0
        %1177 = vmatpush1.bf16.msra.mxu0 0
        %1178 = vmatprep.subr.bf16.mxu0 0
        %1179 = vmatpush1.bf16.msra.mxu0 0
        %1180 = vmatprep.subr.bf16.mxu0 0
        %1181 = vmatpush1.bf16.msra.mxu0 0
        %1182 = vmatprep.mubr.bf16.mxu0 0
        %1183 = vmatmul.mubr.bf16.gmra.mrb[0].mxu0 %v1105
        %v1184 = vpop.f32.mrb[0].mxu0
        %v1185 = vadd.f32 0.0, %v1184
        %v1186 = vpop.f32.mrb[0].mxu0
        %v1187 = vpop.f32.mrb[0].mxu0
        %v1188 = vadd.f32 0.0, %v1187
        %v1189 = vpop.f32.mrb[0].mxu0
        %1190 = vdwg.mxu0
        %v1193 = vunpack.c.l.b16 %v1089
        %v1194 = vunpack.c.l.b16 %v1090
        %v1195 = vpack.c.b16 %v1194, %v1193
        %1200 = vrot.lane.b32.xlu0 %v1091, 1
        %v1201 = vpop.permute.xlu0 %1200
        %1202 = vrot.lane.b32.xlu0 %v1092, 1
        %v1203 = vpop.permute.xlu0 %1202
        %1204 = vrot.lane.b32.xlu0 %v1093, 1
        %v1205 = vpop.permute.xlu0 %1204
        %1206 = vrot.lane.b32.xlu0 %v1094, 1
        %v1207 = vpop.permute.xlu0 %1206
        %vm1208 = vcmask 7168
        %v1209 = vsel %vm1208, %v1201, %v1203
        %v1210 = vsel %vm1208, %v1203, %v1205
        %v1211 = vsel %vm1208, %v1205, %v1207
        %v1216 = vsel %vm1103, %v1195, 0
        %1218 = vmatprep.subr.bf16.mxu0 %v1210
        %1219 = vmatpush1.bf16.msra.mxu0 %v1209
        %1220 = vmatprep.subr.bf16.mxu0 0
        %1221 = vmatpush1.bf16.msra.mxu0 0
        %1222 = vmatprep.subr.bf16.mxu0 0
        %1223 = vmatpush1.bf16.msra.mxu0 0
        %1224 = vmatprep.subr.bf16.mxu0 0
        %1225 = vmatpush1.bf16.msra.mxu0 0
        %1226 = vmatprep.subr.bf16.mxu0 0
        %1227 = vmatpush1.bf16.msra.mxu0 0
        %1228 = vmatprep.subr.bf16.mxu0 0
        %1229 = vmatpush1.bf16.msra.mxu0 0
        %1230 = vmatprep.subr.bf16.mxu0 0
        %1231 = vmatpush1.bf16.msra.mxu0 0
        %1232 = vmatprep.subr.bf16.mxu0 0
        %1233 = vmatpush1.bf16.msra.mxu0 0
        %1234 = vmatprep.subr.bf16.mxu0 0
        %1235 = vmatpush1.bf16.msra.mxu0 0
        %1236 = vmatprep.subr.bf16.mxu0 0
        %1237 = vmatpush1.bf16.msra.mxu0 0
        %1238 = vmatprep.subr.bf16.mxu0 0
        %1239 = vmatpush1.bf16.msra.mxu0 0
        %1240 = vmatprep.subr.bf16.mxu0 0
        %1241 = vmatpush1.bf16.msra.mxu0 0
        %1242 = vmatprep.subr.bf16.mxu0 0
        %1243 = vmatpush1.bf16.msra.mxu0 0
        %1244 = vmatprep.subr.bf16.mxu0 0
        %1245 = vmatpush1.bf16.msra.mxu0 0
        %1246 = vmatprep.subr.bf16.mxu0 0
        %1247 = vmatpush1.bf16.msra.mxu0 0
        %1248 = vmatprep.subr.bf16.mxu0 0
        %1249 = vmatpush1.bf16.msra.mxu0 0
        %1250 = vmatprep.mubr.bf16.mxu0 0
        %1251 = vmatmul.mubr.bf16.gmra.mrb[0].mxu0 %v1216
        %v1252 = vpop.f32.mrb[0].mxu0
        %v1253 = vadd.f32 %v1142, %v1252
        %v1254 = vpop.f32.mrb[0].mxu0
        %v1255 = vadd.f32 %v1144, %v1254
        %v1256 = vpop.f32.mrb[0].mxu0
        %v1257 = vadd.f32 %v1146, %v1256
        %v1258 = vpop.f32.mrb[0].mxu0
        %v1259 = vadd.f32 %v1148, %v1258
        %1260 = vdwg.mxu0
        %1261 = vmatprep.subr.bf16.mxu0 0
        %1262 = vmatpush1.bf16.msra.mxu0 %v1211
        %1263 = vmatprep.subr.bf16.mxu0 0
        %1264 = vmatpush1.bf16.msra.mxu0 0
        %1265 = vmatprep.subr.bf16.mxu0 0
        %1266 = vmatpush1.bf16.msra.mxu0 0
        %1267 = vmatprep.subr.bf16.mxu0 0
        %1268 = vmatpush1.bf16.msra.mxu0 0
        %1269 = vmatprep.subr.bf16.mxu0 0
        %1270 = vmatpush1.bf16.msra.mxu0 0
        %1271 = vmatprep.subr.bf16.mxu0 0
        %1272 = vmatpush1.bf16.msra.mxu0 0
        %1273 = vmatprep.subr.bf16.mxu0 0
        %1274 = vmatpush1.bf16.msra.mxu0 0
        %1275 = vmatprep.subr.bf16.mxu0 0
        %1276 = vmatpush1.bf16.msra.mxu0 0
        %1277 = vmatprep.subr.bf16.mxu0 0
        %1278 = vmatpush1.bf16.msra.mxu0 0
        %1279 = vmatprep.subr.bf16.mxu0 0
        %1280 = vmatpush1.bf16.msra.mxu0 0
        %1281 = vmatprep.subr.bf16.mxu0 0
        %1282 = vmatpush1.bf16.msra.mxu0 0
        %1283 = vmatprep.subr.bf16.mxu0 0
        %1284 = vmatpush1.bf16.msra.mxu0 0
        %1285 = vmatprep.subr.bf16.mxu0 0
        %1286 = vmatpush1.bf16.msra.mxu0 0
        %1287 = vmatprep.subr.bf16.mxu0 0
        %1288 = vmatpush1.bf16.msra.mxu0 0
        %1289 = vmatprep.subr.bf16.mxu0 0
        %1290 = vmatpush1.bf16.msra.mxu0 0
        %1291 = vmatprep.subr.bf16.mxu0 0
        %1292 = vmatpush1.bf16.msra.mxu0 0
        %1293 = vmatprep.mubr.bf16.mxu0 0
        %1294 = vmatmul.mubr.bf16.gmra.mrb[0].mxu0 %v1216
        %v1295 = vpop.f32.mrb[0].mxu0
        %v1296 = vadd.f32 %v1185, %v1295
        %v1297 = vpop.f32.mrb[0].mxu0
        %v1298 = vpop.f32.mrb[0].mxu0
        %v1299 = vadd.f32 %v1188, %v1298
        %v1300 = vpop.f32.mrb[0].mxu0
        %1301 = vdwg.mxu0
        %s1302 = scalar_lea.vmem %s400, 16
        %v1303 = vld [vmem:[%s1302] sm:$0xf]
        %v1304 = vld [vmem:[%s1302 + $0x4] sm:$0xf]
        %v1305 = vld [vmem:[#allocation2 + $0x8] sm:$0xff]
        %v1306 = vld [vmem:[#allocation2 + $0x10] sm:$0xff]
        %v1307 = vld [vmem:[#allocation2 + $0x18] sm:$0xff]
        %v1308 = vld [vmem:[#allocation2 + $0x20] sm:$0xff]
        %v1311 = vunpack.c.l.b16 %v1303
        %v1312 = vunpack.c.l.b16 %v1304
        %v1313 = vpack.c.b16 %v1312, %v1311
        %1318 = vrot.lane.b32.xlu0 %v1305, 127
        %v1319 = vpop.permute.xlu0 %1318
        %1320 = vrot.lane.b32.xlu0 %v1306, 127
        %v1321 = vpop.permute.xlu0 %1320
        %1322 = vrot.lane.b32.xlu0 %v1307, 127
        %v1323 = vpop.permute.xlu0 %1322
        %1324 = vrot.lane.b32.xlu0 %v1308, 127
        %v1325 = vpop.permute.xlu0 %1324
        %vm1326 = vcmask 1039360
        %v1327 = vsel %vm1326, %v1319, %v1321
        %v1328 = vsel %vm1326, %v1321, %v1323
        %v1329 = vsel %vm1326, %v1323, %v1325
        %v1334 = vsel %vm1103, %v1313, 0
        %1336 = vmatprep.subr.bf16.mxu0 %v1328
        %1337 = vmatpush1.bf16.msra.mxu0 %v1327
        %1338 = vmatprep.subr.bf16.mxu0 0
        %1339 = vmatpush1.bf16.msra.mxu0 0
        %1340 = vmatprep.subr.bf16.mxu0 0
        %1341 = vmatpush1.bf16.msra.mxu0 0
        %1342 = vmatprep.subr.bf16.mxu0 0
        %1343 = vmatpush1.bf16.msra.mxu0 0
        %1344 = vmatprep.subr.bf16.mxu0 0
        %1345 = vmatpush1.bf16.msra.mxu0 0
        %1346 = vmatprep.subr.bf16.mxu0 0
        %1347 = vmatpush1.bf16.msra.mxu0 0
        %1348 = vmatprep.subr.bf16.mxu0 0
        %1349 = vmatpush1.bf16.msra.mxu0 0
        %1350 = vmatprep.subr.bf16.mxu0 0
        %1351 = vmatpush1.bf16.msra.mxu0 0
        %1352 = vmatprep.subr.bf16.mxu0 0
        %1353 = vmatpush1.bf16.msra.mxu0 0
        %1354 = vmatprep.subr.bf16.mxu0 0
        %1355 = vmatpush1.bf16.msra.mxu0 0
        %1356 = vmatprep.subr.bf16.mxu0 0
        %1357 = vmatpush1.bf16.msra.mxu0 0
        %1358 = vmatprep.subr.bf16.mxu0 0
        %1359 = vmatpush1.bf16.msra.mxu0 0
        %1360 = vmatprep.subr.bf16.mxu0 0
        %1361 = vmatpush1.bf16.msra.mxu0 0
        %1362 = vmatprep.subr.bf16.mxu0 0
        %1363 = vmatpush1.bf16.msra.mxu0 0
        %1364 = vmatprep.subr.bf16.mxu0 0
        %1365 = vmatpush1.bf16.msra.mxu0 0
        %1366 = vmatprep.subr.bf16.mxu0 0
        %1367 = vmatpush1.bf16.msra.mxu0 0
        %1368 = vmatprep.mubr.bf16.mxu0 0
        %1369 = vmatmul.mubr.bf16.gmra.mrb[0].mxu0 %v1334
        %v1370 = vpop.f32.mrb[0].mxu0
        %v1371 = vadd.f32 0.0, %v1370
        %v1372 = vpop.f32.mrb[0].mxu0
        %v1373 = vadd.f32 0.0, %v1372
        %v1374 = vpop.f32.mrb[0].mxu0
        %v1375 = vadd.f32 0.0, %v1374
        %v1376 = vpop.f32.mrb[0].mxu0
        %v1377 = vadd.f32 0.0, %v1376
        %1378 = vdwg.mxu0
        %1379 = vmatprep.subr.bf16.mxu0 0
        %1380 = vmatpush1.bf16.msra.mxu0 %v1329
        %1381 = vmatprep.subr.bf16.mxu0 0
        %1382 = vmatpush1.bf16.msra.mxu0 0
        %1383 = vmatprep.subr.bf16.mxu0 0
        %1384 = vmatpush1.bf16.msra.mxu0 0
        %1385 = vmatprep.subr.bf16.mxu0 0
        %1386 = vmatpush1.bf16.msra.mxu0 0
        %1387 = vmatprep.subr.bf16.mxu0 0
        %1388 = vmatpush1.bf16.msra.mxu0 0
        %1389 = vmatprep.subr.bf16.mxu0 0
        %1390 = vmatpush1.bf16.msra.mxu0 0
        %1391 = vmatprep.subr.bf16.mxu0 0
        %1392 = vmatpush1.bf16.msra.mxu0 0
        %1393 = vmatprep.subr.bf16.mxu0 0
        %1394 = vmatpush1.bf16.msra.mxu0 0
        %1395 = vmatprep.subr.bf16.mxu0 0
        %1396 = vmatpush1.bf16.msra.mxu0 0
        %1397 = vmatprep.subr.bf16.mxu0 0
        %1398 = vmatpush1.bf16.msra.mxu0 0
        %1399 = vmatprep.subr.bf16.mxu0 0
        %1400 = vmatpush1.bf16.msra.mxu0 0
        %1401 = vmatprep.subr.bf16.mxu0 0
        %1402 = vmatpush1.bf16.msra.mxu0 0
        %1403 = vmatprep.subr.bf16.mxu0 0
        %1404 = vmatpush1.bf16.msra.mxu0 0
        %1405 = vmatprep.subr.bf16.mxu0 0
        %1406 = vmatpush1.bf16.msra.mxu0 0
        %1407 = vmatprep.subr.bf16.mxu0 0
        %1408 = vmatpush1.bf16.msra.mxu0 0
        %1409 = vmatprep.subr.bf16.mxu0 0
        %1410 = vmatpush1.bf16.msra.mxu0 0
        %1411 = vmatprep.mubr.bf16.mxu0 0
        %1412 = vmatmul.mubr.bf16.gmra.mrb[0].mxu0 %v1334
        %v1413 = vpop.f32.mrb[0].mxu0
        %v1414 = vadd.f32 0.0, %v1413
        %v1415 = vpop.f32.mrb[0].mxu0
        %v1416 = vpop.f32.mrb[0].mxu0
        %v1417 = vadd.f32 0.0, %v1416
        %v1418 = vpop.f32.mrb[0].mxu0
        %1419 = vdwg.mxu0
        %v1420 = vadd.f32 %v1253, %v1371
        %v1421 = vadd.f32 %v1255, %v1373
        %v1422 = vadd.f32 %v1296, %v1414
        %v1423 = vadd.f32 %v1257, %v1375
        %v1424 = vadd.f32 %v1259, %v1377
        %v1425 = vadd.f32 %v1299, %v1417
        %s1426 = scalar_lea.vmem %s400, 24
        %v1427 = vld [vmem:[%s1426] sm:$0xf]
        %v1428 = vld [vmem:[%s1426 + $0x4] sm:$0xf]
        %v1431 = vunpack.c.l.b16 %v1427
        %v1432 = vunpack.c.l.b16 %v1428
        %v1433 = vpack.c.b16 %v1432, %v1431
        %1434 = vrot.lane.b32.xlu0 %v1305, 111
        %v1435 = vpop.permute.xlu0 %1434
        %1436 = vrot.lane.b32.xlu0 %v1306, 111
        %v1437 = vpop.permute.xlu0 %1436
        %1438 = vrot.lane.b32.xlu0 %v1307, 111
        %v1439 = vpop.permute.xlu0 %1438
        %1440 = vrot.lane.b32.xlu0 %v1308, 111
        %v1441 = vpop.permute.xlu0 %1440
        %vm1442 = vcmask 908288
        %v1443 = vsel %vm1442, %v1435, %v1437
        %v1444 = vsel %vm1442, %v1437, %v1439
        %v1445 = vsel %vm1442, %v1439, %v1441
        %v1450 = vsel %vm1103, %v1433, 0
        %1452 = vmatprep.subr.bf16.mxu0 %v1444
        %1453 = vmatpush1.bf16.msra.mxu0 %v1443
        %1454 = vmatprep.subr.bf16.mxu0 0
        %1455 = vmatpush1.bf16.msra.mxu0 0
        %1456 = vmatprep.subr.bf16.mxu0 0
        %1457 = vmatpush1.bf16.msra.mxu0 0
        %1458 = vmatprep.subr.bf16.mxu0 0
        %1459 = vmatpush1.bf16.msra.mxu0 0
        %1460 = vmatprep.subr.bf16.mxu0 0
        %1461 = vmatpush1.bf16.msra.mxu0 0
        %1462 = vmatprep.subr.bf16.mxu0 0
        %1463 = vmatpush1.bf16.msra.mxu0 0
        %1464 = vmatprep.subr.bf16.mxu0 0
        %1465 = vmatpush1.bf16.msra.mxu0 0
        %1466 = vmatprep.subr.bf16.mxu0 0
        %1467 = vmatpush1.bf16.msra.mxu0 0
        %1468 = vmatprep.subr.bf16.mxu0 0
        %1469 = vmatpush1.bf16.msra.mxu0 0
        %1470 = vmatprep.subr.bf16.mxu0 0
        %1471 = vmatpush1.bf16.msra.mxu0 0
        %1472 = vmatprep.subr.bf16.mxu0 0
        %1473 = vmatpush1.bf16.msra.mxu0 0
        %1474 = vmatprep.subr.bf16.mxu0 0
        %1475 = vmatpush1.bf16.msra.mxu0 0
        %1476 = vmatprep.subr.bf16.mxu0 0
        %1477 = vmatpush1.bf16.msra.mxu0 0
        %1478 = vmatprep.subr.bf16.mxu0 0
        %1479 = vmatpush1.bf16.msra.mxu0 0
        %1480 = vmatprep.subr.bf16.mxu0 0
        %1481 = vmatpush1.bf16.msra.mxu0 0
        %1482 = vmatprep.subr.bf16.mxu0 0
        %1483 = vmatpush1.bf16.msra.mxu0 0
        %1484 = vmatprep.mubr.bf16.mxu0 0
        %1485 = vmatmul.mubr.bf16.gmra.mrb[0].mxu0 %v1450
        %v1486 = vpop.f32.mrb[0].mxu0
        %v1487 = vadd.f32 0.0, %v1486
        %v1488 = vpop.f32.mrb[0].mxu0
        %v1489 = vadd.f32 0.0, %v1488
        %v1490 = vpop.f32.mrb[0].mxu0
        %v1491 = vadd.f32 0.0, %v1490
        %v1492 = vpop.f32.mrb[0].mxu0
        %v1493 = vadd.f32 0.0, %v1492
        %1494 = vdwg.mxu0
        %1495 = vmatprep.subr.bf16.mxu0 0
        %1496 = vmatpush1.bf16.msra.mxu0 %v1445
        %1497 = vmatprep.subr.bf16.mxu0 0
        %1498 = vmatpush1.bf16.msra.mxu0 0
        %1499 = vmatprep.subr.bf16.mxu0 0
        %1500 = vmatpush1.bf16.msra.mxu0 0
        %1501 = vmatprep.subr.bf16.mxu0 0
        %1502 = vmatpush1.bf16.msra.mxu0 0
        %1503 = vmatprep.subr.bf16.mxu0 0
        %1504 = vmatpush1.bf16.msra.mxu0 0
        %1505 = vmatprep.subr.bf16.mxu0 0
        %1506 = vmatpush1.bf16.msra.mxu0 0
        %1507 = vmatprep.subr.bf16.mxu0 0
        %1508 = vmatpush1.bf16.msra.mxu0 0
        %1509 = vmatprep.subr.bf16.mxu0 0
        %1510 = vmatpush1.bf16.msra.mxu0 0
        %1511 = vmatprep.subr.bf16.mxu0 0
        %1512 = vmatpush1.bf16.msra.mxu0 0
        %1513 = vmatprep.subr.bf16.mxu0 0
        %1514 = vmatpush1.bf16.msra.mxu0 0
        %1515 = vmatprep.subr.bf16.mxu0 0
        %1516 = vmatpush1.bf16.msra.mxu0 0
        %1517 = vmatprep.subr.bf16.mxu0 0
        %1518 = vmatpush1.bf16.msra.mxu0 0
        %1519 = vmatprep.subr.bf16.mxu0 0
        %1520 = vmatpush1.bf16.msra.mxu0 0
        %1521 = vmatprep.subr.bf16.mxu0 0
        %1522 = vmatpush1.bf16.msra.mxu0 0
        %1523 = vmatprep.subr.bf16.mxu0 0
        %1524 = vmatpush1.bf16.msra.mxu0 0
        %1525 = vmatprep.subr.bf16.mxu0 0
        %1526 = vmatpush1.bf16.msra.mxu0 0
        %1527 = vmatprep.mubr.bf16.mxu0 0
        %1528 = vmatmul.mubr.bf16.gmra.mrb[0].mxu0 %v1450
        %v1529 = vpop.f32.mrb[0].mxu0
        %v1530 = vadd.f32 0.0, %v1529
        %v1531 = vpop.f32.mrb[0].mxu0
        %v1532 = vpop.f32.mrb[0].mxu0
        %v1533 = vadd.f32 0.0, %v1532
        %v1534 = vpop.f32.mrb[0].mxu0
        %1535 = vdwg.mxu0
        %v1536 = vadd.f32 %v1420, %v1487
        %v1537 = vadd.f32 %v1421, %v1489
        %v1538 = vadd.f32 %v1422, %v1530
        %v1539 = vadd.f32 %v1423, %v1491
        %v1540 = vadd.f32 %v1424, %v1493
        %v1541 = vadd.f32 %v1425, %v1533
        %s1542 = scalar_lea.vmem %s400, 32
        %v1543 = vld [vmem:[%s1542] sm:$0xf]
        %v1544 = vld [vmem:[%s1542 + $0x4] sm:$0xf]
        %v1547 = vunpack.c.l.b16 %v1543
        %v1548 = vunpack.c.l.b16 %v1544
        %v1549 = vpack.c.b16 %v1548, %v1547
        %1550 = vrot.lane.b32.xlu0 %v1305, 110
        %v1551 = vpop.permute.xlu0 %1550
        %1552 = vrot.lane.b32.xlu0 %v1306, 110
        %v1553 = vpop.permute.xlu0 %1552
        %1554 = vrot.lane.b32.xlu0 %v1307, 110
        %v1555 = vpop.permute.xlu0 %1554
        %1556 = vrot.lane.b32.xlu0 %v1308, 110
        %v1557 = vpop.permute.xlu0 %1556
        %vm1558 = vcmask 900096
        %v1559 = vsel %vm1558, %v1551, %v1553
        %v1560 = vsel %vm1558, %v1553, %v1555
        %v1561 = vsel %vm1558, %v1555, %v1557
        %v1566 = vsel %vm1103, %v1549, 0
        %1568 = vmatprep.subr.bf16.mxu0 %v1560
        %1569 = vmatpush1.bf16.msra.mxu0 %v1559
        %1570 = vmatprep.subr.bf16.mxu0 0
        %1571 = vmatpush1.bf16.msra.mxu0 0
        %1572 = vmatprep.subr.bf16.mxu0 0
        %1573 = vmatpush1.bf16.msra.mxu0 0
        %1574 = vmatprep.subr.bf16.mxu0 0
        %1575 = vmatpush1.bf16.msra.mxu0 0
        %1576 = vmatprep.subr.bf16.mxu0 0
        %1577 = vmatpush1.bf16.msra.mxu0 0
        %1578 = vmatprep.subr.bf16.mxu0 0
        %1579 = vmatpush1.bf16.msra.mxu0 0
        %1580 = vmatprep.subr.bf16.mxu0 0
        %1581 = vmatpush1.bf16.msra.mxu0 0
        %1582 = vmatprep.subr.bf16.mxu0 0
        %1583 = vmatpush1.bf16.msra.mxu0 0
        %1584 = vmatprep.subr.bf16.mxu0 0
        %1585 = vmatpush1.bf16.msra.mxu0 0
        %1586 = vmatprep.subr.bf16.mxu0 0
        %1587 = vmatpush1.bf16.msra.mxu0 0
        %1588 = vmatprep.subr.bf16.mxu0 0
        %1589 = vmatpush1.bf16.msra.mxu0 0
        %1590 = vmatprep.subr.bf16.mxu0 0
        %1591 = vmatpush1.bf16.msra.mxu0 0
        %1592 = vmatprep.subr.bf16.mxu0 0
        %1593 = vmatpush1.bf16.msra.mxu0 0
        %1594 = vmatprep.subr.bf16.mxu0 0
        %1595 = vmatpush1.bf16.msra.mxu0 0
        %1596 = vmatprep.subr.bf16.mxu0 0
        %1597 = vmatpush1.bf16.msra.mxu0 0
        %1598 = vmatprep.subr.bf16.mxu0 0
        %1599 = vmatpush1.bf16.msra.mxu0 0
        %1600 = vmatprep.mubr.bf16.mxu0 0
        %1601 = vmatmul.mubr.bf16.gmra.mrb[0].mxu0 %v1566
        %v1602 = vpop.f32.mrb[0].mxu0
        %v1603 = vadd.f32 0.0, %v1602
        %v1604 = vpop.f32.mrb[0].mxu0
        %v1605 = vadd.f32 0.0, %v1604
        %v1606 = vpop.f32.mrb[0].mxu0
        %v1607 = vadd.f32 0.0, %v1606
        %v1608 = vpop.f32.mrb[0].mxu0
        %v1609 = vadd.f32 0.0, %v1608
        %1610 = vdwg.mxu0
        %1611 = vmatprep.subr.bf16.mxu0 0
        %1612 = vmatpush1.bf16.msra.mxu0 %v1561
        %1613 = vmatprep.subr.bf16.mxu0 0
        %1614 = vmatpush1.bf16.msra.mxu0 0
        %1615 = vmatprep.subr.bf16.mxu0 0
        %1616 = vmatpush1.bf16.msra.mxu0 0
        %1617 = vmatprep.subr.bf16.mxu0 0
        %1618 = vmatpush1.bf16.msra.mxu0 0
        %1619 = vmatprep.subr.bf16.mxu0 0
        %1620 = vmatpush1.bf16.msra.mxu0 0
        %1621 = vmatprep.subr.bf16.mxu0 0
        %1622 = vmatpush1.bf16.msra.mxu0 0
        %1623 = vmatprep.subr.bf16.mxu0 0
        %1624 = vmatpush1.bf16.msra.mxu0 0
        %1625 = vmatprep.subr.bf16.mxu0 0
        %1626 = vmatpush1.bf16.msra.mxu0 0
        %1627 = vmatprep.subr.bf16.mxu0 0
        %1628 = vmatpush1.bf16.msra.mxu0 0
        %1629 = vmatprep.subr.bf16.mxu0 0
        %1630 = vmatpush1.bf16.msra.mxu0 0
        %1631 = vmatprep.subr.bf16.mxu0 0
        %1632 = vmatpush1.bf16.msra.mxu0 0
        %1633 = vmatprep.subr.bf16.mxu0 0
        %1634 = vmatpush1.bf16.msra.mxu0 0
        %1635 = vmatprep.subr.bf16.mxu0 0
        %1636 = vmatpush1.bf16.msra.mxu0 0
        %1637 = vmatprep.subr.bf16.mxu0 0
        %1638 = vmatpush1.bf16.msra.mxu0 0
        %1639 = vmatprep.subr.bf16.mxu0 0
        %1640 = vmatpush1.bf16.msra.mxu0 0
        %1641 = vmatprep.subr.bf16.mxu0 0
        %1642 = vmatpush1.bf16.msra.mxu0 0
        %1643 = vmatprep.mubr.bf16.mxu0 0
        %1644 = vmatmul.mubr.bf16.gmra.mrb[0].mxu0 %v1566
        %v1645 = vpop.f32.mrb[0].mxu0
        %v1646 = vadd.f32 0.0, %v1645
        %v1647 = vpop.f32.mrb[0].mxu0
        %v1648 = vpop.f32.mrb[0].mxu0
        %v1649 = vadd.f32 0.0, %v1648
        %v1650 = vpop.f32.mrb[0].mxu0
        %1651 = vdwg.mxu0
        %v1652 = vadd.f32 %v1536, %v1603
        %v1653 = vadd.f32 %v1537, %v1605
        %v1654 = vadd.f32 %v1538, %v1646
        %v1655 = vadd.f32 %v1539, %v1607
        %v1656 = vadd.f32 %v1540, %v1609
        %v1657 = vadd.f32 %v1541, %v1649
        %s1658 = scalar_lea.vmem %s400, 40
        %v1659 = vld [vmem:[%s1658] sm:$0xf]
        %v1660 = vld [vmem:[%s1658 + $0x4] sm:$0xf]
        %v1663 = vunpack.c.l.b16 %v1659
        %v1664 = vunpack.c.l.b16 %v1660
        %v1665 = vpack.c.b16 %v1664, %v1663
        %1666 = vrot.lane.b32.xlu0 %v1305, 109
        %v1667 = vpop.permute.xlu0 %1666
        %1668 = vrot.lane.b32.xlu0 %v1306, 109
        %v1669 = vpop.permute.xlu0 %1668
        %1670 = vrot.lane.b32.xlu0 %v1307, 109
        %v1671 = vpop.permute.xlu0 %1670
        %1672 = vrot.lane.b32.xlu0 %v1308, 109
        %v1673 = vpop.permute.xlu0 %1672
        %vm1674 = vcmask 891904
        %v1675 = vsel %vm1674, %v1667, %v1669
        %v1676 = vsel %vm1674, %v1669, %v1671
        %v1677 = vsel %vm1674, %v1671, %v1673
        %v1682 = vsel %vm1103, %v1665, 0
        %1684 = vmatprep.subr.bf16.mxu0 %v1676
        %1685 = vmatpush1.bf16.msra.mxu0 %v1675
        %1686 = vmatprep.subr.bf16.mxu0 0
        %1687 = vmatpush1.bf16.msra.mxu0 0
        %1688 = vmatprep.subr.bf16.mxu0 0
        %1689 = vmatpush1.bf16.msra.mxu0 0
        %1690 = vmatprep.subr.bf16.mxu0 0
        %1691 = vmatpush1.bf16.msra.mxu0 0
        %1692 = vmatprep.subr.bf16.mxu0 0
        %1693 = vmatpush1.bf16.msra.mxu0 0
        %1694 = vmatprep.subr.bf16.mxu0 0
        %1695 = vmatpush1.bf16.msra.mxu0 0
        %1696 = vmatprep.subr.bf16.mxu0 0
        %1697 = vmatpush1.bf16.msra.mxu0 0
        %1698 = vmatprep.subr.bf16.mxu0 0
        %1699 = vmatpush1.bf16.msra.mxu0 0
        %1700 = vmatprep.subr.bf16.mxu0 0
        %1701 = vmatpush1.bf16.msra.mxu0 0
        %1702 = vmatprep.subr.bf16.mxu0 0
        %1703 = vmatpush1.bf16.msra.mxu0 0
        %1704 = vmatprep.subr.bf16.mxu0 0
        %1705 = vmatpush1.bf16.msra.mxu0 0
        %1706 = vmatprep.subr.bf16.mxu0 0
        %1707 = vmatpush1.bf16.msra.mxu0 0
        %1708 = vmatprep.subr.bf16.mxu0 0
        %1709 = vmatpush1.bf16.msra.mxu0 0
        %1710 = vmatprep.subr.bf16.mxu0 0
        %1711 = vmatpush1.bf16.msra.mxu0 0
        %1712 = vmatprep.subr.bf16.mxu0 0
        %1713 = vmatpush1.bf16.msra.mxu0 0
        %1714 = vmatprep.subr.bf16.mxu0 0
        %1715 = vmatpush1.bf16.msra.mxu0 0
        %1716 = vmatprep.mubr.bf16.mxu0 0
        %1717 = vmatmul.mubr.bf16.gmra.mrb[0].mxu0 %v1682
        %v1718 = vpop.f32.mrb[0].mxu0
        %v1719 = vadd.f32 0.0, %v1718
        %v1720 = vpop.f32.mrb[0].mxu0
        %v1721 = vadd.f32 0.0, %v1720
        %v1722 = vpop.f32.mrb[0].mxu0
        %v1723 = vadd.f32 0.0, %v1722
        %v1724 = vpop.f32.mrb[0].mxu0
        %v1725 = vadd.f32 0.0, %v1724
        %1726 = vdwg.mxu0
        %1727 = vmatprep.subr.bf16.mxu0 0
        %1728 = vmatpush1.bf16.msra.mxu0 %v1677
        %1729 = vmatprep.subr.bf16.mxu0 0
        %1730 = vmatpush1.bf16.msra.mxu0 0
        %1731 = vmatprep.subr.bf16.mxu0 0
        %1732 = vmatpush1.bf16.msra.mxu0 0
        %1733 = vmatprep.subr.bf16.mxu0 0
        %1734 = vmatpush1.bf16.msra.mxu0 0
        %1735 = vmatprep.subr.bf16.mxu0 0
        %1736 = vmatpush1.bf16.msra.mxu0 0
        %1737 = vmatprep.subr.bf16.mxu0 0
        %1738 = vmatpush1.bf16.msra.mxu0 0
        %1739 = vmatprep.subr.bf16.mxu0 0
        %1740 = vmatpush1.bf16.msra.mxu0 0
        %1741 = vmatprep.subr.bf16.mxu0 0
        %1742 = vmatpush1.bf16.msra.mxu0 0
        %1743 = vmatprep.subr.bf16.mxu0 0
        %1744 = vmatpush1.bf16.msra.mxu0 0
        %1745 = vmatprep.subr.bf16.mxu0 0
        %1746 = vmatpush1.bf16.msra.mxu0 0
        %1747 = vmatprep.subr.bf16.mxu0 0
        %1748 = vmatpush1.bf16.msra.mxu0 0
        %1749 = vmatprep.subr.bf16.mxu0 0
        %1750 = vmatpush1.bf16.msra.mxu0 0
        %1751 = vmatprep.subr.bf16.mxu0 0
        %1752 = vmatpush1.bf16.msra.mxu0 0
        %1753 = vmatprep.subr.bf16.mxu0 0
        %1754 = vmatpush1.bf16.msra.mxu0 0
        %1755 = vmatprep.subr.bf16.mxu0 0
        %1756 = vmatpush1.bf16.msra.mxu0 0
        %1757 = vmatprep.subr.bf16.mxu0 0
        %1758 = vmatpush1.bf16.msra.mxu0 0
        %1759 = vmatprep.mubr.bf16.mxu0 0
        %1760 = vmatmul.mubr.bf16.gmra.mrb[0].mxu0 %v1682
        %v1761 = vpop.f32.mrb[0].mxu0
        %v1762 = vadd.f32 0.0, %v1761
        %v1763 = vpop.f32.mrb[0].mxu0
        %v1764 = vpop.f32.mrb[0].mxu0
        %v1765 = vadd.f32 0.0, %v1764
        %v1766 = vpop.f32.mrb[0].mxu0
        %1767 = vdwg.mxu0
        %v1768 = vadd.f32 %v1652, %v1719
        %v1769 = vadd.f32 %v1653, %v1721
        %v1770 = vadd.f32 %v1654, %v1762
        %v1771 = vadd.f32 %v1655, %v1723
        %v1772 = vadd.f32 %v1656, %v1725
        %v1773 = vadd.f32 %v1657, %v1765
        %s1774 = scalar_lea.vmem %s400, 48
        %v1775 = vld [vmem:[%s1774] sm:$0xf]
        %v1776 = vld [vmem:[%s1774 + $0x4] sm:$0xf]
        %v1779 = vunpack.c.l.b16 %v1775
        %v1780 = vunpack.c.l.b16 %v1776
        %v1781 = vpack.c.b16 %v1780, %v1779
        %1782 = vrot.lane.b32.xlu0 %v1305, 93
        %v1783 = vpop.permute.xlu0 %1782
        %1784 = vrot.lane.b32.xlu0 %v1306, 93
        %v1785 = vpop.permute.xlu0 %1784
        %1786 = vrot.lane.b32.xlu0 %v1307, 93
        %v1787 = vpop.permute.xlu0 %1786
        %1788 = vrot.lane.b32.xlu0 %v1308, 93
        %v1789 = vpop.permute.xlu0 %1788
        %vm1790 = vcmask 760832
        %v1791 = vsel %vm1790, %v1783, %v1785
        %v1792 = vsel %vm1790, %v1785, %v1787
        %v1793 = vsel %vm1790, %v1787, %v1789
        %v1798 = vsel %vm1103, %v1781, 0
        %1800 = vmatprep.subr.bf16.mxu0 %v1792
        %1801 = vmatpush1.bf16.msra.mxu0 %v1791
        %1802 = vmatprep.subr.bf16.mxu0 0
        %1803 = vmatpush1.bf16.msra.mxu0 0
        %1804 = vmatprep.subr.bf16.mxu0 0
        %1805 = vmatpush1.bf16.msra.mxu0 0
        %1806 = vmatprep.subr.bf16.mxu0 0
        %1807 = vmatpush1.bf16.msra.mxu0 0
        %1808 = vmatprep.subr.bf16.mxu0 0
        %1809 = vmatpush1.bf16.msra.mxu0 0
        %1810 = vmatprep.subr.bf16.mxu0 0
        %1811 = vmatpush1.bf16.msra.mxu0 0
        %1812 = vmatprep.subr.bf16.mxu0 0
        %1813 = vmatpush1.bf16.msra.mxu0 0
        %1814 = vmatprep.subr.bf16.mxu0 0
        %1815 = vmatpush1.bf16.msra.mxu0 0
        %1816 = vmatprep.subr.bf16.mxu0 0
        %1817 = vmatpush1.bf16.msra.mxu0 0
        %1818 = vmatprep.subr.bf16.mxu0 0
        %1819 = vmatpush1.bf16.msra.mxu0 0
        %1820 = vmatprep.subr.bf16.mxu0 0
        %1821 = vmatpush1.bf16.msra.mxu0 0
        %1822 = vmatprep.subr.bf16.mxu0 0
        %1823 = vmatpush1.bf16.msra.mxu0 0
        %1824 = vmatprep.subr.bf16.mxu0 0
        %1825 = vmatpush1.bf16.msra.mxu0 0
        %1826 = vmatprep.subr.bf16.mxu0 0
        %1827 = vmatpush1.bf16.msra.mxu0 0
        %1828 = vmatprep.subr.bf16.mxu0 0
        %1829 = vmatpush1.bf16.msra.mxu0 0
        %1830 = vmatprep.subr.bf16.mxu0 0
        %1831 = vmatpush1.bf16.msra.mxu0 0
        %1832 = vmatprep.mubr.bf16.mxu0 0
        %1833 = vmatmul.mubr.bf16.gmra.mrb[0].mxu0 %v1798
        %v1834 = vpop.f32.mrb[0].mxu0
        %v1835 = vadd.f32 0.0, %v1834
        %v1836 = vpop.f32.mrb[0].mxu0
        %v1837 = vadd.f32 0.0, %v1836
        %v1838 = vpop.f32.mrb[0].mxu0
        %v1839 = vadd.f32 0.0, %v1838
        %v1840 = vpop.f32.mrb[0].mxu0
        %v1841 = vadd.f32 0.0, %v1840
        %1842 = vdwg.mxu0
        %1843 = vmatprep.subr.bf16.mxu0 0
        %1844 = vmatpush1.bf16.msra.mxu0 %v1793
        %1845 = vmatprep.subr.bf16.mxu0 0
        %1846 = vmatpush1.bf16.msra.mxu0 0
        %1847 = vmatprep.subr.bf16.mxu0 0
        %1848 = vmatpush1.bf16.msra.mxu0 0
        %1849 = vmatprep.subr.bf16.mxu0 0
        %1850 = vmatpush1.bf16.msra.mxu0 0
        %1851 = vmatprep.subr.bf16.mxu0 0
        %1852 = vmatpush1.bf16.msra.mxu0 0
        %1853 = vmatprep.subr.bf16.mxu0 0
        %1854 = vmatpush1.bf16.msra.mxu0 0
        %1855 = vmatprep.subr.bf16.mxu0 0
        %1856 = vmatpush1.bf16.msra.mxu0 0
        %1857 = vmatprep.subr.bf16.mxu0 0
        %1858 = vmatpush1.bf16.msra.mxu0 0
        %1859 = vmatprep.subr.bf16.mxu0 0
        %1860 = vmatpush1.bf16.msra.mxu0 0
        %1861 = vmatprep.subr.bf16.mxu0 0
        %1862 = vmatpush1.bf16.msra.mxu0 0
        %1863 = vmatprep.subr.bf16.mxu0 0
        %1864 = vmatpush1.bf16.msra.mxu0 0
        %1865 = vmatprep.subr.bf16.mxu0 0
        %1866 = vmatpush1.bf16.msra.mxu0 0
        %1867 = vmatprep.subr.bf16.mxu0 0
        %1868 = vmatpush1.bf16.msra.mxu0 0
        %1869 = vmatprep.subr.bf16.mxu0 0
        %1870 = vmatpush1.bf16.msra.mxu0 0
        %1871 = vmatprep.subr.bf16.mxu0 0
        %1872 = vmatpush1.bf16.msra.mxu0 0
        %1873 = vmatprep.subr.bf16.mxu0 0
        %1874 = vmatpush1.bf16.msra.mxu0 0
        %1875 = vmatprep.mubr.bf16.mxu0 0
        %1876 = vmatmul.mubr.bf16.gmra.mrb[0].mxu0 %v1798
        %v1877 = vpop.f32.mrb[0].mxu0
        %v1878 = vadd.f32 0.0, %v1877
        %v1879 = vpop.f32.mrb[0].mxu0
        %v1880 = vpop.f32.mrb[0].mxu0
        %v1881 = vadd.f32 0.0, %v1880
        %v1882 = vpop.f32.mrb[0].mxu0
        %1883 = vdwg.mxu0
        %v1884 = vadd.f32 %v1768, %v1835
        %v1885 = vadd.f32 %v1769, %v1837
        %v1886 = vadd.f32 %v1770, %v1878
        %v1887 = vadd.f32 %v1771, %v1839
        %v1888 = vadd.f32 %v1772, %v1841
        %v1889 = vadd.f32 %v1773, %v1881
        %s1890 = scalar_lea.vmem %s400, 56
        %v1891 = vld [vmem:[%s1890] sm:$0xf]
        %v1892 = vld [vmem:[%s1890 + $0x4] sm:$0xf]
        %v1895 = vunpack.c.l.b16 %v1891
        %v1896 = vunpack.c.l.b16 %v1892
        %v1897 = vpack.c.b16 %v1896, %v1895
        %1898 = vrot.lane.b32.xlu0 %v1305, 92
        %v1899 = vpop.permute.xlu0 %1898
        %1900 = vrot.lane.b32.xlu0 %v1306, 92
        %v1901 = vpop.permute.xlu0 %1900
        %1902 = vrot.lane.b32.xlu0 %v1307, 92
        %v1903 = vpop.permute.xlu0 %1902
        %1904 = vrot.lane.b32.xlu0 %v1308, 92
        %v1905 = vpop.permute.xlu0 %1904
        %vm1906 = vcmask 752640
        %v1907 = vsel %vm1906, %v1899, %v1901
        %v1908 = vsel %vm1906, %v1901, %v1903
        %v1909 = vsel %vm1906, %v1903, %v1905
        %v1914 = vsel %vm1103, %v1897, 0
        %1916 = vmatprep.subr.bf16.mxu0 %v1908
        %1917 = vmatpush1.bf16.msra.mxu0 %v1907
        %1918 = vmatprep.subr.bf16.mxu0 0
        %1919 = vmatpush1.bf16.msra.mxu0 0
        %1920 = vmatprep.subr.bf16.mxu0 0
        %1921 = vmatpush1.bf16.msra.mxu0 0
        %1922 = vmatprep.subr.bf16.mxu0 0
        %1923 = vmatpush1.bf16.msra.mxu0 0
        %1924 = vmatprep.subr.bf16.mxu0 0
        %1925 = vmatpush1.bf16.msra.mxu0 0
        %1926 = vmatprep.subr.bf16.mxu0 0
        %1927 = vmatpush1.bf16.msra.mxu0 0
        %1928 = vmatprep.subr.bf16.mxu0 0
        %1929 = vmatpush1.bf16.msra.mxu0 0
        %1930 = vmatprep.subr.bf16.mxu0 0
        %1931 = vmatpush1.bf16.msra.mxu0 0
        %1932 = vmatprep.subr.bf16.mxu0 0
        %1933 = vmatpush1.bf16.msra.mxu0 0
        %1934 = vmatprep.subr.bf16.mxu0 0
        %1935 = vmatpush1.bf16.msra.mxu0 0
        %1936 = vmatprep.subr.bf16.mxu0 0
        %1937 = vmatpush1.bf16.msra.mxu0 0
        %1938 = vmatprep.subr.bf16.mxu0 0
        %1939 = vmatpush1.bf16.msra.mxu0 0
        %1940 = vmatprep.subr.bf16.mxu0 0
        %1941 = vmatpush1.bf16.msra.mxu0 0
        %1942 = vmatprep.subr.bf16.mxu0 0
        %1943 = vmatpush1.bf16.msra.mxu0 0
        %1944 = vmatprep.subr.bf16.mxu0 0
        %1945 = vmatpush1.bf16.msra.mxu0 0
        %1946 = vmatprep.subr.bf16.mxu0 0
        %1947 = vmatpush1.bf16.msra.mxu0 0
        %1948 = vmatprep.mubr.bf16.mxu0 0
        %1949 = vmatmul.mubr.bf16.gmra.mrb[0].mxu0 %v1914
        %v1950 = vpop.f32.mrb[0].mxu0
        %v1951 = vadd.f32 0.0, %v1950
        %v1952 = vpop.f32.mrb[0].mxu0
        %v1953 = vadd.f32 0.0, %v1952
        %v1954 = vpop.f32.mrb[0].mxu0
        %v1955 = vadd.f32 0.0, %v1954
        %v1956 = vpop.f32.mrb[0].mxu0
        %v1957 = vadd.f32 0.0, %v1956
        %1958 = vdwg.mxu0
        %1959 = vmatprep.subr.bf16.mxu0 0
        %1960 = vmatpush1.bf16.msra.mxu0 %v1909
        %1961 = vmatprep.subr.bf16.mxu0 0
        %1962 = vmatpush1.bf16.msra.mxu0 0
        %1963 = vmatprep.subr.bf16.mxu0 0
        %1964 = vmatpush1.bf16.msra.mxu0 0
        %1965 = vmatprep.subr.bf16.mxu0 0
        %1966 = vmatpush1.bf16.msra.mxu0 0
        %1967 = vmatprep.subr.bf16.mxu0 0
        %1968 = vmatpush1.bf16.msra.mxu0 0
        %1969 = vmatprep.subr.bf16.mxu0 0
        %1970 = vmatpush1.bf16.msra.mxu0 0
        %1971 = vmatprep.subr.bf16.mxu0 0
        %1972 = vmatpush1.bf16.msra.mxu0 0
        %1973 = vmatprep.subr.bf16.mxu0 0
        %1974 = vmatpush1.bf16.msra.mxu0 0
        %1975 = vmatprep.subr.bf16.mxu0 0
        %1976 = vmatpush1.bf16.msra.mxu0 0
        %1977 = vmatprep.subr.bf16.mxu0 0
        %1978 = vmatpush1.bf16.msra.mxu0 0
        %1979 = vmatprep.subr.bf16.mxu0 0
        %1980 = vmatpush1.bf16.msra.mxu0 0
        %1981 = vmatprep.subr.bf16.mxu0 0
        %1982 = vmatpush1.bf16.msra.mxu0 0
        %1983 = vmatprep.subr.bf16.mxu0 0
        %1984 = vmatpush1.bf16.msra.mxu0 0
        %1985 = vmatprep.subr.bf16.mxu0 0
        %1986 = vmatpush1.bf16.msra.mxu0 0
        %1987 = vmatprep.subr.bf16.mxu0 0
        %1988 = vmatpush1.bf16.msra.mxu0 0
        %1989 = vmatprep.subr.bf16.mxu0 0
        %1990 = vmatpush1.bf16.msra.mxu0 0
        %1991 = vmatprep.mubr.bf16.mxu0 0
        %1992 = vmatmul.mubr.bf16.gmra.mrb[0].mxu0 %v1914
        %v1993 = vpop.f32.mrb[0].mxu0
        %v1994 = vadd.f32 0.0, %v1993
        %v1995 = vpop.f32.mrb[0].mxu0
        %v1996 = vpop.f32.mrb[0].mxu0
        %v1997 = vadd.f32 0.0, %v1996
        %v1998 = vpop.f32.mrb[0].mxu0
        %1999 = vdwg.mxu0
        %v2000 = vadd.f32 %v1884, %v1951
        %v2001 = vadd.f32 %v1885, %v1953
        %v2002 = vadd.f32 %v1886, %v1994
        %v2003 = vadd.f32 %v1887, %v1955
        %v2004 = vadd.f32 %v1888, %v1957
        %v2005 = vadd.f32 %v1889, %v1997
        %s2006 = scalar_lea.vmem %s400, 64
        %v2007 = vld [vmem:[%s2006] sm:$0xf]
        %v2008 = vld [vmem:[%s2006 + $0x4] sm:$0xf]
        %v2011 = vunpack.c.l.b16 %v2007
        %v2012 = vunpack.c.l.b16 %v2008
        %v2013 = vpack.c.b16 %v2012, %v2011
        %2014 = vrot.lane.b32.xlu0 %v1305, 91
        %v2015 = vpop.permute.xlu0 %2014
        %2016 = vrot.lane.b32.xlu0 %v1306, 91
        %v2017 = vpop.permute.xlu0 %2016
        %2018 = vrot.lane.b32.xlu0 %v1307, 91
        %v2019 = vpop.permute.xlu0 %2018
        %2020 = vrot.lane.b32.xlu0 %v1308, 91
        %v2021 = vpop.permute.xlu0 %2020
        %vm2022 = vcmask 744448
        %v2023 = vsel %vm2022, %v2015, %v2017
        %v2024 = vsel %vm2022, %v2017, %v2019
        %v2025 = vsel %vm2022, %v2019, %v2021
        %v2030 = vsel %vm1103, %v2013, 0
        %2032 = vmatprep.subr.bf16.mxu0 %v2024
        %2033 = vmatpush1.bf16.msra.mxu0 %v2023
        %2034 = vmatprep.subr.bf16.mxu0 0
        %2035 = vmatpush1.bf16.msra.mxu0 0
        %2036 = vmatprep.subr.bf16.mxu0 0
        %2037 = vmatpush1.bf16.msra.mxu0 0
        %2038 = vmatprep.subr.bf16.mxu0 0
        %2039 = vmatpush1.bf16.msra.mxu0 0
        %2040 = vmatprep.subr.bf16.mxu0 0
        %2041 = vmatpush1.bf16.msra.mxu0 0
        %2042 = vmatprep.subr.bf16.mxu0 0
        %2043 = vmatpush1.bf16.msra.mxu0 0
        %2044 = vmatprep.subr.bf16.mxu0 0
        %2045 = vmatpush1.bf16.msra.mxu0 0
        %2046 = vmatprep.subr.bf16.mxu0 0
        %2047 = vmatpush1.bf16.msra.mxu0 0
        %2048 = vmatprep.subr.bf16.mxu0 0
        %2049 = vmatpush1.bf16.msra.mxu0 0
        %2050 = vmatprep.subr.bf16.mxu0 0
        %2051 = vmatpush1.bf16.msra.mxu0 0
        %2052 = vmatprep.subr.bf16.mxu0 0
        %2053 = vmatpush1.bf16.msra.mxu0 0
        %2054 = vmatprep.subr.bf16.mxu0 0
        %2055 = vmatpush1.bf16.msra.mxu0 0
        %2056 = vmatprep.subr.bf16.mxu0 0
        %2057 = vmatpush1.bf16.msra.mxu0 0
        %2058 = vmatprep.subr.bf16.mxu0 0
        %2059 = vmatpush1.bf16.msra.mxu0 0
        %2060 = vmatprep.subr.bf16.mxu0 0
        %2061 = vmatpush1.bf16.msra.mxu0 0
        %2062 = vmatprep.subr.bf16.mxu0 0
        %2063 = vmatpush1.bf16.msra.mxu0 0
        %2064 = vmatprep.mubr.bf16.mxu0 0
        %2065 = vmatmul.mubr.bf16.gmra.mrb[0].mxu0 %v2030
        %v2066 = vpop.f32.mrb[0].mxu0
        %v2067 = vadd.f32 0.0, %v2066
        %v2068 = vpop.f32.mrb[0].mxu0
        %v2069 = vadd.f32 0.0, %v2068
        %v2070 = vpop.f32.mrb[0].mxu0
        %v2071 = vadd.f32 0.0, %v2070
        %v2072 = vpop.f32.mrb[0].mxu0
        %v2073 = vadd.f32 0.0, %v2072
        %2074 = vdwg.mxu0
        %2075 = vmatprep.subr.bf16.mxu0 0
        %2076 = vmatpush1.bf16.msra.mxu0 %v2025
        %2077 = vmatprep.subr.bf16.mxu0 0
        %2078 = vmatpush1.bf16.msra.mxu0 0
        %2079 = vmatprep.subr.bf16.mxu0 0
        %2080 = vmatpush1.bf16.msra.mxu0 0
        %2081 = vmatprep.subr.bf16.mxu0 0
        %2082 = vmatpush1.bf16.msra.mxu0 0
        %2083 = vmatprep.subr.bf16.mxu0 0
        %2084 = vmatpush1.bf16.msra.mxu0 0
        %2085 = vmatprep.subr.bf16.mxu0 0
        %2086 = vmatpush1.bf16.msra.mxu0 0
        %2087 = vmatprep.subr.bf16.mxu0 0
        %2088 = vmatpush1.bf16.msra.mxu0 0
        %2089 = vmatprep.subr.bf16.mxu0 0
        %2090 = vmatpush1.bf16.msra.mxu0 0
        %2091 = vmatprep.subr.bf16.mxu0 0
        %2092 = vmatpush1.bf16.msra.mxu0 0
        %2093 = vmatprep.subr.bf16.mxu0 0
        %2094 = vmatpush1.bf16.msra.mxu0 0
        %2095 = vmatprep.subr.bf16.mxu0 0
        %2096 = vmatpush1.bf16.msra.mxu0 0
        %2097 = vmatprep.subr.bf16.mxu0 0
        %2098 = vmatpush1.bf16.msra.mxu0 0
        %2099 = vmatprep.subr.bf16.mxu0 0
        %2100 = vmatpush1.bf16.msra.mxu0 0
        %2101 = vmatprep.subr.bf16.mxu0 0
        %2102 = vmatpush1.bf16.msra.mxu0 0
        %2103 = vmatprep.subr.bf16.mxu0 0
        %2104 = vmatpush1.bf16.msra.mxu0 0
        %2105 = vmatprep.subr.bf16.mxu0 0
        %2106 = vmatpush1.bf16.msra.mxu0 0
        %2107 = vmatprep.mubr.bf16.mxu0 0
        %2108 = vmatmul.mubr.bf16.gmra.mrb[0].mxu0 %v2030
        %v2109 = vpop.f32.mrb[0].mxu0
        %v2110 = vadd.f32 0.0, %v2109
        %v2111 = vpop.f32.mrb[0].mxu0
        %v2112 = vpop.f32.mrb[0].mxu0
        %v2113 = vadd.f32 0.0, %v2112
        %v2114 = vpop.f32.mrb[0].mxu0
        %2115 = vdwg.mxu0
        %v2116 = vadd.f32 %v2000, %v2067
        %v2117 = vadd.f32 %v2001, %v2069
        %v2118 = vadd.f32 %v2002, %v2110
        %v2119 = vadd.f32 %v2003, %v2071
        %v2120 = vadd.f32 %v2004, %v2073
        %v2121 = vadd.f32 %v2005, %v2113
        %s2122 = ssub.s32 %s414, 1
        %s2123 = scvt.s32.f32 %s2122
        %v2124 = vstv %s2123
        %v2125 = vadd.f32 %v1004, %v2124
        %v2126 = vadd.f32 %v1005, %v2124
        %v2127 = vadd.f32 %v1006, %v2124
        %vm2128 = vcmp.gt.f32.partialorder %v2125, -0.5
        %vm2129 = vcmp.gt.f32.partialorder %v2126, -0.5
        %vm2130 = vcmp.gt.f32.partialorder %v2127, -0.5
        %vm2131 = vmand %vm1018, %vm2128
        %vm2132 = vmand %vm1019, %vm2129
        %vm2133 = vmand %vm1020, %vm2130
        %vm2134 = vcmp.lt.f32.partialorder %v2125, 15.5
        %vm2135 = vcmp.lt.f32.partialorder %v2126, 15.5
        %vm2136 = vcmp.lt.f32.partialorder %v2127, 15.5
        %vm2137 = vmand %vm2131, %vm2134
        %vm2138 = vmand %vm2132, %vm2135
        %vm2139 = vmand %vm2133, %vm2136
        %v2140 = vld [vmem:[%s405] sm:$0xff]
        %v2141 = vld [vmem:[%s405 + $0x8] sm:$0xff]
        %2143 = vset.pattern.permute.xlu0 0
        %2144 = vperm.xlu0 %2143, %v2140
        %v2145 = vpop.permute.xlu0 %2144
        %2148 = vset.pattern.permute.xlu0 0
        %2149 = vperm.xlu0 %2148, %v2141
        %v2150 = vpop.permute.xlu0 %2149
        %v2152 = vadd.f32 %v2116, %v2145
        %v2153 = vadd.f32 %v2117, %v2145
        %v2154 = vadd.f32 %v2118, %v2145
        %v2155 = vadd.f32 %v2119, %v2150
        %v2156 = vadd.f32 %v2120, %v2150
        %v2157 = vadd.f32 %v2121, %v2150
        %vm2158 = vcmp.ge.f32.partialorder %v2152, 0.0
        %vm2159 = vcmp.ge.f32.partialorder %v2153, 0.0
        %vm2160 = vcmp.ge.f32.partialorder %v2154, 0.0
        %vm2161 = vcmp.ge.f32.partialorder %v2155, 0.0
        %vm2162 = vcmp.ge.f32.partialorder %v2156, 0.0
        %vm2163 = vcmp.ge.f32.partialorder %v2157, 0.0
        %v2164 = vmul.f32 %v2152, 0.2
        %v2165 = vmul.f32 %v2153, 0.2
        %v2166 = vmul.f32 %v2154, 0.2
        %v2167 = vmul.f32 %v2155, 0.2
        %v2168 = vmul.f32 %v2156, 0.2
        %v2169 = vmul.f32 %v2157, 0.2
        %v2170 = vsel %vm2158, %v2152, %v2164
        %v2171 = vsel %vm2159, %v2153, %v2165
        %v2172 = vsel %vm2160, %v2154, %v2166
        %v2173 = vsel %vm2161, %v2155, %v2167
        %v2174 = vsel %vm2162, %v2156, %v2168
        %v2175 = vsel %vm2163, %v2157, %v2169
        %v2176 = vsel %vm2137, 1, 0
        %v2177 = vsel %vm2138, 1, 0
        %v2178 = vsel %vm2139, 1, 0
        %vm2179 = vcmp.eq.s32.totalorder %v2176, 1
        %vm2180 = vcmp.eq.s32.totalorder %v2177, 1
        %vm2181 = vcmp.eq.s32.totalorder %v2178, 1
        %v2182 = vsel %vm2179, %v2170, 0.0
        %v2183 = vsel %vm2180, %v2171, 0.0
        %v2184 = vsel %vm2181, %v2172, 0.0
        %v2185 = vsel %vm2179, %v2173, 0.0
        %v2186 = vsel %vm2180, %v2174, 0.0
        %v2187 = vsel %vm2181, %v2175, 0.0
        %v2188 = vpack.c.bf16 %v2185, %v2182
        %v2189 = vpack.c.bf16 %v2186, %v2183
        %v2190 = vpack.c.bf16 %v2187, %v2184
        %2191 = vst [vmem:[#allocation2 + $0x8] sm:$0xff] %v2188
        %2192 = vst [vmem:[#allocation2 + $0x10] sm:$0xff] %v2189
        %2193 = vst [vmem:[#allocation2 + $0x18] sm:$0xff] %v2190
        %v2194 = vld [vmem:[%s409] sm:$0x1]
        %v2195 = vld [vmem:[#allocation2] sm:$0xff]
        %v2196 = vld [vmem:[#allocation2 + $0x8] sm:$0xff]
        %v2197 = vld [vmem:[#allocation2 + $0x10] sm:$0xff]
        %v2198 = vld [vmem:[#allocation2 + $0x18] sm:$0xff]
        %s2199 = scalar_lea.vmem %s409, 1
        %v2200 = vld [vmem:[%s2199] sm:$0x1]
        %v2202 = vsel %vm1103, %v2200, 0
        %2204 = vmatprep.subr.bf16.mxu0 %v2197
        %2205 = vmatpush1.bf16.msra.mxu0 %v2196
        %2206 = vmatprep.subr.bf16.mxu0 0
        %2207 = vmatpush1.bf16.msra.mxu0 0
        %2208 = vmatprep.subr.bf16.mxu0 0
        %2209 = vmatpush1.bf16.msra.mxu0 0
        %2210 = vmatprep.subr.bf16.mxu0 0
        %2211 = vmatpush1.bf16.msra.mxu0 0
        %2212 = vmatprep.subr.bf16.mxu0 0
        %2213 = vmatpush1.bf16.msra.mxu0 0
        %2214 = vmatprep.subr.bf16.mxu0 0
        %2215 = vmatpush1.bf16.msra.mxu0 0
        %2216 = vmatprep.subr.bf16.mxu0 0
        %2217 = vmatpush1.bf16.msra.mxu0 0
        %2218 = vmatprep.subr.bf16.mxu0 0
        %2219 = vmatpush1.bf16.msra.mxu0 0
        %2220 = vmatprep.subr.bf16.mxu0 0
        %2221 = vmatpush1.bf16.msra.mxu0 0
        %2222 = vmatprep.subr.bf16.mxu0 0
        %2223 = vmatpush1.bf16.msra.mxu0 0
        %2224 = vmatprep.subr.bf16.mxu0 0
        %2225 = vmatpush1.bf16.msra.mxu0 0
        %2226 = vmatprep.subr.bf16.mxu0 0
        %2227 = vmatpush1.bf16.msra.mxu0 0
        %2228 = vmatprep.subr.bf16.mxu0 0
        %2229 = vmatpush1.bf16.msra.mxu0 0
        %2230 = vmatprep.subr.bf16.mxu0 0
        %2231 = vmatpush1.bf16.msra.mxu0 0
        %2232 = vmatprep.subr.bf16.mxu0 0
        %2233 = vmatpush1.bf16.msra.mxu0 0
        %2234 = vmatprep.subr.bf16.mxu0 0
        %2235 = vmatpush1.bf16.msra.mxu0 0
        %2236 = vmatprep.mubr.bf16.mxu0 0
        %2237 = vmatmul.mubr.bf16.gmra.mrb[0].mxu0 %v2202
        %v2238 = vpop.f32.mrb[0].mxu0
        %v2239 = vadd.f32 0.0, %v2238
        %v2240 = vpop.f32.mrb[0].mxu0
        %v2241 = vadd.f32 0.0, %v2240
        %v2242 = vpop.f32.mrb[0].mxu0
        %v2243 = vpop.f32.mrb[0].mxu0
        %2244 = vdwg.mxu0
        %2245 = vmatprep.subr.bf16.mxu0 0
        %2246 = vmatpush1.bf16.msra.mxu0 %v2198
        %2247 = vmatprep.subr.bf16.mxu0 0
        %2248 = vmatpush1.bf16.msra.mxu0 0
        %2249 = vmatprep.subr.bf16.mxu0 0
        %2250 = vmatpush1.bf16.msra.mxu0 0
        %2251 = vmatprep.subr.bf16.mxu0 0
        %2252 = vmatpush1.bf16.msra.mxu0 0
        %2253 = vmatprep.subr.bf16.mxu0 0
        %2254 = vmatpush1.bf16.msra.mxu0 0
        %2255 = vmatprep.subr.bf16.mxu0 0
        %2256 = vmatpush1.bf16.msra.mxu0 0
        %2257 = vmatprep.subr.bf16.mxu0 0
        %2258 = vmatpush1.bf16.msra.mxu0 0
        %2259 = vmatprep.subr.bf16.mxu0 0
        %2260 = vmatpush1.bf16.msra.mxu0 0
        %2261 = vmatprep.subr.bf16.mxu0 0
        %2262 = vmatpush1.bf16.msra.mxu0 0
        %2263 = vmatprep.subr.bf16.mxu0 0
        %2264 = vmatpush1.bf16.msra.mxu0 0
        %2265 = vmatprep.subr.bf16.mxu0 0
        %2266 = vmatpush1.bf16.msra.mxu0 0
        %2267 = vmatprep.subr.bf16.mxu0 0
        %2268 = vmatpush1.bf16.msra.mxu0 0
        %2269 = vmatprep.subr.bf16.mxu0 0
        %2270 = vmatpush1.bf16.msra.mxu0 0
        %2271 = vmatprep.subr.bf16.mxu0 0
        %2272 = vmatpush1.bf16.msra.mxu0 0
        %2273 = vmatprep.subr.bf16.mxu0 0
        %2274 = vmatpush1.bf16.msra.mxu0 0
        %2275 = vmatprep.subr.bf16.mxu0 0
        %2276 = vmatpush1.bf16.msra.mxu0 0
        %2277 = vmatprep.mubr.bf16.mxu0 0
        %2278 = vmatmul.mubr.bf16.gmra.mrb[0].mxu0 %v2202
        %v2279 = vpop.f32.mrb[0].mxu0
        %v2280 = vadd.f32 0.0, %v2279
        %v2281 = vpop.f32.mrb[0].mxu0
        %v2282 = vpop.f32.mrb[0].mxu0
        %v2283 = vpop.f32.mrb[0].mxu0
        %2284 = vdwg.mxu0
        %2289 = vrot.lane.b32.xlu0 %v2195, 1
        %v2290 = vpop.permute.xlu0 %2289
        %2291 = vrot.lane.b32.xlu0 %v2196, 1
        %v2292 = vpop.permute.xlu0 %2291
        %2293 = vrot.lane.b32.xlu0 %v2197, 1
        %v2294 = vpop.permute.xlu0 %2293
        %2295 = vrot.lane.b32.xlu0 %v2198, 1
        %v2296 = vpop.permute.xlu0 %2295
        %v2297 = vsel %vm1208, %v2290, %v2292
        %v2298 = vsel %vm1208, %v2292, %v2294
        %v2299 = vsel %vm1208, %v2294, %v2296
        %v2304 = vsel %vm1103, %v2194, 0
        %2306 = vmatprep.subr.bf16.mxu0 %v2298
        %2307 = vmatpush1.bf16.msra.mxu0 %v2297
        %2308 = vmatprep.subr.bf16.mxu0 0
        %2309 = vmatpush1.bf16.msra.mxu0 0
        %2310 = vmatprep.subr.bf16.mxu0 0
        %2311 = vmatpush1.bf16.msra.mxu0 0
        %2312 = vmatprep.subr.bf16.mxu0 0
        %2313 = vmatpush1.bf16.msra.mxu0 0
        %2314 = vmatprep.subr.bf16.mxu0 0
        %2315 = vmatpush1.bf16.msra.mxu0 0
        %2316 = vmatprep.subr.bf16.mxu0 0
        %2317 = vmatpush1.bf16.msra.mxu0 0
        %2318 = vmatprep.subr.bf16.mxu0 0
        %2319 = vmatpush1.bf16.msra.mxu0 0
        %2320 = vmatprep.subr.bf16.mxu0 0
        %2321 = vmatpush1.bf16.msra.mxu0 0
        %2322 = vmatprep.subr.bf16.mxu0 0
        %2323 = vmatpush1.bf16.msra.mxu0 0
        %2324 = vmatprep.subr.bf16.mxu0 0
        %2325 = vmatpush1.bf16.msra.mxu0 0
        %2326 = vmatprep.subr.bf16.mxu0 0
        %2327 = vmatpush1.bf16.msra.mxu0 0
        %2328 = vmatprep.subr.bf16.mxu0 0
        %2329 = vmatpush1.bf16.msra.mxu0 0
        %2330 = vmatprep.subr.bf16.mxu0 0
        %2331 = vmatpush1.bf16.msra.mxu0 0
        %2332 = vmatprep.subr.bf16.mxu0 0
        %2333 = vmatpush1.bf16.msra.mxu0 0
        %2334 = vmatprep.subr.bf16.mxu0 0
        %2335 = vmatpush1.bf16.msra.mxu0 0
        %2336 = vmatprep.subr.bf16.mxu0 0
        %2337 = vmatpush1.bf16.msra.mxu0 0
        %2338 = vmatprep.mubr.bf16.mxu0 0
        %2339 = vmatmul.mubr.bf16.gmra.mrb[0].mxu0 %v2304
        %v2340 = vpop.f32.mrb[0].mxu0
        %v2341 = vadd.f32 %v2239, %v2340
        %v2342 = vpop.f32.mrb[0].mxu0
        %v2343 = vadd.f32 %v2241, %v2342
        %v2344 = vpop.f32.mrb[0].mxu0
        %v2345 = vpop.f32.mrb[0].mxu0
        %2346 = vdwg.mxu0
        %2347 = vmatprep.subr.bf16.mxu0 0
        %2348 = vmatpush1.bf16.msra.mxu0 %v2299
        %2349 = vmatprep.subr.bf16.mxu0 0
        %2350 = vmatpush1.bf16.msra.mxu0 0
        %2351 = vmatprep.subr.bf16.mxu0 0
        %2352 = vmatpush1.bf16.msra.mxu0 0
        %2353 = vmatprep.subr.bf16.mxu0 0
        %2354 = vmatpush1.bf16.msra.mxu0 0
        %2355 = vmatprep.subr.bf16.mxu0 0
        %2356 = vmatpush1.bf16.msra.mxu0 0
        %2357 = vmatprep.subr.bf16.mxu0 0
        %2358 = vmatpush1.bf16.msra.mxu0 0
        %2359 = vmatprep.subr.bf16.mxu0 0
        %2360 = vmatpush1.bf16.msra.mxu0 0
        %2361 = vmatprep.subr.bf16.mxu0 0
        %2362 = vmatpush1.bf16.msra.mxu0 0
        %2363 = vmatprep.subr.bf16.mxu0 0
        %2364 = vmatpush1.bf16.msra.mxu0 0
        %2365 = vmatprep.subr.bf16.mxu0 0
        %2366 = vmatpush1.bf16.msra.mxu0 0
        %2367 = vmatprep.subr.bf16.mxu0 0
        %2368 = vmatpush1.bf16.msra.mxu0 0
        %2369 = vmatprep.subr.bf16.mxu0 0
        %2370 = vmatpush1.bf16.msra.mxu0 0
        %2371 = vmatprep.subr.bf16.mxu0 0
        %2372 = vmatpush1.bf16.msra.mxu0 0
        %2373 = vmatprep.subr.bf16.mxu0 0
        %2374 = vmatpush1.bf16.msra.mxu0 0
        %2375 = vmatprep.subr.bf16.mxu0 0
        %2376 = vmatpush1.bf16.msra.mxu0 0
        %2377 = vmatprep.subr.bf16.mxu0 0
        %2378 = vmatpush1.bf16.msra.mxu0 0
        %2379 = vmatprep.mubr.bf16.mxu0 0
        %2380 = vmatmul.mubr.bf16.gmra.mrb[0].mxu0 %v2304
        %v2381 = vpop.f32.mrb[0].mxu0
        %v2382 = vadd.f32 %v2280, %v2381
        %v2383 = vpop.f32.mrb[0].mxu0
        %v2384 = vpop.f32.mrb[0].mxu0
        %v2385 = vpop.f32.mrb[0].mxu0
        %2386 = vdwg.mxu0
        %s2387 = scalar_lea.vmem %s409, 2
        %v2388 = vld [vmem:[%s2387] sm:$0x1]
        %v2389 = vld [vmem:[#allocation2 + $0x8] sm:$0xff]
        %v2390 = vld [vmem:[#allocation2 + $0x10] sm:$0xff]
        %v2391 = vld [vmem:[#allocation2 + $0x18] sm:$0xff]
        %v2392 = vld [vmem:[#allocation2 + $0x20] sm:$0xff]
        %2397 = vrot.lane.b32.xlu0 %v2389, 127
        %v2398 = vpop.permute.xlu0 %2397
        %2399 = vrot.lane.b32.xlu0 %v2390, 127
        %v2400 = vpop.permute.xlu0 %2399
        %2401 = vrot.lane.b32.xlu0 %v2391, 127
        %v2402 = vpop.permute.xlu0 %2401
        %2403 = vrot.lane.b32.xlu0 %v2392, 127
        %v2404 = vpop.permute.xlu0 %2403
        %v2405 = vsel %vm1326, %v2398, %v2400
        %v2406 = vsel %vm1326, %v2400, %v2402
        %v2407 = vsel %vm1326, %v2402, %v2404
        %v2412 = vsel %vm1103, %v2388, 0
        %2414 = vmatprep.subr.bf16.mxu0 %v2406
        %2415 = vmatpush1.bf16.msra.mxu0 %v2405
        %2416 = vmatprep.subr.bf16.mxu0 0
        %2417 = vmatpush1.bf16.msra.mxu0 0
        %2418 = vmatprep.subr.bf16.mxu0 0
        %2419 = vmatpush1.bf16.msra.mxu0 0
        %2420 = vmatprep.subr.bf16.mxu0 0
        %2421 = vmatpush1.bf16.msra.mxu0 0
        %2422 = vmatprep.subr.bf16.mxu0 0
        %2423 = vmatpush1.bf16.msra.mxu0 0
        %2424 = vmatprep.subr.bf16.mxu0 0
        %2425 = vmatpush1.bf16.msra.mxu0 0
        %2426 = vmatprep.subr.bf16.mxu0 0
        %2427 = vmatpush1.bf16.msra.mxu0 0
        %2428 = vmatprep.subr.bf16.mxu0 0
        %2429 = vmatpush1.bf16.msra.mxu0 0
        %2430 = vmatprep.subr.bf16.mxu0 0
        %2431 = vmatpush1.bf16.msra.mxu0 0
        %2432 = vmatprep.subr.bf16.mxu0 0
        %2433 = vmatpush1.bf16.msra.mxu0 0
        %2434 = vmatprep.subr.bf16.mxu0 0
        %2435 = vmatpush1.bf16.msra.mxu0 0
        %2436 = vmatprep.subr.bf16.mxu0 0
        %2437 = vmatpush1.bf16.msra.mxu0 0
        %2438 = vmatprep.subr.bf16.mxu0 0
        %2439 = vmatpush1.bf16.msra.mxu0 0
        %2440 = vmatprep.subr.bf16.mxu0 0
        %2441 = vmatpush1.bf16.msra.mxu0 0
        %2442 = vmatprep.subr.bf16.mxu0 0
        %2443 = vmatpush1.bf16.msra.mxu0 0
        %2444 = vmatprep.subr.bf16.mxu0 0
        %2445 = vmatpush1.bf16.msra.mxu0 0
        %2446 = vmatprep.mubr.bf16.mxu0 0
        %2447 = vmatmul.mubr.bf16.gmra.mrb[0].mxu0 %v2412
        %v2448 = vpop.f32.mrb[0].mxu0
        %v2449 = vadd.f32 0.0, %v2448
        %v2450 = vpop.f32.mrb[0].mxu0
        %v2451 = vadd.f32 0.0, %v2450
        %v2452 = vpop.f32.mrb[0].mxu0
        %v2453 = vpop.f32.mrb[0].mxu0
        %2454 = vdwg.mxu0
        %2455 = vmatprep.subr.bf16.mxu0 0
        %2456 = vmatpush1.bf16.msra.mxu0 %v2407
        %2457 = vmatprep.subr.bf16.mxu0 0
        %2458 = vmatpush1.bf16.msra.mxu0 0
        %2459 = vmatprep.subr.bf16.mxu0 0
        %2460 = vmatpush1.bf16.msra.mxu0 0
        %2461 = vmatprep.subr.bf16.mxu0 0
        %2462 = vmatpush1.bf16.msra.mxu0 0
        %2463 = vmatprep.subr.bf16.mxu0 0
        %2464 = vmatpush1.bf16.msra.mxu0 0
        %2465 = vmatprep.subr.bf16.mxu0 0
        %2466 = vmatpush1.bf16.msra.mxu0 0
        %2467 = vmatprep.subr.bf16.mxu0 0
        %2468 = vmatpush1.bf16.msra.mxu0 0
        %2469 = vmatprep.subr.bf16.mxu0 0
        %2470 = vmatpush1.bf16.msra.mxu0 0
        %2471 = vmatprep.subr.bf16.mxu0 0
        %2472 = vmatpush1.bf16.msra.mxu0 0
        %2473 = vmatprep.subr.bf16.mxu0 0
        %2474 = vmatpush1.bf16.msra.mxu0 0
        %2475 = vmatprep.subr.bf16.mxu0 0
        %2476 = vmatpush1.bf16.msra.mxu0 0
        %2477 = vmatprep.subr.bf16.mxu0 0
        %2478 = vmatpush1.bf16.msra.mxu0 0
        %2479 = vmatprep.subr.bf16.mxu0 0
        %2480 = vmatpush1.bf16.msra.mxu0 0
        %2481 = vmatprep.subr.bf16.mxu0 0
        %2482 = vmatpush1.bf16.msra.mxu0 0
        %2483 = vmatprep.subr.bf16.mxu0 0
        %2484 = vmatpush1.bf16.msra.mxu0 0
        %2485 = vmatprep.subr.bf16.mxu0 0
        %2486 = vmatpush1.bf16.msra.mxu0 0
        %2487 = vmatprep.mubr.bf16.mxu0 0
        %2488 = vmatmul.mubr.bf16.gmra.mrb[0].mxu0 %v2412
        %v2489 = vpop.f32.mrb[0].mxu0
        %v2490 = vadd.f32 0.0, %v2489
        %v2491 = vpop.f32.mrb[0].mxu0
        %v2492 = vpop.f32.mrb[0].mxu0
        %v2493 = vpop.f32.mrb[0].mxu0
        %2494 = vdwg.mxu0
        %v2495 = vadd.f32 %v2341, %v2449
        %v2496 = vadd.f32 %v2343, %v2451
        %v2497 = vadd.f32 %v2382, %v2490
        %s2498 = scalar_lea.vmem %s409, 3
        %v2499 = vld [vmem:[%s2498] sm:$0x1]
        %2500 = vrot.lane.b32.xlu0 %v2389, 111
        %v2501 = vpop.permute.xlu0 %2500
        %2502 = vrot.lane.b32.xlu0 %v2390, 111
        %v2503 = vpop.permute.xlu0 %2502
        %2504 = vrot.lane.b32.xlu0 %v2391, 111
        %v2505 = vpop.permute.xlu0 %2504
        %2506 = vrot.lane.b32.xlu0 %v2392, 111
        %v2507 = vpop.permute.xlu0 %2506
        %v2508 = vsel %vm1442, %v2501, %v2503
        %v2509 = vsel %vm1442, %v2503, %v2505
        %v2510 = vsel %vm1442, %v2505, %v2507
        %v2515 = vsel %vm1103, %v2499, 0
        %2517 = vmatprep.subr.bf16.mxu0 %v2509
        %2518 = vmatpush1.bf16.msra.mxu0 %v2508
        %2519 = vmatprep.subr.bf16.mxu0 0
        %2520 = vmatpush1.bf16.msra.mxu0 0
        %2521 = vmatprep.subr.bf16.mxu0 0
        %2522 = vmatpush1.bf16.msra.mxu0 0
        %2523 = vmatprep.subr.bf16.mxu0 0
        %2524 = vmatpush1.bf16.msra.mxu0 0
        %2525 = vmatprep.subr.bf16.mxu0 0
        %2526 = vmatpush1.bf16.msra.mxu0 0
        %2527 = vmatprep.subr.bf16.mxu0 0
        %2528 = vmatpush1.bf16.msra.mxu0 0
        %2529 = vmatprep.subr.bf16.mxu0 0
        %2530 = vmatpush1.bf16.msra.mxu0 0
        %2531 = vmatprep.subr.bf16.mxu0 0
        %2532 = vmatpush1.bf16.msra.mxu0 0
        %2533 = vmatprep.subr.bf16.mxu0 0
        %2534 = vmatpush1.bf16.msra.mxu0 0
        %2535 = vmatprep.subr.bf16.mxu0 0
        %2536 = vmatpush1.bf16.msra.mxu0 0
        %2537 = vmatprep.subr.bf16.mxu0 0
        %2538 = vmatpush1.bf16.msra.mxu0 0
        %2539 = vmatprep.subr.bf16.mxu0 0
        %2540 = vmatpush1.bf16.msra.mxu0 0
        %2541 = vmatprep.subr.bf16.mxu0 0
        %2542 = vmatpush1.bf16.msra.mxu0 0
        %2543 = vmatprep.subr.bf16.mxu0 0
        %2544 = vmatpush1.bf16.msra.mxu0 0
        %2545 = vmatprep.subr.bf16.mxu0 0
        %2546 = vmatpush1.bf16.msra.mxu0 0
        %2547 = vmatprep.subr.bf16.mxu0 0
        %2548 = vmatpush1.bf16.msra.mxu0 0
        %2549 = vmatprep.mubr.bf16.mxu0 0
        %2550 = vmatmul.mubr.bf16.gmra.mrb[0].mxu0 %v2515
        %v2551 = vpop.f32.mrb[0].mxu0
        %v2552 = vadd.f32 0.0, %v2551
        %v2553 = vpop.f32.mrb[0].mxu0
        %v2554 = vadd.f32 0.0, %v2553
        %v2555 = vpop.f32.mrb[0].mxu0
        %v2556 = vpop.f32.mrb[0].mxu0
        %2557 = vdwg.mxu0
        %2558 = vmatprep.subr.bf16.mxu0 0
        %2559 = vmatpush1.bf16.msra.mxu0 %v2510
        %2560 = vmatprep.subr.bf16.mxu0 0
        %2561 = vmatpush1.bf16.msra.mxu0 0
        %2562 = vmatprep.subr.bf16.mxu0 0
        %2563 = vmatpush1.bf16.msra.mxu0 0
        %2564 = vmatprep.subr.bf16.mxu0 0
        %2565 = vmatpush1.bf16.msra.mxu0 0
        %2566 = vmatprep.subr.bf16.mxu0 0
        %2567 = vmatpush1.bf16.msra.mxu0 0
        %2568 = vmatprep.subr.bf16.mxu0 0
        %2569 = vmatpush1.bf16.msra.mxu0 0
        %2570 = vmatprep.subr.bf16.mxu0 0
        %2571 = vmatpush1.bf16.msra.mxu0 0
        %2572 = vmatprep.subr.bf16.mxu0 0
        %2573 = vmatpush1.bf16.msra.mxu0 0
        %2574 = vmatprep.subr.bf16.mxu0 0
        %2575 = vmatpush1.bf16.msra.mxu0 0
        %2576 = vmatprep.subr.bf16.mxu0 0
        %2577 = vmatpush1.bf16.msra.mxu0 0
        %2578 = vmatprep.subr.bf16.mxu0 0
        %2579 = vmatpush1.bf16.msra.mxu0 0
        %2580 = vmatprep.subr.bf16.mxu0 0
        %2581 = vmatpush1.bf16.msra.mxu0 0
        %2582 = vmatprep.subr.bf16.mxu0 0
        %2583 = vmatpush1.bf16.msra.mxu0 0
        %2584 = vmatprep.subr.bf16.mxu0 0
        %2585 = vmatpush1.bf16.msra.mxu0 0
        %2586 = vmatprep.subr.bf16.mxu0 0
        %2587 = vmatpush1.bf16.msra.mxu0 0
        %2588 = vmatprep.subr.bf16.mxu0 0
        %2589 = vmatpush1.bf16.msra.mxu0 0
        %2590 = vmatprep.mubr.bf16.mxu0 0
        %2591 = vmatmul.mubr.bf16.gmra.mrb[0].mxu0 %v2515
        %v2592 = vpop.f32.mrb[0].mxu0
        %v2593 = vadd.f32 0.0, %v2592
        %v2594 = vpop.f32.mrb[0].mxu0
        %v2595 = vpop.f32.mrb[0].mxu0
        %v2596 = vpop.f32.mrb[0].mxu0
        %2597 = vdwg.mxu0
        %v2598 = vadd.f32 %v2495, %v2552
        %v2599 = vadd.f32 %v2496, %v2554
        %v2600 = vadd.f32 %v2497, %v2593
        %s2601 = scalar_lea.vmem %s409, 4
        %v2602 = vld [vmem:[%s2601] sm:$0x1]
        %2603 = vrot.lane.b32.xlu0 %v2389, 110
        %v2604 = vpop.permute.xlu0 %2603
        %2605 = vrot.lane.b32.xlu0 %v2390, 110
        %v2606 = vpop.permute.xlu0 %2605
        %2607 = vrot.lane.b32.xlu0 %v2391, 110
        %v2608 = vpop.permute.xlu0 %2607
        %2609 = vrot.lane.b32.xlu0 %v2392, 110
        %v2610 = vpop.permute.xlu0 %2609
        %v2611 = vsel %vm1558, %v2604, %v2606
        %v2612 = vsel %vm1558, %v2606, %v2608
        %v2613 = vsel %vm1558, %v2608, %v2610
        %v2618 = vsel %vm1103, %v2602, 0
        %2620 = vmatprep.subr.bf16.mxu0 %v2612
        %2621 = vmatpush1.bf16.msra.mxu0 %v2611
        %2622 = vmatprep.subr.bf16.mxu0 0
        %2623 = vmatpush1.bf16.msra.mxu0 0
        %2624 = vmatprep.subr.bf16.mxu0 0
        %2625 = vmatpush1.bf16.msra.mxu0 0
        %2626 = vmatprep.subr.bf16.mxu0 0
        %2627 = vmatpush1.bf16.msra.mxu0 0
        %2628 = vmatprep.subr.bf16.mxu0 0
        %2629 = vmatpush1.bf16.msra.mxu0 0
        %2630 = vmatprep.subr.bf16.mxu0 0
        %2631 = vmatpush1.bf16.msra.mxu0 0
        %2632 = vmatprep.subr.bf16.mxu0 0
        %2633 = vmatpush1.bf16.msra.mxu0 0
        %2634 = vmatprep.subr.bf16.mxu0 0
        %2635 = vmatpush1.bf16.msra.mxu0 0
        %2636 = vmatprep.subr.bf16.mxu0 0
        %2637 = vmatpush1.bf16.msra.mxu0 0
        %2638 = vmatprep.subr.bf16.mxu0 0
        %2639 = vmatpush1.bf16.msra.mxu0 0
        %2640 = vmatprep.subr.bf16.mxu0 0
        %2641 = vmatpush1.bf16.msra.mxu0 0
        %2642 = vmatprep.subr.bf16.mxu0 0
        %2643 = vmatpush1.bf16.msra.mxu0 0
        %2644 = vmatprep.subr.bf16.mxu0 0
        %2645 = vmatpush1.bf16.msra.mxu0 0
        %2646 = vmatprep.subr.bf16.mxu0 0
        %2647 = vmatpush1.bf16.msra.mxu0 0
        %2648 = vmatprep.subr.bf16.mxu0 0
        %2649 = vmatpush1.bf16.msra.mxu0 0
        %2650 = vmatprep.subr.bf16.mxu0 0
        %2651 = vmatpush1.bf16.msra.mxu0 0
        %2652 = vmatprep.mubr.bf16.mxu0 0
        %2653 = vmatmul.mubr.bf16.gmra.mrb[0].mxu0 %v2618
        %v2654 = vpop.f32.mrb[0].mxu0
        %v2655 = vadd.f32 0.0, %v2654
        %v2656 = vpop.f32.mrb[0].mxu0
        %v2657 = vadd.f32 0.0, %v2656
        %v2658 = vpop.f32.mrb[0].mxu0
        %v2659 = vpop.f32.mrb[0].mxu0
        %2660 = vdwg.mxu0
        %2661 = vmatprep.subr.bf16.mxu0 0
        %2662 = vmatpush1.bf16.msra.mxu0 %v2613
        %2663 = vmatprep.subr.bf16.mxu0 0
        %2664 = vmatpush1.bf16.msra.mxu0 0
        %2665 = vmatprep.subr.bf16.mxu0 0
        %2666 = vmatpush1.bf16.msra.mxu0 0
        %2667 = vmatprep.subr.bf16.mxu0 0
        %2668 = vmatpush1.bf16.msra.mxu0 0
        %2669 = vmatprep.subr.bf16.mxu0 0
        %2670 = vmatpush1.bf16.msra.mxu0 0
        %2671 = vmatprep.subr.bf16.mxu0 0
        %2672 = vmatpush1.bf16.msra.mxu0 0
        %2673 = vmatprep.subr.bf16.mxu0 0
        %2674 = vmatpush1.bf16.msra.mxu0 0
        %2675 = vmatprep.subr.bf16.mxu0 0
        %2676 = vmatpush1.bf16.msra.mxu0 0
        %2677 = vmatprep.subr.bf16.mxu0 0
        %2678 = vmatpush1.bf16.msra.mxu0 0
        %2679 = vmatprep.subr.bf16.mxu0 0
        %2680 = vmatpush1.bf16.msra.mxu0 0
        %2681 = vmatprep.subr.bf16.mxu0 0
        %2682 = vmatpush1.bf16.msra.mxu0 0
        %2683 = vmatprep.subr.bf16.mxu0 0
        %2684 = vmatpush1.bf16.msra.mxu0 0
        %2685 = vmatprep.subr.bf16.mxu0 0
        %2686 = vmatpush1.bf16.msra.mxu0 0
        %2687 = vmatprep.subr.bf16.mxu0 0
        %2688 = vmatpush1.bf16.msra.mxu0 0
        %2689 = vmatprep.subr.bf16.mxu0 0
        %2690 = vmatpush1.bf16.msra.mxu0 0
        %2691 = vmatprep.subr.bf16.mxu0 0
        %2692 = vmatpush1.bf16.msra.mxu0 0
        %2693 = vmatprep.mubr.bf16.mxu0 0
        %2694 = vmatmul.mubr.bf16.gmra.mrb[0].mxu0 %v2618
        %v2695 = vpop.f32.mrb[0].mxu0
        %v2696 = vadd.f32 0.0, %v2695
        %v2697 = vpop.f32.mrb[0].mxu0
        %v2698 = vpop.f32.mrb[0].mxu0
        %v2699 = vpop.f32.mrb[0].mxu0
        %2700 = vdwg.mxu0
        %v2701 = vadd.f32 %v2598, %v2655
        %v2702 = vadd.f32 %v2599, %v2657
        %v2703 = vadd.f32 %v2600, %v2696
        %s2704 = scalar_lea.vmem %s409, 5
        %v2705 = vld [vmem:[%s2704] sm:$0x1]
        %2706 = vrot.lane.b32.xlu0 %v2389, 109
        %v2707 = vpop.permute.xlu0 %2706
        %2708 = vrot.lane.b32.xlu0 %v2390, 109
        %v2709 = vpop.permute.xlu0 %2708
        %2710 = vrot.lane.b32.xlu0 %v2391, 109
        %v2711 = vpop.permute.xlu0 %2710
        %2712 = vrot.lane.b32.xlu0 %v2392, 109
        %v2713 = vpop.permute.xlu0 %2712
        %v2714 = vsel %vm1674, %v2707, %v2709
        %v2715 = vsel %vm1674, %v2709, %v2711
        %v2716 = vsel %vm1674, %v2711, %v2713
        %v2721 = vsel %vm1103, %v2705, 0
        %2723 = vmatprep.subr.bf16.mxu0 %v2715
        %2724 = vmatpush1.bf16.msra.mxu0 %v2714
        %2725 = vmatprep.subr.bf16.mxu0 0
        %2726 = vmatpush1.bf16.msra.mxu0 0
        %2727 = vmatprep.subr.bf16.mxu0 0
        %2728 = vmatpush1.bf16.msra.mxu0 0
        %2729 = vmatprep.subr.bf16.mxu0 0
        %2730 = vmatpush1.bf16.msra.mxu0 0
        %2731 = vmatprep.subr.bf16.mxu0 0
        %2732 = vmatpush1.bf16.msra.mxu0 0
        %2733 = vmatprep.subr.bf16.mxu0 0
        %2734 = vmatpush1.bf16.msra.mxu0 0
        %2735 = vmatprep.subr.bf16.mxu0 0
        %2736 = vmatpush1.bf16.msra.mxu0 0
        %2737 = vmatprep.subr.bf16.mxu0 0
        %2738 = vmatpush1.bf16.msra.mxu0 0
        %2739 = vmatprep.subr.bf16.mxu0 0
        %2740 = vmatpush1.bf16.msra.mxu0 0
        %2741 = vmatprep.subr.bf16.mxu0 0
        %2742 = vmatpush1.bf16.msra.mxu0 0
        %2743 = vmatprep.subr.bf16.mxu0 0
        %2744 = vmatpush1.bf16.msra.mxu0 0
        %2745 = vmatprep.subr.bf16.mxu0 0
        %2746 = vmatpush1.bf16.msra.mxu0 0
        %2747 = vmatprep.subr.bf16.mxu0 0
        %2748 = vmatpush1.bf16.msra.mxu0 0
        %2749 = vmatprep.subr.bf16.mxu0 0
        %2750 = vmatpush1.bf16.msra.mxu0 0
        %2751 = vmatprep.subr.bf16.mxu0 0
        %2752 = vmatpush1.bf16.msra.mxu0 0
        %2753 = vmatprep.subr.bf16.mxu0 0
        %2754 = vmatpush1.bf16.msra.mxu0 0
        %2755 = vmatprep.mubr.bf16.mxu0 0
        %2756 = vmatmul.mubr.bf16.gmra.mrb[0].mxu0 %v2721
        %v2757 = vpop.f32.mrb[0].mxu0
        %v2758 = vadd.f32 0.0, %v2757
        %v2759 = vpop.f32.mrb[0].mxu0
        %v2760 = vadd.f32 0.0, %v2759
        %v2761 = vpop.f32.mrb[0].mxu0
        %v2762 = vpop.f32.mrb[0].mxu0
        %2763 = vdwg.mxu0
        %2764 = vmatprep.subr.bf16.mxu0 0
        %2765 = vmatpush1.bf16.msra.mxu0 %v2716
        %2766 = vmatprep.subr.bf16.mxu0 0
        %2767 = vmatpush1.bf16.msra.mxu0 0
        %2768 = vmatprep.subr.bf16.mxu0 0
        %2769 = vmatpush1.bf16.msra.mxu0 0
        %2770 = vmatprep.subr.bf16.mxu0 0
        %2771 = vmatpush1.bf16.msra.mxu0 0
        %2772 = vmatprep.subr.bf16.mxu0 0
        %2773 = vmatpush1.bf16.msra.mxu0 0
        %2774 = vmatprep.subr.bf16.mxu0 0
        %2775 = vmatpush1.bf16.msra.mxu0 0
        %2776 = vmatprep.subr.bf16.mxu0 0
        %2777 = vmatpush1.bf16.msra.mxu0 0
        %2778 = vmatprep.subr.bf16.mxu0 0
        %2779 = vmatpush1.bf16.msra.mxu0 0
        %2780 = vmatprep.subr.bf16.mxu0 0
        %2781 = vmatpush1.bf16.msra.mxu0 0
        %2782 = vmatprep.subr.bf16.mxu0 0
        %2783 = vmatpush1.bf16.msra.mxu0 0
        %2784 = vmatprep.subr.bf16.mxu0 0
        %2785 = vmatpush1.bf16.msra.mxu0 0
        %2786 = vmatprep.subr.bf16.mxu0 0
        %2787 = vmatpush1.bf16.msra.mxu0 0
        %2788 = vmatprep.subr.bf16.mxu0 0
        %2789 = vmatpush1.bf16.msra.mxu0 0
        %2790 = vmatprep.subr.bf16.mxu0 0
        %2791 = vmatpush1.bf16.msra.mxu0 0
        %2792 = vmatprep.subr.bf16.mxu0 0
        %2793 = vmatpush1.bf16.msra.mxu0 0
        %2794 = vmatprep.subr.bf16.mxu0 0
        %2795 = vmatpush1.bf16.msra.mxu0 0
        %2796 = vmatprep.mubr.bf16.mxu0 0
        %2797 = vmatmul.mubr.bf16.gmra.mrb[0].mxu0 %v2721
        %v2798 = vpop.f32.mrb[0].mxu0
        %v2799 = vadd.f32 0.0, %v2798
        %v2800 = vpop.f32.mrb[0].mxu0
        %v2801 = vpop.f32.mrb[0].mxu0
        %v2802 = vpop.f32.mrb[0].mxu0
        %2803 = vdwg.mxu0
        %v2804 = vadd.f32 %v2701, %v2758
        %v2805 = vadd.f32 %v2702, %v2760
        %v2806 = vadd.f32 %v2703, %v2799
        %s2807 = scalar_lea.vmem %s409, 6
        %v2808 = vld [vmem:[%s2807] sm:$0x1]
        %2809 = vrot.lane.b32.xlu0 %v2389, 93
        %v2810 = vpop.permute.xlu0 %2809
        %2811 = vrot.lane.b32.xlu0 %v2390, 93
        %v2812 = vpop.permute.xlu0 %2811
        %2813 = vrot.lane.b32.xlu0 %v2391, 93
        %v2814 = vpop.permute.xlu0 %2813
        %2815 = vrot.lane.b32.xlu0 %v2392, 93
        %v2816 = vpop.permute.xlu0 %2815
        %v2817 = vsel %vm1790, %v2810, %v2812
        %v2818 = vsel %vm1790, %v2812, %v2814
        %v2819 = vsel %vm1790, %v2814, %v2816
        %v2824 = vsel %vm1103, %v2808, 0
        %2826 = vmatprep.subr.bf16.mxu0 %v2818
        %2827 = vmatpush1.bf16.msra.mxu0 %v2817
        %2828 = vmatprep.subr.bf16.mxu0 0
        %2829 = vmatpush1.bf16.msra.mxu0 0
        %2830 = vmatprep.subr.bf16.mxu0 0
        %2831 = vmatpush1.bf16.msra.mxu0 0
        %2832 = vmatprep.subr.bf16.mxu0 0
        %2833 = vmatpush1.bf16.msra.mxu0 0
        %2834 = vmatprep.subr.bf16.mxu0 0
        %2835 = vmatpush1.bf16.msra.mxu0 0
        %2836 = vmatprep.subr.bf16.mxu0 0
        %2837 = vmatpush1.bf16.msra.mxu0 0
        %2838 = vmatprep.subr.bf16.mxu0 0
        %2839 = vmatpush1.bf16.msra.mxu0 0
        %2840 = vmatprep.subr.bf16.mxu0 0
        %2841 = vmatpush1.bf16.msra.mxu0 0
        %2842 = vmatprep.subr.bf16.mxu0 0
        %2843 = vmatpush1.bf16.msra.mxu0 0
        %2844 = vmatprep.subr.bf16.mxu0 0
        %2845 = vmatpush1.bf16.msra.mxu0 0
        %2846 = vmatprep.subr.bf16.mxu0 0
        %2847 = vmatpush1.bf16.msra.mxu0 0
        %2848 = vmatprep.subr.bf16.mxu0 0
        %2849 = vmatpush1.bf16.msra.mxu0 0
        %2850 = vmatprep.subr.bf16.mxu0 0
        %2851 = vmatpush1.bf16.msra.mxu0 0
        %2852 = vmatprep.subr.bf16.mxu0 0
        %2853 = vmatpush1.bf16.msra.mxu0 0
        %2854 = vmatprep.subr.bf16.mxu0 0
        %2855 = vmatpush1.bf16.msra.mxu0 0
        %2856 = vmatprep.subr.bf16.mxu0 0
        %2857 = vmatpush1.bf16.msra.mxu0 0
        %2858 = vmatprep.mubr.bf16.mxu0 0
        %2859 = vmatmul.mubr.bf16.gmra.mrb[0].mxu0 %v2824
        %v2860 = vpop.f32.mrb[0].mxu0
        %v2861 = vadd.f32 0.0, %v2860
        %v2862 = vpop.f32.mrb[0].mxu0
        %v2863 = vadd.f32 0.0, %v2862
        %v2864 = vpop.f32.mrb[0].mxu0
        %v2865 = vpop.f32.mrb[0].mxu0
        %2866 = vdwg.mxu0
        %2867 = vmatprep.subr.bf16.mxu0 0
        %2868 = vmatpush1.bf16.msra.mxu0 %v2819
        %2869 = vmatprep.subr.bf16.mxu0 0
        %2870 = vmatpush1.bf16.msra.mxu0 0
        %2871 = vmatprep.subr.bf16.mxu0 0
        %2872 = vmatpush1.bf16.msra.mxu0 0
        %2873 = vmatprep.subr.bf16.mxu0 0
        %2874 = vmatpush1.bf16.msra.mxu0 0
        %2875 = vmatprep.subr.bf16.mxu0 0
        %2876 = vmatpush1.bf16.msra.mxu0 0
        %2877 = vmatprep.subr.bf16.mxu0 0
        %2878 = vmatpush1.bf16.msra.mxu0 0
        %2879 = vmatprep.subr.bf16.mxu0 0
        %2880 = vmatpush1.bf16.msra.mxu0 0
        %2881 = vmatprep.subr.bf16.mxu0 0
        %2882 = vmatpush1.bf16.msra.mxu0 0
        %2883 = vmatprep.subr.bf16.mxu0 0
        %2884 = vmatpush1.bf16.msra.mxu0 0
        %2885 = vmatprep.subr.bf16.mxu0 0
        %2886 = vmatpush1.bf16.msra.mxu0 0
        %2887 = vmatprep.subr.bf16.mxu0 0
        %2888 = vmatpush1.bf16.msra.mxu0 0
        %2889 = vmatprep.subr.bf16.mxu0 0
        %2890 = vmatpush1.bf16.msra.mxu0 0
        %2891 = vmatprep.subr.bf16.mxu0 0
        %2892 = vmatpush1.bf16.msra.mxu0 0
        %2893 = vmatprep.subr.bf16.mxu0 0
        %2894 = vmatpush1.bf16.msra.mxu0 0
        %2895 = vmatprep.subr.bf16.mxu0 0
        %2896 = vmatpush1.bf16.msra.mxu0 0
        %2897 = vmatprep.subr.bf16.mxu0 0
        %2898 = vmatpush1.bf16.msra.mxu0 0
        %2899 = vmatprep.mubr.bf16.mxu0 0
        %2900 = vmatmul.mubr.bf16.gmra.mrb[0].mxu0 %v2824
        %v2901 = vpop.f32.mrb[0].mxu0
        %v2902 = vadd.f32 0.0, %v2901
        %v2903 = vpop.f32.mrb[0].mxu0
        %v2904 = vpop.f32.mrb[0].mxu0
        %v2905 = vpop.f32.mrb[0].mxu0
        %2906 = vdwg.mxu0
        %v2907 = vadd.f32 %v2804, %v2861
        %v2908 = vadd.f32 %v2805, %v2863
        %v2909 = vadd.f32 %v2806, %v2902
        %s2910 = scalar_lea.vmem %s409, 7
        %v2911 = vld [vmem:[%s2910] sm:$0x1]
        %2912 = vrot.lane.b32.xlu0 %v2389, 92
        %v2913 = vpop.permute.xlu0 %2912
        %2914 = vrot.lane.b32.xlu0 %v2390, 92
        %v2915 = vpop.permute.xlu0 %2914
        %2916 = vrot.lane.b32.xlu0 %v2391, 92
        %v2917 = vpop.permute.xlu0 %2916
        %2918 = vrot.lane.b32.xlu0 %v2392, 92
        %v2919 = vpop.permute.xlu0 %2918
        %v2920 = vsel %vm1906, %v2913, %v2915
        %v2921 = vsel %vm1906, %v2915, %v2917
        %v2922 = vsel %vm1906, %v2917, %v2919
        %v2927 = vsel %vm1103, %v2911, 0
        %2929 = vmatprep.subr.bf16.mxu0 %v2921
        %2930 = vmatpush1.bf16.msra.mxu0 %v2920
        %2931 = vmatprep.subr.bf16.mxu0 0
        %2932 = vmatpush1.bf16.msra.mxu0 0
        %2933 = vmatprep.subr.bf16.mxu0 0
        %2934 = vmatpush1.bf16.msra.mxu0 0
        %2935 = vmatprep.subr.bf16.mxu0 0
        %2936 = vmatpush1.bf16.msra.mxu0 0
        %2937 = vmatprep.subr.bf16.mxu0 0
        %2938 = vmatpush1.bf16.msra.mxu0 0
        %2939 = vmatprep.subr.bf16.mxu0 0
        %2940 = vmatpush1.bf16.msra.mxu0 0
        %2941 = vmatprep.subr.bf16.mxu0 0
        %2942 = vmatpush1.bf16.msra.mxu0 0
        %2943 = vmatprep.subr.bf16.mxu0 0
        %2944 = vmatpush1.bf16.msra.mxu0 0
        %2945 = vmatprep.subr.bf16.mxu0 0
        %2946 = vmatpush1.bf16.msra.mxu0 0
        %2947 = vmatprep.subr.bf16.mxu0 0
        %2948 = vmatpush1.bf16.msra.mxu0 0
        %2949 = vmatprep.subr.bf16.mxu0 0
        %2950 = vmatpush1.bf16.msra.mxu0 0
        %2951 = vmatprep.subr.bf16.mxu0 0
        %2952 = vmatpush1.bf16.msra.mxu0 0
        %2953 = vmatprep.subr.bf16.mxu0 0
        %2954 = vmatpush1.bf16.msra.mxu0 0
        %2955 = vmatprep.subr.bf16.mxu0 0
        %2956 = vmatpush1.bf16.msra.mxu0 0
        %2957 = vmatprep.subr.bf16.mxu0 0
        %2958 = vmatpush1.bf16.msra.mxu0 0
        %2959 = vmatprep.subr.bf16.mxu0 0
        %2960 = vmatpush1.bf16.msra.mxu0 0
        %2961 = vmatprep.mubr.bf16.mxu0 0
        %2962 = vmatmul.mubr.bf16.gmra.mrb[0].mxu0 %v2927
        %v2963 = vpop.f32.mrb[0].mxu0
        %v2964 = vadd.f32 0.0, %v2963
        %v2965 = vpop.f32.mrb[0].mxu0
        %v2966 = vadd.f32 0.0, %v2965
        %v2967 = vpop.f32.mrb[0].mxu0
        %v2968 = vpop.f32.mrb[0].mxu0
        %2969 = vdwg.mxu0
        %2970 = vmatprep.subr.bf16.mxu0 0
        %2971 = vmatpush1.bf16.msra.mxu0 %v2922
        %2972 = vmatprep.subr.bf16.mxu0 0
        %2973 = vmatpush1.bf16.msra.mxu0 0
        %2974 = vmatprep.subr.bf16.mxu0 0
        %2975 = vmatpush1.bf16.msra.mxu0 0
        %2976 = vmatprep.subr.bf16.mxu0 0
        %2977 = vmatpush1.bf16.msra.mxu0 0
        %2978 = vmatprep.subr.bf16.mxu0 0
        %2979 = vmatpush1.bf16.msra.mxu0 0
        %2980 = vmatprep.subr.bf16.mxu0 0
        %2981 = vmatpush1.bf16.msra.mxu0 0
        %2982 = vmatprep.subr.bf16.mxu0 0
        %2983 = vmatpush1.bf16.msra.mxu0 0
        %2984 = vmatprep.subr.bf16.mxu0 0
        %2985 = vmatpush1.bf16.msra.mxu0 0
        %2986 = vmatprep.subr.bf16.mxu0 0
        %2987 = vmatpush1.bf16.msra.mxu0 0
        %2988 = vmatprep.subr.bf16.mxu0 0
        %2989 = vmatpush1.bf16.msra.mxu0 0
        %2990 = vmatprep.subr.bf16.mxu0 0
        %2991 = vmatpush1.bf16.msra.mxu0 0
        %2992 = vmatprep.subr.bf16.mxu0 0
        %2993 = vmatpush1.bf16.msra.mxu0 0
        %2994 = vmatprep.subr.bf16.mxu0 0
        %2995 = vmatpush1.bf16.msra.mxu0 0
        %2996 = vmatprep.subr.bf16.mxu0 0
        %2997 = vmatpush1.bf16.msra.mxu0 0
        %2998 = vmatprep.subr.bf16.mxu0 0
        %2999 = vmatpush1.bf16.msra.mxu0 0
        %3000 = vmatprep.subr.bf16.mxu0 0
        %3001 = vmatpush1.bf16.msra.mxu0 0
        %3002 = vmatprep.mubr.bf16.mxu0 0
        %3003 = vmatmul.mubr.bf16.gmra.mrb[0].mxu0 %v2927
        %v3004 = vpop.f32.mrb[0].mxu0
        %v3005 = vadd.f32 0.0, %v3004
        %v3006 = vpop.f32.mrb[0].mxu0
        %v3007 = vpop.f32.mrb[0].mxu0
        %v3008 = vpop.f32.mrb[0].mxu0
        %3009 = vdwg.mxu0
        %v3010 = vadd.f32 %v2907, %v2964
        %v3011 = vadd.f32 %v2908, %v2966
        %v3012 = vadd.f32 %v2909, %v3005
        %s3013 = scalar_lea.vmem %s409, 8
        %v3014 = vld [vmem:[%s3013] sm:$0x1]
        %3015 = vrot.lane.b32.xlu0 %v2389, 91
        %v3016 = vpop.permute.xlu0 %3015
        %3017 = vrot.lane.b32.xlu0 %v2390, 91
        %v3018 = vpop.permute.xlu0 %3017
        %3019 = vrot.lane.b32.xlu0 %v2391, 91
        %v3020 = vpop.permute.xlu0 %3019
        %3021 = vrot.lane.b32.xlu0 %v2392, 91
        %v3022 = vpop.permute.xlu0 %3021
        %v3023 = vsel %vm2022, %v3016, %v3018
        %v3024 = vsel %vm2022, %v3018, %v3020
        %v3025 = vsel %vm2022, %v3020, %v3022
        %v3030 = vsel %vm1103, %v3014, 0
        %3032 = vmatprep.subr.bf16.mxu0 %v3024
        %3033 = vmatpush1.bf16.msra.mxu0 %v3023
        %3034 = vmatprep.subr.bf16.mxu0 0
        %3035 = vmatpush1.bf16.msra.mxu0 0
        %3036 = vmatprep.subr.bf16.mxu0 0
        %3037 = vmatpush1.bf16.msra.mxu0 0
        %3038 = vmatprep.subr.bf16.mxu0 0
        %3039 = vmatpush1.bf16.msra.mxu0 0
        %3040 = vmatprep.subr.bf16.mxu0 0
        %3041 = vmatpush1.bf16.msra.mxu0 0
        %3042 = vmatprep.subr.bf16.mxu0 0
        %3043 = vmatpush1.bf16.msra.mxu0 0
        %3044 = vmatprep.subr.bf16.mxu0 0
        %3045 = vmatpush1.bf16.msra.mxu0 0
        %3046 = vmatprep.subr.bf16.mxu0 0
        %3047 = vmatpush1.bf16.msra.mxu0 0
        %3048 = vmatprep.subr.bf16.mxu0 0
        %3049 = vmatpush1.bf16.msra.mxu0 0
        %3050 = vmatprep.subr.bf16.mxu0 0
        %3051 = vmatpush1.bf16.msra.mxu0 0
        %3052 = vmatprep.subr.bf16.mxu0 0
        %3053 = vmatpush1.bf16.msra.mxu0 0
        %3054 = vmatprep.subr.bf16.mxu0 0
        %3055 = vmatpush1.bf16.msra.mxu0 0
        %3056 = vmatprep.subr.bf16.mxu0 0
        %3057 = vmatpush1.bf16.msra.mxu0 0
        %3058 = vmatprep.subr.bf16.mxu0 0
        %3059 = vmatpush1.bf16.msra.mxu0 0
        %3060 = vmatprep.subr.bf16.mxu0 0
        %3061 = vmatpush1.bf16.msra.mxu0 0
        %3062 = vmatprep.subr.bf16.mxu0 0
        %3063 = vmatpush1.bf16.msra.mxu0 0
        %3064 = vmatprep.mubr.bf16.mxu0 0
        %3065 = vmatmul.mubr.bf16.gmra.mrb[0].mxu0 %v3030
        %v3066 = vpop.f32.mrb[0].mxu0
        %v3067 = vadd.f32 0.0, %v3066
        %v3068 = vpop.f32.mrb[0].mxu0
        %v3069 = vadd.f32 0.0, %v3068
        %v3070 = vpop.f32.mrb[0].mxu0
        %v3071 = vpop.f32.mrb[0].mxu0
        %3072 = vdwg.mxu0
        %3073 = vmatprep.subr.bf16.mxu0 0
        %3074 = vmatpush1.bf16.msra.mxu0 %v3025
        %3075 = vmatprep.subr.bf16.mxu0 0
        %3076 = vmatpush1.bf16.msra.mxu0 0
        %3077 = vmatprep.subr.bf16.mxu0 0
        %3078 = vmatpush1.bf16.msra.mxu0 0
        %3079 = vmatprep.subr.bf16.mxu0 0
        %3080 = vmatpush1.bf16.msra.mxu0 0
        %3081 = vmatprep.subr.bf16.mxu0 0
        %3082 = vmatpush1.bf16.msra.mxu0 0
        %3083 = vmatprep.subr.bf16.mxu0 0
        %3084 = vmatpush1.bf16.msra.mxu0 0
        %3085 = vmatprep.subr.bf16.mxu0 0
        %3086 = vmatpush1.bf16.msra.mxu0 0
        %3087 = vmatprep.subr.bf16.mxu0 0
        %3088 = vmatpush1.bf16.msra.mxu0 0
        %3089 = vmatprep.subr.bf16.mxu0 0
        %3090 = vmatpush1.bf16.msra.mxu0 0
        %3091 = vmatprep.subr.bf16.mxu0 0
        %3092 = vmatpush1.bf16.msra.mxu0 0
        %3093 = vmatprep.subr.bf16.mxu0 0
        %3094 = vmatpush1.bf16.msra.mxu0 0
        %3095 = vmatprep.subr.bf16.mxu0 0
        %3096 = vmatpush1.bf16.msra.mxu0 0
        %3097 = vmatprep.subr.bf16.mxu0 0
        %3098 = vmatpush1.bf16.msra.mxu0 0
        %3099 = vmatprep.subr.bf16.mxu0 0
        %3100 = vmatpush1.bf16.msra.mxu0 0
        %3101 = vmatprep.subr.bf16.mxu0 0
        %3102 = vmatpush1.bf16.msra.mxu0 0
        %3103 = vmatprep.subr.bf16.mxu0 0
        %3104 = vmatpush1.bf16.msra.mxu0 0
        %3105 = vmatprep.mubr.bf16.mxu0 0
        %3106 = vmatmul.mubr.bf16.gmra.mrb[0].mxu0 %v3030
        %v3107 = vpop.f32.mrb[0].mxu0
        %v3108 = vadd.f32 0.0, %v3107
        %v3109 = vpop.f32.mrb[0].mxu0
        %v3110 = vpop.f32.mrb[0].mxu0
        %v3111 = vpop.f32.mrb[0].mxu0
        %3112 = vdwg.mxu0
        %v3113 = vadd.f32 %v3010, %v3067
        %v3114 = vadd.f32 %v3011, %v3069
        %v3115 = vadd.f32 %v3012, %v3108
        %v3116 = vld [vmem:[%s412] sm:$0x1]
        %3118 = vset.pattern.permute.xlu0 0
        %3119 = vperm.xlu0 %3118, %v3116
        %v3120 = vpop.permute.xlu0 %3119
        %v3122 = vlaneseq
        %v3123 = vshrl.u32 %v3122, 7
        %v3124 = vsub.s32 0, %v3123
        %v3125 = vrot.slane %v3120, %v3124
        %v3126 = vadd.f32 %v3113, %v3125
        %v3127 = vadd.f32 %v3114, %v3125
        %v3128 = vadd.f32 %v3115, %v3125
        %v3129 = vand.u32 2147483647, %v3126
        %v3130 = vand.u32 2147483647, %v3127
        %v3131 = vand.u32 2147483647, %v3128
        %v3132 = vsub.f32 0.0, %v3129
        %v3133 = vsub.f32 0.0, %v3130
        %v3134 = vsub.f32 0.0, %v3131
        %v3135 = vmul.f32 %v3132, 1.442695
        %v3136 = vpow.pop %v3135
        %v3137 = vmul.f32 %v3133, 1.442695
        %v3138 = vpow.pop %v3137
        %v3139 = vmul.f32 %v3134, 1.442695
        %v3140 = vpow.pop %v3139
        %v3141 = vadd.f32 %v3136, 1.0
        %v3142 = vadd.f32 %v3138, 1.0
        %v3143 = vadd.f32 %v3140, 1.0
        %v3144 = vrcp.pop %v3141
        %v3145 = vrcp.pop %v3142
        %v3146 = vrcp.pop %v3143
        %vm3147 = vcmp.ge.f32.partialorder %v3126, 0.0
        %vm3148 = vcmp.ge.f32.partialorder %v3127, 0.0
        %vm3149 = vcmp.ge.f32.partialorder %v3128, 0.0
        %v3150 = vmul.f32 %v3136, %v3144
        %v3151 = vmul.f32 %v3138, %v3145
        %v3152 = vmul.f32 %v3140, %v3146
        %v3153 = vsel %vm3147, %v3144, %v3150
        %v3154 = vsel %vm3148, %v3145, %v3151
        %v3155 = vsel %vm3149, %v3146, %v3152
        %v3159 = vcombine.low %v3153, %v3154
        %v3161 = vunpack.c.l.s4 1966171168
        %v3162 = vunpack.c.0.s8 %v3161
        %v3163 = vlaneseq
        %v3164 = vshrl.u32 %v3163, 7
        %v3165 = vsub.s32 %v3162, %v3164
        %v3166 = vrot.slane %v3159, %v3165
        %v3168 = vunpack.c.l.s4 1966171168
        %v3169 = vunpack.c.0.s8 %v3168
        %v3170 = vlaneseq
        %v3171 = vshrl.u32 %v3170, 7
        %v3172 = vsub.s32 %v3169, %v3171
        %v3173 = vrot.slane %v3155, %v3172
        %v3174 = vcombine.low %v3166, %v3173
        %v3176 = vunpack.c.l.s4 1966171168
        %v3177 = vunpack.c.0.s8 %v3176
        %v3178 = vlaneseq
        %v3179 = vshrl.u32 %v3178, 7
        %v3180 = vsub.s32 %v3177, %v3179
        %v3181 = vrot.slane %v3174, %v3180
        %v3183 = vlaneseq
        %vm3184 = vcmp.ge.s32.totalorder %v3183, 0
        %vm3185 = vcmp.lt.s32.totalorder %v3183, 384
        %vm3186 = vmand %vm3184, %vm3185
        %3187 = vst.msk [vmem:[%s377] sm:$0x7] %vm3186, %v3181
        %s3188 = sand.u32 %s227, 1
        %s3189 = scalar_lea.sflag [#allocation4], %s3188
        %s3190 = sand.u32 %s227, 1
        %s3191 = smul.addr %s3190, 3
        %s3192 = scalar_lea.vmem [#allocation3], %s3191
        // Predicated region
        $region49: #{tpu_custom_call.1} parent=47 // pred_check
          %p3193 = pneg %p237
        $region50: #{tpu_custom_call.1} parent=47 // pred_check_branch
          %3195 = sbr.rel (%p3193) target = $region52
        $region51: #{tpu_custom_call.1} parent=47 // pred_region
          %s3197 = ssub.s32 48, 48
          %3198 = vsyncadd %s3189, %s3197
          %s3199 = smul.addr %s26, 3
          %s3200 = smul.addr %s25, 3
          %s3201 = sadd.s32 %s3199, %s3200
          %s3202 = smul.addr %s3201, 16
          %s3203 = scalar_lea.hbm %s7, %s3202
          %s3205 = sshll.u32 %s3192, 4
          %s3206 = int_to_ptr.vmem [resolvable:$true] %s3205
          %3208 = dma.vmem_to_hbm [thread:$0]  %s3206, 48, %s3203, %s3189
        $region52: #{tpu_custom_call.1} parent=47 // pred_fallthru
          _
      $region48: #{tpu_custom_call.1} parent=5 // pred_fallthru
        _
      %p3209 = scmp.le.s32.totalorder 2, %s16
      // Predicated region
      $region53: #{tpu_custom_call.1} parent=5 // pred_check
        %p3210 = pneg %p3209
      $region54: #{tpu_custom_call.1} parent=5 // pred_check_branch
        %3212 = sbr.rel (%p3210) target = $region56
      $region55: #{tpu_custom_call.1} parent=5 // pred_region
        %s3213 = ssub.s32 %s16, 2
        // Predicated region
        $region57: #{tpu_custom_call.1} parent=55 // pred_check
          %p3214 = pneg %p243
        $region58: #{tpu_custom_call.1} parent=55 // pred_check_branch
          %3216 = sbr.rel (%p3214) target = $region60
        $region59: #{tpu_custom_call.1} parent=55 // pred_region
          %s3217 = sand.u32 %s228, 1
          %s3218 = scalar_lea.sflag [#allocation4], %s3217
          %s3219 = sand.u32 %s228, 1
          %s3220 = smul.addr %s3219, 3
          %s3221 = scalar_lea.vmem [#allocation3], %s3220
          %3222 = dma.done %s3218, 48
        $region60: #{tpu_custom_call.1} parent=55 // pred_fallthru
          _
      $region56: #{tpu_custom_call.1} parent=5 // pred_fallthru
        _
    $region6: #{tpu_custom_call.1} parent=1 // loop_footer
      %s20 = sadd.s32 1, %s16
    $region7: #{tpu_custom_call.1} parent=1 // loop_footer_branch
      %15 = sbr.rel target = $region3
    $region8: #{tpu_custom_call.1} parent=1 // loop_exit
      _
    %3223 = vsyncpa [#allocation4], 1
    %s3224 = scalar_lea.sflag [#allocation4], 1
    %3225 = vsyncpa %s3224, 1

</llo_original>
